<compile_context>
chip_gen: v7x
topology: tpu7x:2x2x1
jax: 0.10.0
libtpu: 0.0.40
codegen_flags: <defaults>
</compile_context>

<pallas_src>
import jax
import jax.numpy as jnp
import numpy as np
from jax.experimental import pallas as pl
from jax.experimental.pallas import tpu as pltpu

EPS = 1e-5


def fused_kernel(x_ref, r_ref, g1_ref, b1_ref, w_ref, g2_ref, b2_ref,
                 out_ref, acc_ref):
    """One Cin-tile step: BN1 -> add -> ReLU -> 1x1-conv accumulate [-> BN2]."""
    k = pl.program_id(0)

    @pl.when(k == 0)
    def _():
        acc_ref[...] = jnp.zeros_like(acc_ref)

    x = x_ref[...]            # (tk, M) f32 : channels on sublanes, pixels on lanes
    r = r_ref[...]            # (tk, M) f32

    # --- BatchNorm2d(1024), training mode: per-channel stats over M = N*H*W ---
    # Single-pass moments + folded scale/shift: only one normalize pass over x.
    mu = jnp.mean(x, axis=1, keepdims=True)                    # (tk, 1)
    ex2 = jnp.mean(x * x, axis=1, keepdims=True)               # (tk, 1)
    var = ex2 - mu * mu                                        # biased variance
    scale = g1_ref[...] * jax.lax.rsqrt(var + EPS)             # (tk, 1)
    shift = b1_ref[...] - mu * scale                           # (tk, 1)

    # --- residual add + ReLU ---
    h = jnp.maximum(x * scale + shift + r, 0.0)                # (tk, M)

    # --- Conv2d(1024 -> 256, 1x1, no bias): (Cout, tk) @ (tk, M) on the MXU ---
    acc_ref[...] += jnp.dot(w_ref[...], h, preferred_element_type=jnp.float32)

    # --- final step: BatchNorm2d(256) over the accumulated (Cout, M) result ---
    @pl.when(k == pl.num_programs(0) - 1)
    def _():
        y = acc_ref[...]                                       # (Cout, M)
        mu2 = jnp.mean(y, axis=1, keepdims=True)
        var2 = jnp.mean((y - mu2) ** 2, axis=1, keepdims=True)
        out_ref[...] = ((y - mu2) * jax.lax.rsqrt(var2 + EPS) * g2_ref[...]
                        + b2_ref[...])


def fused_forward(x307, x300, gamma1, beta1, conv_w, gamma2, beta2, *, tk=256):
    """x307, x300: NCHW float32 (N must be 1). conv_w: (Cout, Cin, 1, 1)."""
    N, Cin, H, W = x307.shape
    Cout = conv_w.shape[0]
    M = H * W
    # The zero-copy (C, M) layout relies on N == 1 (true for this module's spec).
    assert N == 1, "N > 1 would need per-batch handling of the NCHW view"
    assert Cin % tk == 0

    # NCHW with N == 1 -> (Cin, M) is a free reshape: no HBM transposes at all.
    x2d = x307.reshape(Cin, M).astype(jnp.float32)
    r2d = x300.reshape(Cin, M).astype(jnp.float32)
    w2d = conv_w.reshape(Cout, Cin).astype(jnp.float32)        # no .T needed
    g1 = gamma1.reshape(Cin, 1).astype(jnp.float32)
    b1 = beta1.reshape(Cin, 1).astype(jnp.float32)
    g2 = gamma2.reshape(Cout, 1).astype(jnp.float32)
    b2 = beta2.reshape(Cout, 1).astype(jnp.float32)

    out2d = pl.pallas_call(
        fused_kernel,
        out_shape=jax.ShapeDtypeStruct((Cout, M), jnp.float32),
        grid_spec=pltpu.PrefetchScalarGridSpec(
            num_scalar_prefetch=0,
            grid=(Cin // tk,),                                 # reduction over Cin
            in_specs=[
                pl.BlockSpec((tk, M), lambda k: (k, 0)),       # x slice
                pl.BlockSpec((tk, M), lambda k: (k, 0)),       # residual slice
                pl.BlockSpec((tk, 1), lambda k: (k, 0)),       # gamma1 slice
                pl.BlockSpec((tk, 1), lambda k: (k, 0)),       # beta1 slice
                pl.BlockSpec((Cout, tk), lambda k: (0, k)),    # weight slice
                pl.BlockSpec((Cout, 1), lambda k: (0, 0)),     # gamma2 (resident)
                pl.BlockSpec((Cout, 1), lambda k: (0, 0)),     # beta2  (resident)
            ],
            out_specs=pl.BlockSpec((Cout, M), lambda k: (0, 0)),
            scratch_shapes=[pltpu.VMEM((Cout, M), jnp.float32)],
        ),
        compiler_params=pltpu.CompilerParams(
            dimension_semantics=("arbitrary",),                # Cin is a reduction
            vmem_limit_bytes=16 << 20,                         # modest; fits all gens
        ),
    )(x2d, r2d, g1, b1, w2d, g2, b2)

    # (Cout, M) -> (1, Cout, H, W): again a zero-copy reshape back to NCHW.
    return out2d.reshape(N, Cout, H, W)


def reference_forward(x307, x300, gamma1, beta1, conv_w, gamma2, beta2):
    """Pure-JAX reference with identical semantics (for a sanity check)."""
    def bn(x, g, b):  # x: NCHW, per-channel stats over (N, H, W)
        mu = jnp.mean(x, axis=(0, 2, 3), keepdims=True)
        var = jnp.mean((x - mu) ** 2, axis=(0, 2, 3), keepdims=True)
        return ((x - mu) * jax.lax.rsqrt(var + EPS) * g[None, :, None, None]
                + b[None, :, None, None])

    h = jnp.maximum(bn(x307, gamma1, beta1) + x300, 0.0)
    y = jax.lax.conv_general_dilated(h, conv_w, (1, 1), "VALID",
                                     dimension_numbers=("NCHW", "OIHW", "NCHW"))
    return bn(y, gamma2, beta2)


if __name__ == "__main__":
    key = jax.random.PRNGKey(0)
    k1, k2, k3, k4, k5, k6, k7 = jax.random.split(key, 7)

    N, Cin, H, W = 1, 1024, 14, 14
    Cout = 256

    x307 = jax.random.normal(k1, (N, Cin, H, W), dtype=jnp.float32)
    x300 = jax.random.normal(k2, (N, Cin, H, W), dtype=jnp.float32)

    # Deterministic parameter init (shapes from the module's __init__).
    gamma1 = 1.0 + 0.1 * jax.random.normal(k3, (Cin,), dtype=jnp.float32)
    beta1 = 0.1 * jax.random.normal(k4, (Cin,), dtype=jnp.float32)
    conv_w = jax.random.normal(k5, (Cout, Cin, 1, 1), dtype=jnp.float32) * (1.0 / np.sqrt(Cin))
    gamma2 = 1.0 + 0.1 * jax.random.normal(k6, (Cout,), dtype=jnp.float32)
    beta2 = 0.1 * jax.random.normal(k7, (Cout,), dtype=jnp.float32)

    out = fused_forward(x307, x300, gamma1, beta1, conv_w, gamma2, beta2)
    out = jax.block_until_ready(out)

    ref = jax.block_until_ready(
        reference_forward(x307, x300, gamma1, beta1, conv_w, gamma2, beta2)
    )

    assert out.shape == (N, Cout, H, W), out.shape
    np.testing.assert_allclose(np.asarray(out), np.asarray(ref), rtol=1e-3, atol=1e-3)
    print("KERNEL_OK")
</pallas_src>

<mosaic_0001>
module attributes {stable_mosaic.version = 11 : i64} {
  func.func @fused_kernel(%arg0: i32, %arg1: memref<256x196xf32, #tpu.memory_space<vmem>>, %arg2: memref<256x196xf32, #tpu.memory_space<vmem>>, %arg3: memref<256x1xf32, #tpu.memory_space<vmem>>, %arg4: memref<256x1xf32, #tpu.memory_space<vmem>>, %arg5: memref<256x256xf32, #tpu.memory_space<vmem>>, %arg6: memref<256x1xf32, #tpu.memory_space<vmem>>, %arg7: memref<256x1xf32, #tpu.memory_space<vmem>>, %arg8: memref<256x196xf32, #tpu.memory_space<vmem>>, %arg9: memref<256x196xf32, #tpu.memory_space<vmem>>) attributes {dimension_semantics = [#tpu.dimension_semantics<arbitrary>], iteration_bounds = array<i64: 4>, scalar_prefetch = 0 : i64, scratch_operands = 1 : i64, tpu.core_type = #tpu.core_type<tc>, window_params = [{transform_indices = @transform_0, window_bounds = array<i64: 256, 196>}, {transform_indices = @transform_1, window_bounds = array<i64: 256, 196>}, {transform_indices = @transform_2, window_bounds = array<i64: 256, 1>}, {transform_indices = @transform_3, window_bounds = array<i64: 256, 1>}, {transform_indices = @transform_4, window_bounds = array<i64: 256, 256>}, {pipeline_mode = #tpu.pipeline_mode<synchronous>, transform_indices = @transform_5, window_bounds = array<i64: 256, 1>}, {pipeline_mode = #tpu.pipeline_mode<synchronous>, transform_indices = @transform_6, window_bounds = array<i64: 256, 1>}, {pipeline_mode = #tpu.pipeline_mode<synchronous>, transform_indices = @transform_7, window_bounds = array<i64: 256, 196>}]} {
    %c0_i32 = arith.constant 0 : i32
    %0 = arith.cmpi eq, %arg0, %c0_i32 : i32
    %1 = arith.extui %0 : i1 to i32
    %c0_i32_0 = arith.constant 0 : i32
    %2 = arith.cmpi ne, %1, %c0_i32_0 : i32
    scf.if %2 {
      %cst_21 = arith.constant 0.000000e+00 : f32
      %39 = vector.broadcast %cst_21 : f32 to vector<256x196xf32>
      %c0_22 = arith.constant 0 : index
      %c0_23 = arith.constant 0 : index
      %40 = vector.load %arg9[%c0_22, %c0_23] : memref<256x196xf32, #tpu.memory_space<vmem>>, vector<256x196xf32>
      tpu.vector_store %arg9[%c0_22, %c0_23], %39 {strides = array<i32>} : memref<256x196xf32, #tpu.memory_space<vmem>>, vector<256x196xf32>,
    } else {
    }
    %c0 = arith.constant 0 : index
    %c0_1 = arith.constant 0 : index
    %3 = vector.load %arg1[%c0, %c0_1] : memref<256x196xf32, #tpu.memory_space<vmem>>, vector<256x196xf32>
    %c0_2 = arith.constant 0 : index
    %c0_3 = arith.constant 0 : index
    %4 = vector.load %arg2[%c0_2, %c0_3] : memref<256x196xf32, #tpu.memory_space<vmem>>, vector<256x196xf32>
    %cst = arith.constant dense<0.000000e+00> : vector<256xf32>
    %5 = vector.multi_reduction <add>, %3, %cst [1] : vector<256x196xf32> to vector<256xf32>
    %6 = vector.shape_cast %5 : vector<256xf32> to vector<256x1xf32>
    %cst_4 = arith.constant 1.960000e+02 : f32
    %7 = vector.broadcast %cst_4 : f32 to vector<256x1xf32>
    %8 = arith.divf %6, %7 : vector<256x1xf32>
    %9 = arith.mulf %3, %3 : vector<256x196xf32>
    %cst_5 = arith.constant dense<0.000000e+00> : vector<256xf32>
    %10 = vector.multi_reduction <add>, %9, %cst_5 [1] : vector<256x196xf32> to vector<256xf32>
    %11 = vector.shape_cast %10 : vector<256xf32> to vector<256x1xf32>
    %cst_6 = arith.constant 1.960000e+02 : f32
    %12 = vector.broadcast %cst_6 : f32 to vector<256x1xf32>
    %13 = arith.divf %11, %12 : vector<256x1xf32>
    %14 = arith.mulf %8, %8 : vector<256x1xf32>
    %15 = arith.subf %13, %14 : vector<256x1xf32>
    %c0_7 = arith.constant 0 : index
    %c0_8 = arith.constant 0 : index
    %16 = vector.load %arg3[%c0_7, %c0_8] : memref<256x1xf32, #tpu.memory_space<vmem>>, vector<256x1xf32>
    %cst_9 = arith.constant 9.99999974E-6 : f32
    %17 = vector.broadcast %cst_9 : f32 to vector<256x1xf32>
    %18 = arith.addf %15, %17 : vector<256x1xf32>
    %19 = math.rsqrt %18 : vector<256x1xf32>
    %20 = arith.mulf %16, %19 : vector<256x1xf32>
    %c0_10 = arith.constant 0 : index
    %c0_11 = arith.constant 0 : index
    %21 = vector.load %arg4[%c0_10, %c0_11] : memref<256x1xf32, #tpu.memory_space<vmem>>, vector<256x1xf32>
    %22 = arith.mulf %8, %20 : vector<256x1xf32>
    %23 = arith.subf %21, %22 : vector<256x1xf32>
    %24 = vector.broadcast %20 : vector<256x1xf32> to vector<256x196xf32>
    %25 = arith.mulf %3, %24 : vector<256x196xf32>
    %26 = vector.broadcast %23 : vector<256x1xf32> to vector<256x196xf32>
    %27 = arith.addf %25, %26 : vector<256x196xf32>
    %28 = arith.addf %27, %4 : vector<256x196xf32>
    %cst_12 = arith.constant 0.000000e+00 : f32
    %29 = vector.broadcast %cst_12 : f32 to vector<256x196xf32>
    %30 = arith.maximumf %28, %29 : vector<256x196xf32>
    %c0_13 = arith.constant 0 : index
    %c0_14 = arith.constant 0 : index
    %31 = vector.load %arg9[%c0_13, %c0_14] : memref<256x196xf32, #tpu.memory_space<vmem>>, vector<256x196xf32>
    %c0_15 = arith.constant 0 : index
    %c0_16 = arith.constant 0 : index
    %32 = vector.load %arg5[%c0_15, %c0_16] : memref<256x256xf32, #tpu.memory_space<vmem>>, vector<256x256xf32>
    %cst_17 = arith.constant dense<0.000000e+00> : vector<256x196xf32>
    %33 = tpu.matmul %32, %30, %cst_17 {dimension_numbers = #tpu.dot_dimension_numbers<[1], [0], [0], [1], [0, 0, 1, 1], [], []>} : vector<256x256xf32>, vector<256x196xf32>, vector<256x196xf32> -> vector<256x196xf32>
    %34 = arith.addf %31, %33 : vector<256x196xf32>
    %c0_18 = arith.constant 0 : index
    %c0_19 = arith.constant 0 : index
    %35 = vector.load %arg9[%c0_18, %c0_19] : memref<256x196xf32, #tpu.memory_space<vmem>>, vector<256x196xf32>
    tpu.vector_store %arg9[%c0_18, %c0_19], %34 {strides = array<i32>} : memref<256x196xf32, #tpu.memory_space<vmem>>, vector<256x196xf32>,
    %c3_i32 = arith.constant 3 : i32
    %36 = arith.cmpi eq, %arg0, %c3_i32 : i32
    %37 = arith.extui %36 : i1 to i32
    %c0_i32_20 = arith.constant 0 : i32
    %38 = arith.cmpi ne, %37, %c0_i32_20 : i32
    scf.if %38 {
      %c0_21 = arith.constant 0 : index
      %c0_22 = arith.constant 0 : index
      %39 = vector.load %arg9[%c0_21, %c0_22] : memref<256x196xf32, #tpu.memory_space<vmem>>, vector<256x196xf32>
      %cst_23 = arith.constant dense<0.000000e+00> : vector<256xf32>
      %40 = vector.multi_reduction <add>, %39, %cst_23 [1] : vector<256x196xf32> to vector<256xf32>
      %41 = vector.shape_cast %40 : vector<256xf32> to vector<256x1xf32>
      %cst_24 = arith.constant 1.960000e+02 : f32
      %42 = vector.broadcast %cst_24 : f32 to vector<256x1xf32>
      %43 = arith.divf %41, %42 : vector<256x1xf32>
      %44 = vector.broadcast %43 : vector<256x1xf32> to vector<256x196xf32>
      %45 = arith.subf %39, %44 : vector<256x196xf32>
      %46 = arith.mulf %45, %45 : vector<256x196xf32>
      %cst_25 = arith.constant dense<0.000000e+00> : vector<256xf32>
      %47 = vector.multi_reduction <add>, %46, %cst_25 [1] : vector<256x196xf32> to vector<256xf32>
      %48 = vector.shape_cast %47 : vector<256xf32> to vector<256x1xf32>
      %cst_26 = arith.constant 1.960000e+02 : f32
      %49 = vector.broadcast %cst_26 : f32 to vector<256x1xf32>
      %50 = arith.divf %48, %49 : vector<256x1xf32>
      %51 = vector.broadcast %43 : vector<256x1xf32> to vector<256x196xf32>
      %52 = arith.subf %39, %51 : vector<256x196xf32>
      %cst_27 = arith.constant 9.99999974E-6 : f32
      %53 = vector.broadcast %cst_27 : f32 to vector<256x1xf32>
      %54 = arith.addf %50, %53 : vector<256x1xf32>
      %55 = math.rsqrt %54 : vector<256x1xf32>
      %56 = vector.broadcast %55 : vector<256x1xf32> to vector<256x196xf32>
      %57 = arith.mulf %52, %56 : vector<256x196xf32>
      %c0_28 = arith.constant 0 : index
      %c0_29 = arith.constant 0 : index
      %58 = vector.load %arg6[%c0_28, %c0_29] : memref<256x1xf32, #tpu.memory_space<vmem>>, vector<256x1xf32>
      %59 = vector.broadcast %58 : vector<256x1xf32> to vector<256x196xf32>
      %60 = arith.mulf %57, %59 : vector<256x196xf32>
      %c0_30 = arith.constant 0 : index
      %c0_31 = arith.constant 0 : index
      %61 = vector.load %arg7[%c0_30, %c0_31] : memref<256x1xf32, #tpu.memory_space<vmem>>, vector<256x1xf32>
      %62 = vector.broadcast %61 : vector<256x1xf32> to vector<256x196xf32>
      %63 = arith.addf %60, %62 : vector<256x196xf32>
      %c0_32 = arith.constant 0 : index
      %c0_33 = arith.constant 0 : index
      %64 = vector.load %arg8[%c0_32, %c0_33] : memref<256x196xf32, #tpu.memory_space<vmem>>, vector<256x196xf32>
      tpu.vector_store %arg8[%c0_32, %c0_33], %63 {strides = array<i32>} : memref<256x196xf32, #tpu.memory_space<vmem>>, vector<256x196xf32>,
    } else {
    }
    return
  }
  func.func @transform_0(%arg0: i32) -> (i32, i32) {
    %c0_i32 = arith.constant 0 : i32
    %c0_i32_0 = arith.constant 0 : i32
    return %arg0, %c0_i32 : i32, i32
  }
  func.func @transform_1(%arg0: i32) -> (i32, i32) {
    %c0_i32 = arith.constant 0 : i32
    %c0_i32_0 = arith.constant 0 : i32
    return %arg0, %c0_i32 : i32, i32
  }
  func.func @transform_2(%arg0: i32) -> (i32, i32) {
    %c0_i32 = arith.constant 0 : i32
    %c0_i32_0 = arith.constant 0 : i32
    return %arg0, %c0_i32 : i32, i32
  }
  func.func @transform_3(%arg0: i32) -> (i32, i32) {
    %c0_i32 = arith.constant 0 : i32
    %c0_i32_0 = arith.constant 0 : i32
    return %arg0, %c0_i32 : i32, i32
  }
  func.func @transform_4(%arg0: i32) -> (i32, i32) {
    %c0_i32 = arith.constant 0 : i32
    %c0_i32_0 = arith.constant 0 : i32
    return %c0_i32, %arg0 : i32, i32
  }
  func.func @transform_5(%arg0: i32) -> (i32, i32) {
    %c0_i32 = arith.constant 0 : i32
    %c0_i32_0 = arith.constant 0 : i32
    %c0_i32_1 = arith.constant 0 : i32
    return %c0_i32, %c0_i32_0 : i32, i32
  }
  func.func @transform_6(%arg0: i32) -> (i32, i32) {
    %c0_i32 = arith.constant 0 : i32
    %c0_i32_0 = arith.constant 0 : i32
    %c0_i32_1 = arith.constant 0 : i32
    return %c0_i32, %c0_i32_0 : i32, i32
  }
  func.func @transform_7(%arg0: i32) -> (i32, i32) {
    %c0_i32 = arith.constant 0 : i32
    %c0_i32_0 = arith.constant 0 : i32
    %c0_i32_1 = arith.constant 0 : i32
    return %c0_i32, %c0_i32_0 : i32, i32
  }
}

</mosaic_0001>

<llo_original>
// kernel: tpu_custom_call.1
$region0: #{tpu_custom_call.1}
  #allocation0 [shape = 'u32[]', space=smem, size = 0x4, offset = 0x4, fixed_abs, tag = 'smem constant byte address 0x4 - core index']
  #allocation1 [shape = 'u32[144,128]{1,0:T(1,128)}', space=vmem, size = 0x12000, scoped, tag = 'internal scratch']
  #allocation2 [shape = 'f32[256,196]{1,0:T(8,128)}', space=vmem, size = 0x40000, scoped, tag = 'scratch operand']
  %s0 = inlined_call_operand.vmem [shape: f32[1024,196], index: 0, kind: input, shape index: {}]
  %s1 = inlined_call_operand.vmem [shape: f32[1024,196], index: 1, kind: input, shape index: {}]
  %s2 = inlined_call_operand.vmem [shape: f32[1024,1], index: 2, kind: input, shape index: {}]
  %s3 = inlined_call_operand.vmem [shape: f32[1024,1], index: 3, kind: input, shape index: {}]
  %s4 = inlined_call_operand.vmem [shape: f32[256,1024], index: 4, kind: input, shape index: {}]
  %s5 = inlined_call_operand.vmem [shape: f32[256,1], index: 5, kind: input, shape index: {}]
  %s6 = inlined_call_operand.vmem [shape: f32[256,1], index: 6, kind: input, shape index: {}]
  %s7 = inlined_call_operand.vmem [shape: f32[256,196], index: 7, kind: output, shape index: {}]
  %s8 = sld [smem:[#allocation0]]
  $region92: #{tpu_custom_call.1} parent=0
    _
  %s10 = ssub.s32 1, %s8
  %s11 = scalar_select 0, %s10, %s8
  $region1: #{tpu_custom_call.1} parent=0
    #allocation3 [shape = 'u8[524288]{0}', space=vmem, size = 0x80000, scoped, tag = 'input window, operand 4']
    loop: start=0, step=1, limit=6
    $region2: #{tpu_custom_call.1} parent=1 // loop_pre_header
      _
    $region3: #{tpu_custom_call.1} parent=1 // loop_header
      %s13 = sphi 0, %s17
      %p14 = scmp.ge.s32.totalorder %s13, 6
      %s23 = sphi 0, %s25
      %s26 = sphi 0, %s23
      %s27 = sphi 0, %s26
      %s43 = sphi 0, %s27
      %s49 = sphi 0, %s51
      %s52 = sphi 0, %s49
      %s53 = sphi 0, %s52
      %s69 = sphi 0, %s53
      %s75 = sphi 0, %s77
      %s78 = sphi 0, %s75
      %s79 = sphi 0, %s78
      %s95 = sphi 0, %s79
      %s101 = sphi 0, %s103
      %s104 = sphi 0, %s101
      %s105 = sphi 0, %s104
      %s121 = sphi 0, %s105
      %s127 = sphi 0, %s129
      %s130 = sphi 0, %s127
      %s131 = sphi 0, %s130
      %s147 = sphi 0, %s131
      %s151 = sphi 0, %s151
      %s153 = sphi 0, %s151
      %s154 = sphi 0, %s153
      %s168 = sphi 0, %s154
      %s172 = sphi 0, %s172
      %s174 = sphi 0, %s172
      %s175 = sphi 0, %s174
      %s189 = sphi 0, %s175
      %s193 = sphi 0, %s193
      %s195 = sphi 0, %s193
      %s196 = sphi 0, %s195
      %s210 = sphi 0, %s196
    $region4: #{tpu_custom_call.1} parent=1 // loop_header_branch
      %16 = sbr.rel (%p14) target = $region8
    $region5: #{tpu_custom_call.1} parent=1 // loop_body
      %s18 = ssub.s32 %s13, 1
      %s19 = ssub.s32 %s13, 2
      %s20 = sadd.s32 %s13, 1
      %s21 = ssub.s32 %s13, %s20
      %p22 = scmp.eq.s32.totalorder %s21, 0
      %s24 = sadd.s32 %s23, 1
      %s25 = scalar_select %p22, %s23, %s24
      %p28 = pneg %p22
      %p29 = scmp.eq.s32.totalorder %s13, 3
      %p30 = por %p28, %p29
      %p31 = scmp.ne.s32.totalorder %s23, %s26
      %p32 = scmp.eq.s32.totalorder %s13, 0
      %p33 = por %p31, %p32
      %p34 = scmp.ne.s32.totalorder %s23, %s26
      %p35 = scmp.eq.s32.totalorder %s18, 3
      %p36 = por %p34, %p35
      %p37 = scmp.ne.s32.totalorder %s26, %s27
      %p38 = scmp.eq.s32.totalorder %s18, 0
      %p39 = por %p37, %p38
      %p40 = scmp.ne.s32.totalorder %s26, %s27
      %p41 = scmp.eq.s32.totalorder %s19, 3
      %p42 = por %p40, %p41
      %p44 = scmp.ne.s32.totalorder %s27, %s43
      %p45 = scmp.eq.s32.totalorder %s19, 0
      %p46 = por %p44, %p45
      %s47 = ssub.s32 %s13, %s20
      %p48 = scmp.eq.s32.totalorder %s47, 0
      %s50 = sadd.s32 %s49, 1
      %s51 = scalar_select %p48, %s49, %s50
      %p54 = pneg %p48
      %p55 = scmp.eq.s32.totalorder %s13, 3
      %p56 = por %p54, %p55
      %p57 = scmp.ne.s32.totalorder %s49, %s52
      %p58 = scmp.eq.s32.totalorder %s13, 0
      %p59 = por %p57, %p58
      %p60 = scmp.ne.s32.totalorder %s49, %s52
      %p61 = scmp.eq.s32.totalorder %s18, 3
      %p62 = por %p60, %p61
      %p63 = scmp.ne.s32.totalorder %s52, %s53
      %p64 = scmp.eq.s32.totalorder %s18, 0
      %p65 = por %p63, %p64
      %p66 = scmp.ne.s32.totalorder %s52, %s53
      %p67 = scmp.eq.s32.totalorder %s19, 3
      %p68 = por %p66, %p67
      %p70 = scmp.ne.s32.totalorder %s53, %s69
      %p71 = scmp.eq.s32.totalorder %s19, 0
      %p72 = por %p70, %p71
      %s73 = ssub.s32 %s13, %s20
      %p74 = scmp.eq.s32.totalorder %s73, 0
      %s76 = sadd.s32 %s75, 1
      %s77 = scalar_select %p74, %s75, %s76
      %p80 = pneg %p74
      %p81 = scmp.eq.s32.totalorder %s13, 3
      %p82 = por %p80, %p81
      %p83 = scmp.ne.s32.totalorder %s75, %s78
      %p84 = scmp.eq.s32.totalorder %s13, 0
      %p85 = por %p83, %p84
      %p86 = scmp.ne.s32.totalorder %s75, %s78
      %p87 = scmp.eq.s32.totalorder %s18, 3
      %p88 = por %p86, %p87
      %p89 = scmp.ne.s32.totalorder %s78, %s79
      %p90 = scmp.eq.s32.totalorder %s18, 0
      %p91 = por %p89, %p90
      %p92 = scmp.ne.s32.totalorder %s78, %s79
      %p93 = scmp.eq.s32.totalorder %s19, 3
      %p94 = por %p92, %p93
      %p96 = scmp.ne.s32.totalorder %s79, %s95
      %p97 = scmp.eq.s32.totalorder %s19, 0
      %p98 = por %p96, %p97
      %s99 = ssub.s32 %s13, %s20
      %p100 = scmp.eq.s32.totalorder %s99, 0
      %s102 = sadd.s32 %s101, 1
      %s103 = scalar_select %p100, %s101, %s102
      %p106 = pneg %p100
      %p107 = scmp.eq.s32.totalorder %s13, 3
      %p108 = por %p106, %p107
      %p109 = scmp.ne.s32.totalorder %s101, %s104
      %p110 = scmp.eq.s32.totalorder %s13, 0
      %p111 = por %p109, %p110
      %p112 = scmp.ne.s32.totalorder %s101, %s104
      %p113 = scmp.eq.s32.totalorder %s18, 3
      %p114 = por %p112, %p113
      %p115 = scmp.ne.s32.totalorder %s104, %s105
      %p116 = scmp.eq.s32.totalorder %s18, 0
      %p117 = por %p115, %p116
      %p118 = scmp.ne.s32.totalorder %s104, %s105
      %p119 = scmp.eq.s32.totalorder %s19, 3
      %p120 = por %p118, %p119
      %p122 = scmp.ne.s32.totalorder %s105, %s121
      %p123 = scmp.eq.s32.totalorder %s19, 0
      %p124 = por %p122, %p123
      %s125 = ssub.s32 %s13, %s20
      %p126 = scmp.eq.s32.totalorder %s125, 0
      %s128 = sadd.s32 %s127, 1
      %s129 = scalar_select %p126, %s127, %s128
      %p132 = pneg %p126
      %p133 = scmp.eq.s32.totalorder %s13, 3
      %p134 = por %p132, %p133
      %p135 = scmp.ne.s32.totalorder %s127, %s130
      %p136 = scmp.eq.s32.totalorder %s13, 0
      %p137 = por %p135, %p136
      %p138 = scmp.ne.s32.totalorder %s127, %s130
      %p139 = scmp.eq.s32.totalorder %s18, 3
      %p140 = por %p138, %p139
      %p141 = scmp.ne.s32.totalorder %s130, %s131
      %p142 = scmp.eq.s32.totalorder %s18, 0
      %p143 = por %p141, %p142
      %p144 = scmp.ne.s32.totalorder %s130, %s131
      %p145 = scmp.eq.s32.totalorder %s19, 3
      %p146 = por %p144, %p145
      %p148 = scmp.ne.s32.totalorder %s131, %s147
      %p149 = scmp.eq.s32.totalorder %s19, 0
      %p150 = por %p148, %p149
      %s152 = sadd.s32 %s151, 1
      %p155 = scmp.eq.s32.totalorder %s13, 3
      %p156 = scmp.ne.s32.totalorder %s151, %s153
      %p157 = scmp.eq.s32.totalorder %s13, 0
      %p158 = por %p156, %p157
      %p159 = scmp.ne.s32.totalorder %s151, %s153
      %p160 = scmp.eq.s32.totalorder %s18, 3
      %p161 = por %p159, %p160
      %p162 = scmp.ne.s32.totalorder %s153, %s154
      %p163 = scmp.eq.s32.totalorder %s18, 0
      %p164 = por %p162, %p163
      %p165 = scmp.ne.s32.totalorder %s153, %s154
      %p166 = scmp.eq.s32.totalorder %s19, 3
      %p167 = por %p165, %p166
      %p169 = scmp.ne.s32.totalorder %s154, %s168
      %p170 = scmp.eq.s32.totalorder %s19, 0
      %p171 = por %p169, %p170
      %s173 = sadd.s32 %s172, 1
      %p176 = scmp.eq.s32.totalorder %s13, 3
      %p177 = scmp.ne.s32.totalorder %s172, %s174
      %p178 = scmp.eq.s32.totalorder %s13, 0
      %p179 = por %p177, %p178
      %p180 = scmp.ne.s32.totalorder %s172, %s174
      %p181 = scmp.eq.s32.totalorder %s18, 3
      %p182 = por %p180, %p181
      %p183 = scmp.ne.s32.totalorder %s174, %s175
      %p184 = scmp.eq.s32.totalorder %s18, 0
      %p185 = por %p183, %p184
      %p186 = scmp.ne.s32.totalorder %s174, %s175
      %p187 = scmp.eq.s32.totalorder %s19, 3
      %p188 = por %p186, %p187
      %p190 = scmp.ne.s32.totalorder %s175, %s189
      %p191 = scmp.eq.s32.totalorder %s19, 0
      %p192 = por %p190, %p191
      %s194 = sadd.s32 %s193, 1
      %p197 = scmp.eq.s32.totalorder %s13, 3
      %p198 = scmp.ne.s32.totalorder %s193, %s195
      %p199 = scmp.eq.s32.totalorder %s13, 0
      %p200 = por %p198, %p199
      %p201 = scmp.ne.s32.totalorder %s193, %s195
      %p202 = scmp.eq.s32.totalorder %s18, 3
      %p203 = por %p201, %p202
      %p204 = scmp.ne.s32.totalorder %s195, %s196
      %p205 = scmp.eq.s32.totalorder %s18, 0
      %p206 = por %p204, %p205
      %p207 = scmp.ne.s32.totalorder %s195, %s196
      %p208 = scmp.eq.s32.totalorder %s19, 3
      %p209 = por %p207, %p208
      %p211 = scmp.ne.s32.totalorder %s196, %s210
      %p212 = scmp.eq.s32.totalorder %s19, 0
      %p213 = por %p211, %p212
      %p214 = scmp.le.s32.totalorder 1, %s13
      %p215 = scmp.lt.s32.totalorder %s13, 5
      %p216 = pnand %p214, %p215
      %p217 = pneg %p216
      // Predicated region
      $region9: #{tpu_custom_call.1} parent=5 // pred_check
        _
      $region10: #{tpu_custom_call.1} parent=5 // pred_check_branch
        %219 = sbr.rel (%p216) target = $region12
      $region11: #{tpu_custom_call.1} parent=5 // pred_region
        %s220 = ssub.s32 %s13, 1
        // Predicated region
        $region13: #{tpu_custom_call.1} parent=11 // pred_check
          %p221 = pneg %p164
        $region14: #{tpu_custom_call.1} parent=11 // pred_check_branch
          %223 = sbr.rel (%p221) target = $region16
        $region15: #{tpu_custom_call.1} parent=11 // pred_region
          _
        $region16: #{tpu_custom_call.1} parent=11 // pred_fallthru
          _
        // Predicated region
        $region17: #{tpu_custom_call.1} parent=11 // pred_check
          %p224 = pneg %p185
        $region18: #{tpu_custom_call.1} parent=11 // pred_check_branch
          %226 = sbr.rel (%p224) target = $region20
        $region19: #{tpu_custom_call.1} parent=11 // pred_region
          _
        $region20: #{tpu_custom_call.1} parent=11 // pred_fallthru
          _
      $region12: #{tpu_custom_call.1} parent=5 // pred_fallthru
        _
      %p227 = scmp.lt.s32.totalorder %s13, 4
      // Predicated region
      $region21: #{tpu_custom_call.1} parent=5 // pred_check
        %p228 = pneg %p227
      $region22: #{tpu_custom_call.1} parent=5 // pred_check_branch
        %230 = sbr.rel (%p228) target = $region24
      $region23: #{tpu_custom_call.1} parent=5 // pred_region
        // Predicated region
        $region25: #{tpu_custom_call.1} parent=23 // pred_check
          %p231 = pneg %p33
        $region26: #{tpu_custom_call.1} parent=23 // pred_check_branch
          %233 = sbr.rel (%p231) target = $region28
        $region27: #{tpu_custom_call.1} parent=23 // pred_region
          %s234 = smul.u32 32, %s13
          %p235 = scmp.lt.s32.totalorder %s234, 127
          %s236 = scalar_select %p235, %s234, 127
          %s237 = smul.addr %s236, 2
          %s238 = smul.addr %s237, 8
          %s239 = scalar_lea.vmem %s0, %s238
          %s240 = smul.u32 32, %s13
        $region28: #{tpu_custom_call.1} parent=23 // pred_fallthru
          _
        // Predicated region
        $region29: #{tpu_custom_call.1} parent=23 // pred_check
          %p241 = pneg %p59
        $region30: #{tpu_custom_call.1} parent=23 // pred_check_branch
          %243 = sbr.rel (%p241) target = $region32
        $region31: #{tpu_custom_call.1} parent=23 // pred_region
          %s244 = smul.u32 32, %s13
          %p245 = scmp.lt.s32.totalorder %s244, 127
          %s246 = scalar_select %p245, %s244, 127
          %s247 = smul.addr %s246, 2
          %s248 = smul.addr %s247, 8
          %s249 = scalar_lea.vmem %s1, %s248
          %s250 = smul.u32 32, %s13
        $region32: #{tpu_custom_call.1} parent=23 // pred_fallthru
          _
        // Predicated region
        $region33: #{tpu_custom_call.1} parent=23 // pred_check
          %p251 = pneg %p85
        $region34: #{tpu_custom_call.1} parent=23 // pred_check_branch
          %253 = sbr.rel (%p251) target = $region36
        $region35: #{tpu_custom_call.1} parent=23 // pred_region
          %s254 = smul.u32 32, %s13
          %p255 = scmp.lt.s32.totalorder %s254, 127
          %s256 = scalar_select %p255, %s254, 127
          %s257 = smul.addr %s256, 8
          %s258 = scalar_lea.vmem %s2, %s257
          %s259 = smul.u32 32, %s13
        $region36: #{tpu_custom_call.1} parent=23 // pred_fallthru
          _
        // Predicated region
        $region37: #{tpu_custom_call.1} parent=23 // pred_check
          %p260 = pneg %p111
        $region38: #{tpu_custom_call.1} parent=23 // pred_check_branch
          %262 = sbr.rel (%p260) target = $region40
        $region39: #{tpu_custom_call.1} parent=23 // pred_region
          %s263 = smul.u32 32, %s13
          %p264 = scmp.lt.s32.totalorder %s263, 127
          %s265 = scalar_select %p264, %s263, 127
          %s266 = smul.addr %s265, 8
          %s267 = scalar_lea.vmem %s3, %s266
          %s268 = smul.u32 32, %s13
        $region40: #{tpu_custom_call.1} parent=23 // pred_fallthru
          _
        // Predicated region
        $region41: #{tpu_custom_call.1} parent=23 // pred_check
          %p269 = pneg %p137
        $region42: #{tpu_custom_call.1} parent=23 // pred_check_branch
          %271 = sbr.rel (%p269) target = $region44
        $region43: #{tpu_custom_call.1} parent=23 // pred_region
          %s272 = sand.u32 %s127, 1
          %s273 = sand.u32 %s127, 1
          %s274 = smul.addr %s273, 512
          %s275 = scalar_lea.vmem [#allocation3], %s274
          %s276 = smul.u32 2, %s13
          %s277 = smul.addr %s276, 8
          %s278 = scalar_lea.vmem %s4, %s277
          // Predicated region
          $region45: #{tpu_custom_call.1} parent=43 // pred_check
            _
          $region46: #{tpu_custom_call.1} parent=43 // pred_check_branch
            %280 = sbr.rel (0) target = $region48
          $region47: #{tpu_custom_call.1} parent=43 // pred_region
            // Predicated region
            $region49: #{tpu_custom_call.1} parent=47 // pred_check
              _
            $region50: #{tpu_custom_call.1} parent=47 // pred_check_branch
              %282 = sbr.rel (0) target = $region52
            $region51: #{tpu_custom_call.1} parent=47 // pred_region
              loop: start=0, step=1, limit=1
              $region53: #{tpu_custom_call.1} parent=51 // loop_pre_header
                _
              $region54: #{tpu_custom_call.1} parent=51 // loop_header
                %s284 = sphi 0, %s288
                %p285 = scmp.ge.s32.totalorder %s284, 1
                %s289 = sphi %s278, %s278
                %s290 = sphi %s275, %s275
              $region55: #{tpu_custom_call.1} parent=51 // loop_header_branch
                %287 = sbr.rel (%p285) target = $region59
              $region56: #{tpu_custom_call.1} parent=51 // loop_body
                %v291 = vld [vmem:[%s289] sm:$0xff]
                %292 = vst [vmem:[%s290] sm:$0xff] %v291
                %v293 = vld [vmem:[%s289 + $0x8] sm:$0xff]
                %294 = vst [vmem:[%s290 + $0x8] sm:$0xff] %v293
                %v295 = vld [vmem:[%s289 + $0x40] sm:$0xff]
                %296 = vst [vmem:[%s290 + $0x10] sm:$0xff] %v295
                %v297 = vld [vmem:[%s289 + $0x48] sm:$0xff]
                %298 = vst [vmem:[%s290 + $0x18] sm:$0xff] %v297
                %v299 = vld [vmem:[%s289 + $0x80] sm:$0xff]
                %300 = vst [vmem:[%s290 + $0x20] sm:$0xff] %v299
                %v301 = vld [vmem:[%s289 + $0x88] sm:$0xff]
                %302 = vst [vmem:[%s290 + $0x28] sm:$0xff] %v301
                %v303 = vld [vmem:[%s289 + $0xc0] sm:$0xff]
                %304 = vst [vmem:[%s290 + $0x30] sm:$0xff] %v303
                %v305 = vld [vmem:[%s289 + $0xc8] sm:$0xff]
                %306 = vst [vmem:[%s290 + $0x38] sm:$0xff] %v305
                %v307 = vld [vmem:[%s289 + $0x100] sm:$0xff]
                %308 = vst [vmem:[%s290 + $0x40] sm:$0xff] %v307
                %v309 = vld [vmem:[%s289 + $0x108] sm:$0xff]
                %310 = vst [vmem:[%s290 + $0x48] sm:$0xff] %v309
                %v311 = vld [vmem:[%s289 + $0x140] sm:$0xff]
                %312 = vst [vmem:[%s290 + $0x50] sm:$0xff] %v311
                %v313 = vld [vmem:[%s289 + $0x148] sm:$0xff]
                %314 = vst [vmem:[%s290 + $0x58] sm:$0xff] %v313
                %v315 = vld [vmem:[%s289 + $0x180] sm:$0xff]
                %316 = vst [vmem:[%s290 + $0x60] sm:$0xff] %v315
                %v317 = vld [vmem:[%s289 + $0x188] sm:$0xff]
                %318 = vst [vmem:[%s290 + $0x68] sm:$0xff] %v317
                %v319 = vld [vmem:[%s289 + $0x1c0] sm:$0xff]
                %320 = vst [vmem:[%s290 + $0x70] sm:$0xff] %v319
                %v321 = vld [vmem:[%s289 + $0x1c8] sm:$0xff]
                %322 = vst [vmem:[%s290 + $0x78] sm:$0xff] %v321
                %v323 = vld [vmem:[%s289 + $0x200] sm:$0xff]
                %324 = vst [vmem:[%s290 + $0x80] sm:$0xff] %v323
                %v325 = vld [vmem:[%s289 + $0x208] sm:$0xff]
                %326 = vst [vmem:[%s290 + $0x88] sm:$0xff] %v325
                %v327 = vld [vmem:[%s289 + $0x240] sm:$0xff]
                %328 = vst [vmem:[%s290 + $0x90] sm:$0xff] %v327
                %v329 = vld [vmem:[%s289 + $0x248] sm:$0xff]
                %330 = vst [vmem:[%s290 + $0x98] sm:$0xff] %v329
                %v331 = vld [vmem:[%s289 + $0x280] sm:$0xff]
                %332 = vst [vmem:[%s290 + $0xa0] sm:$0xff] %v331
                %v333 = vld [vmem:[%s289 + $0x288] sm:$0xff]
                %334 = vst [vmem:[%s290 + $0xa8] sm:$0xff] %v333
                %v335 = vld [vmem:[%s289 + $0x2c0] sm:$0xff]
                %336 = vst [vmem:[%s290 + $0xb0] sm:$0xff] %v335
                %v337 = vld [vmem:[%s289 + $0x2c8] sm:$0xff]
                %338 = vst [vmem:[%s290 + $0xb8] sm:$0xff] %v337
                %v339 = vld [vmem:[%s289 + $0x300] sm:$0xff]
                %340 = vst [vmem:[%s290 + $0xc0] sm:$0xff] %v339
                %v341 = vld [vmem:[%s289 + $0x308] sm:$0xff]
                %342 = vst [vmem:[%s290 + $0xc8] sm:$0xff] %v341
                %v343 = vld [vmem:[%s289 + $0x340] sm:$0xff]
                %344 = vst [vmem:[%s290 + $0xd0] sm:$0xff] %v343
                %v345 = vld [vmem:[%s289 + $0x348] sm:$0xff]
                %346 = vst [vmem:[%s290 + $0xd8] sm:$0xff] %v345
                %v347 = vld [vmem:[%s289 + $0x380] sm:$0xff]
                %348 = vst [vmem:[%s290 + $0xe0] sm:$0xff] %v347
                %v349 = vld [vmem:[%s289 + $0x388] sm:$0xff]
                %350 = vst [vmem:[%s290 + $0xe8] sm:$0xff] %v349
                %v351 = vld [vmem:[%s289 + $0x3c0] sm:$0xff]
                %352 = vst [vmem:[%s290 + $0xf0] sm:$0xff] %v351
                %v353 = vld [vmem:[%s289 + $0x3c8] sm:$0xff]
                %354 = vst [vmem:[%s290 + $0xf8] sm:$0xff] %v353
                %v355 = vld [vmem:[%s289 + $0x400] sm:$0xff]
                %356 = vst [vmem:[%s290 + $0x100] sm:$0xff] %v355
                %v357 = vld [vmem:[%s289 + $0x408] sm:$0xff]
                %358 = vst [vmem:[%s290 + $0x108] sm:$0xff] %v357
                %v359 = vld [vmem:[%s289 + $0x440] sm:$0xff]
                %360 = vst [vmem:[%s290 + $0x110] sm:$0xff] %v359
                %v361 = vld [vmem:[%s289 + $0x448] sm:$0xff]
                %362 = vst [vmem:[%s290 + $0x118] sm:$0xff] %v361
                %v363 = vld [vmem:[%s289 + $0x480] sm:$0xff]
                %364 = vst [vmem:[%s290 + $0x120] sm:$0xff] %v363
                %v365 = vld [vmem:[%s289 + $0x488] sm:$0xff]
                %366 = vst [vmem:[%s290 + $0x128] sm:$0xff] %v365
                %v367 = vld [vmem:[%s289 + $0x4c0] sm:$0xff]
                %368 = vst [vmem:[%s290 + $0x130] sm:$0xff] %v367
                %v369 = vld [vmem:[%s289 + $0x4c8] sm:$0xff]
                %370 = vst [vmem:[%s290 + $0x138] sm:$0xff] %v369
                %v371 = vld [vmem:[%s289 + $0x500] sm:$0xff]
                %372 = vst [vmem:[%s290 + $0x140] sm:$0xff] %v371
                %v373 = vld [vmem:[%s289 + $0x508] sm:$0xff]
                %374 = vst [vmem:[%s290 + $0x148] sm:$0xff] %v373
                %v375 = vld [vmem:[%s289 + $0x540] sm:$0xff]
                %376 = vst [vmem:[%s290 + $0x150] sm:$0xff] %v375
                %v377 = vld [vmem:[%s289 + $0x548] sm:$0xff]
                %378 = vst [vmem:[%s290 + $0x158] sm:$0xff] %v377
                %v379 = vld [vmem:[%s289 + $0x580] sm:$0xff]
                %380 = vst [vmem:[%s290 + $0x160] sm:$0xff] %v379
                %v381 = vld [vmem:[%s289 + $0x588] sm:$0xff]
                %382 = vst [vmem:[%s290 + $0x168] sm:$0xff] %v381
                %v383 = vld [vmem:[%s289 + $0x5c0] sm:$0xff]
                %384 = vst [vmem:[%s290 + $0x170] sm:$0xff] %v383
                %v385 = vld [vmem:[%s289 + $0x5c8] sm:$0xff]
                %386 = vst [vmem:[%s290 + $0x178] sm:$0xff] %v385
                %v387 = vld [vmem:[%s289 + $0x600] sm:$0xff]
                %388 = vst [vmem:[%s290 + $0x180] sm:$0xff] %v387
                %v389 = vld [vmem:[%s289 + $0x608] sm:$0xff]
                %390 = vst [vmem:[%s290 + $0x188] sm:$0xff] %v389
                %v391 = vld [vmem:[%s289 + $0x640] sm:$0xff]
                %392 = vst [vmem:[%s290 + $0x190] sm:$0xff] %v391
                %v393 = vld [vmem:[%s289 + $0x648] sm:$0xff]
                %394 = vst [vmem:[%s290 + $0x198] sm:$0xff] %v393
                %v395 = vld [vmem:[%s289 + $0x680] sm:$0xff]
                %396 = vst [vmem:[%s290 + $0x1a0] sm:$0xff] %v395
                %v397 = vld [vmem:[%s289 + $0x688] sm:$0xff]
                %398 = vst [vmem:[%s290 + $0x1a8] sm:$0xff] %v397
                %v399 = vld [vmem:[%s289 + $0x6c0] sm:$0xff]
                %400 = vst [vmem:[%s290 + $0x1b0] sm:$0xff] %v399
                %v401 = vld [vmem:[%s289 + $0x6c8] sm:$0xff]
                %402 = vst [vmem:[%s290 + $0x1b8] sm:$0xff] %v401
                %v403 = vld [vmem:[%s289 + $0x700] sm:$0xff]
                %404 = vst [vmem:[%s290 + $0x1c0] sm:$0xff] %v403
                %v405 = vld [vmem:[%s289 + $0x708] sm:$0xff]
                %406 = vst [vmem:[%s290 + $0x1c8] sm:$0xff] %v405
                %v407 = vld [vmem:[%s289 + $0x740] sm:$0xff]
                %408 = vst [vmem:[%s290 + $0x1d0] sm:$0xff] %v407
                %v409 = vld [vmem:[%s289 + $0x748] sm:$0xff]
                %410 = vst [vmem:[%s290 + $0x1d8] sm:$0xff] %v409
                %v411 = vld [vmem:[%s289 + $0x780] sm:$0xff]
                %412 = vst [vmem:[%s290 + $0x1e0] sm:$0xff] %v411
                %v413 = vld [vmem:[%s289 + $0x788] sm:$0xff]
                %414 = vst [vmem:[%s290 + $0x1e8] sm:$0xff] %v413
                %v415 = vld [vmem:[%s289 + $0x7c0] sm:$0xff]
                %416 = vst [vmem:[%s290 + $0x1f0] sm:$0xff] %v415
                %v417 = vld [vmem:[%s289 + $0x7c8] sm:$0xff]
                %418 = vst [vmem:[%s290 + $0x1f8] sm:$0xff] %v417
              $region57: #{tpu_custom_call.1} parent=51 // loop_footer
                %s288 = sadd.s32 1, %s284
              $region58: #{tpu_custom_call.1} parent=51 // loop_footer_branch
                %283 = sbr.rel target = $region54
              $region59: #{tpu_custom_call.1} parent=51 // loop_exit
                _
            $region52: #{tpu_custom_call.1} parent=47 // pred_fallthru
              _
            // Predicated region
            $region60: #{tpu_custom_call.1} parent=47 // pred_check
              _
            $region61: #{tpu_custom_call.1} parent=47 // pred_check_branch
              %420 = sbr.rel target = $region63
            $region62: #{tpu_custom_call.1} parent=47 // pred_region
              _
            $region63: #{tpu_custom_call.1} parent=47 // pred_fallthru
              _
          $region48: #{tpu_custom_call.1} parent=43 // pred_fallthru
            _
          %421 = vnop
        $region44: #{tpu_custom_call.1} parent=23 // pred_fallthru
          _
      $region24: #{tpu_custom_call.1} parent=5 // pred_fallthru
        _
      %p422 = scmp.le.s32.totalorder 1, %s13
      %p423 = scmp.lt.s32.totalorder %s13, 5
      %p424 = pnand %p422, %p423
      %p425 = pneg %p424
      // Predicated region
      $region64: #{tpu_custom_call.1} parent=5 // pred_check
        _
      $region65: #{tpu_custom_call.1} parent=5 // pred_check_branch
        %427 = sbr.rel (%p424) target = $region67
      $region66: #{tpu_custom_call.1} parent=5 // pred_region
        %s428 = ssub.s32 %s13, 1
        %s429 = sand.u32 %s130, 1
        %s430 = sand.u32 %s130, 1
        %s431 = smul.addr %s430, 512
        %s432 = scalar_lea.vmem [#allocation3], %s431
        // Predicated region
        $region68: #{tpu_custom_call.1} parent=66 // pred_check
          %p433 = pneg %p143
        $region69: #{tpu_custom_call.1} parent=66 // pred_check_branch
          %435 = sbr.rel (%p433) target = $region71
        $region70: #{tpu_custom_call.1} parent=66 // pred_region
          _
        $region71: #{tpu_custom_call.1} parent=66 // pred_fallthru
          _
        %s436 = smul.u32 32, %s18
        %p437 = scmp.lt.s32.totalorder %s436, 127
        %s438 = scalar_select %p437, %s436, 127
        %s439 = smul.addr %s438, 2
        %s440 = smul.addr %s439, 8
        %s441 = scalar_lea.vmem %s0, %s440
        %p442 = pneg %p39
        %p443 = pneg %p36
        %s444 = smul.u32 32, %s18
        %p445 = scmp.lt.s32.totalorder %s444, 127
        %s446 = scalar_select %p445, %s444, 127
        %s447 = smul.addr %s446, 2
        %s448 = smul.addr %s447, 8
        %s449 = scalar_lea.vmem %s1, %s448
        %p450 = pneg %p65
        %p451 = pneg %p62
        %s452 = smul.u32 32, %s18
        %p453 = scmp.lt.s32.totalorder %s452, 127
        %s454 = scalar_select %p453, %s452, 127
        %s455 = smul.addr %s454, 8
        %s456 = scalar_lea.vmem %s2, %s455
        %p457 = pneg %p91
        %p458 = pneg %p88
        %s459 = smul.u32 32, %s18
        %p460 = scmp.lt.s32.totalorder %s459, 127
        %s461 = scalar_select %p460, %s459, 127
        %s462 = smul.addr %s461, 8
        %s463 = scalar_lea.vmem %s3, %s462
        %p464 = pneg %p117
        %p465 = pneg %p114
        %s466 = sand.u32 %s130, 1
        %s467 = sand.u32 %s130, 1
        %s468 = smul.addr %s467, 512
        %s469 = scalar_lea.vmem [#allocation3], %s468
        %p470 = pneg %p143
        %p471 = pneg %p140
        %p472 = pneg %p164
        %p473 = pneg %p161
        %p474 = pneg %p185
        %p475 = pneg %p182
        %p476 = pneg %p206
        %p477 = pneg %p203
        %s478 = smul.u32 32, %s18
        %p479 = scmp.lt.s32.totalorder %s478, 127
        %s480 = scalar_select %p479, %s478, 127
        %s481 = smul.addr %s480, 2
        %s482 = smul.addr %s481, 8
        %s483 = scalar_lea.vmem %s0, %s482
        %s484 = smul.u32 32, %s18
        %s485 = smul.u32 32, %s18
        %p486 = scmp.lt.s32.totalorder %s485, 127
        %s487 = scalar_select %p486, %s485, 127
        %s488 = smul.addr %s487, 2
        %s489 = smul.addr %s488, 8
        %s490 = scalar_lea.vmem %s1, %s489
        %s491 = smul.u32 32, %s18
        %s492 = smul.u32 32, %s18
        %p493 = scmp.lt.s32.totalorder %s492, 127
        %s494 = scalar_select %p493, %s492, 127
        %s495 = smul.addr %s494, 8
        %s496 = scalar_lea.vmem %s2, %s495
        %s497 = smul.u32 32, %s18
        %s498 = smul.u32 32, %s18
        %p499 = scmp.lt.s32.totalorder %s498, 127
        %s500 = scalar_select %p499, %s498, 127
        %s501 = smul.addr %s500, 8
        %s502 = scalar_lea.vmem %s3, %s501
        %s503 = smul.u32 32, %s18
        %s504 = smul.u32 2, %s18
        %p505 = scmp.eq.s32.totalorder %s18, 0
        // Predicated region
        $region72: #{tpu_custom_call.1} parent=66 // pred_check
          %p506 = pneg %p505
        $region73: #{tpu_custom_call.1} parent=66 // pred_check_branch
          %508 = sbr.rel (%p506) target = $region75
        $region74: #{tpu_custom_call.1} parent=66 // pred_region
          %509 = vst [vmem:[#allocation2] sm:$0xff] 0.0
          %vm510 = vcmask 556032
          %511 = vst.msk [vmem:[#allocation2 + $0x8] sm:$0xff] %vm510, 0.0
          %512 = vst [vmem:[#allocation2 + $0x10] sm:$0xff] 0.0
          %513 = vst.msk [vmem:[#allocation2 + $0x18] sm:$0xff] %vm510, 0.0
          %514 = vst [vmem:[#allocation2 + $0x20] sm:$0xff] 0.0
          %515 = vst.msk [vmem:[#allocation2 + $0x28] sm:$0xff] %vm510, 0.0
          %516 = vst [vmem:[#allocation2 + $0x30] sm:$0xff] 0.0
          %517 = vst.msk [vmem:[#allocation2 + $0x38] sm:$0xff] %vm510, 0.0
          %518 = vst [vmem:[#allocation2 + $0x40] sm:$0xff] 0.0
          %519 = vst.msk [vmem:[#allocation2 + $0x48] sm:$0xff] %vm510, 0.0
          %520 = vst [vmem:[#allocation2 + $0x50] sm:$0xff] 0.0
          %521 = vst.msk [vmem:[#allocation2 + $0x58] sm:$0xff] %vm510, 0.0
          %522 = vst [vmem:[#allocation2 + $0x60] sm:$0xff] 0.0
          %523 = vst.msk [vmem:[#allocation2 + $0x68] sm:$0xff] %vm510, 0.0
          %524 = vst [vmem:[#allocation2 + $0x70] sm:$0xff] 0.0
          %525 = vst.msk [vmem:[#allocation2 + $0x78] sm:$0xff] %vm510, 0.0
          %526 = vst [vmem:[#allocation2 + $0x80] sm:$0xff] 0.0
          %527 = vst.msk [vmem:[#allocation2 + $0x88] sm:$0xff] %vm510, 0.0
          %528 = vst [vmem:[#allocation2 + $0x90] sm:$0xff] 0.0
          %529 = vst.msk [vmem:[#allocation2 + $0x98] sm:$0xff] %vm510, 0.0
          %530 = vst [vmem:[#allocation2 + $0xa0] sm:$0xff] 0.0
          %531 = vst.msk [vmem:[#allocation2 + $0xa8] sm:$0xff] %vm510, 0.0
          %532 = vst [vmem:[#allocation2 + $0xb0] sm:$0xff] 0.0
          %533 = vst.msk [vmem:[#allocation2 + $0xb8] sm:$0xff] %vm510, 0.0
          %534 = vst [vmem:[#allocation2 + $0xc0] sm:$0xff] 0.0
          %535 = vst.msk [vmem:[#allocation2 + $0xc8] sm:$0xff] %vm510, 0.0
          %536 = vst [vmem:[#allocation2 + $0xd0] sm:$0xff] 0.0
          %537 = vst.msk [vmem:[#allocation2 + $0xd8] sm:$0xff] %vm510, 0.0
          %538 = vst [vmem:[#allocation2 + $0xe0] sm:$0xff] 0.0
          %539 = vst.msk [vmem:[#allocation2 + $0xe8] sm:$0xff] %vm510, 0.0
          %540 = vst [vmem:[#allocation2 + $0xf0] sm:$0xff] 0.0
          %541 = vst.msk [vmem:[#allocation2 + $0xf8] sm:$0xff] %vm510, 0.0
          %542 = vst [vmem:[#allocation2 + $0x100] sm:$0xff] 0.0
          %543 = vst.msk [vmem:[#allocation2 + $0x108] sm:$0xff] %vm510, 0.0
          %544 = vst [vmem:[#allocation2 + $0x110] sm:$0xff] 0.0
          %545 = vst.msk [vmem:[#allocation2 + $0x118] sm:$0xff] %vm510, 0.0
          %546 = vst [vmem:[#allocation2 + $0x120] sm:$0xff] 0.0
          %547 = vst.msk [vmem:[#allocation2 + $0x128] sm:$0xff] %vm510, 0.0
          %548 = vst [vmem:[#allocation2 + $0x130] sm:$0xff] 0.0
          %549 = vst.msk [vmem:[#allocation2 + $0x138] sm:$0xff] %vm510, 0.0
          %550 = vst [vmem:[#allocation2 + $0x140] sm:$0xff] 0.0
          %551 = vst.msk [vmem:[#allocation2 + $0x148] sm:$0xff] %vm510, 0.0
          %552 = vst [vmem:[#allocation2 + $0x150] sm:$0xff] 0.0
          %553 = vst.msk [vmem:[#allocation2 + $0x158] sm:$0xff] %vm510, 0.0
          %554 = vst [vmem:[#allocation2 + $0x160] sm:$0xff] 0.0
          %555 = vst.msk [vmem:[#allocation2 + $0x168] sm:$0xff] %vm510, 0.0
          %556 = vst [vmem:[#allocation2 + $0x170] sm:$0xff] 0.0
          %557 = vst.msk [vmem:[#allocation2 + $0x178] sm:$0xff] %vm510, 0.0
          %558 = vst [vmem:[#allocation2 + $0x180] sm:$0xff] 0.0
          %559 = vst.msk [vmem:[#allocation2 + $0x188] sm:$0xff] %vm510, 0.0
          %560 = vst [vmem:[#allocation2 + $0x190] sm:$0xff] 0.0
          %561 = vst.msk [vmem:[#allocation2 + $0x198] sm:$0xff] %vm510, 0.0
          %562 = vst [vmem:[#allocation2 + $0x1a0] sm:$0xff] 0.0
          %563 = vst.msk [vmem:[#allocation2 + $0x1a8] sm:$0xff] %vm510, 0.0
          %564 = vst [vmem:[#allocation2 + $0x1b0] sm:$0xff] 0.0
          %565 = vst.msk [vmem:[#allocation2 + $0x1b8] sm:$0xff] %vm510, 0.0
          %566 = vst [vmem:[#allocation2 + $0x1c0] sm:$0xff] 0.0
          %567 = vst.msk [vmem:[#allocation2 + $0x1c8] sm:$0xff] %vm510, 0.0
          %568 = vst [vmem:[#allocation2 + $0x1d0] sm:$0xff] 0.0
          %569 = vst.msk [vmem:[#allocation2 + $0x1d8] sm:$0xff] %vm510, 0.0
          %570 = vst [vmem:[#allocation2 + $0x1e0] sm:$0xff] 0.0
          %571 = vst.msk [vmem:[#allocation2 + $0x1e8] sm:$0xff] %vm510, 0.0
          %572 = vst [vmem:[#allocation2 + $0x1f0] sm:$0xff] 0.0
          %573 = vst.msk [vmem:[#allocation2 + $0x1f8] sm:$0xff] %vm510, 0.0
        $region75: #{tpu_custom_call.1} parent=66 // pred_fallthru
          _
        %v574 = vld [vmem:[%s483] sm:$0xff]
        %v575 = vld [vmem:[%s483 + $0x8] sm:$0xff]
        %v576 = vld [vmem:[%s483 + $0x10] sm:$0xff]
        %v577 = vld [vmem:[%s483 + $0x18] sm:$0xff]
        %v578 = vld [vmem:[%s483 + $0x20] sm:$0xff]
        %v579 = vld [vmem:[%s483 + $0x28] sm:$0xff]
        %v580 = vld [vmem:[%s483 + $0x30] sm:$0xff]
        %v581 = vld [vmem:[%s483 + $0x38] sm:$0xff]
        %v582 = vld [vmem:[%s483 + $0x40] sm:$0xff]
        %v583 = vld [vmem:[%s483 + $0x48] sm:$0xff]
        %v584 = vld [vmem:[%s483 + $0x50] sm:$0xff]
        %v585 = vld [vmem:[%s483 + $0x58] sm:$0xff]
        %v586 = vld [vmem:[%s483 + $0x60] sm:$0xff]
        %v587 = vld [vmem:[%s483 + $0x68] sm:$0xff]
        %v588 = vld [vmem:[%s483 + $0x70] sm:$0xff]
        %v589 = vld [vmem:[%s483 + $0x78] sm:$0xff]
        %v590 = vld [vmem:[%s483 + $0x80] sm:$0xff]
        %v591 = vld [vmem:[%s483 + $0x88] sm:$0xff]
        %v592 = vld [vmem:[%s483 + $0x90] sm:$0xff]
        %v593 = vld [vmem:[%s483 + $0x98] sm:$0xff]
        %v594 = vld [vmem:[%s483 + $0xa0] sm:$0xff]
        %v595 = vld [vmem:[%s483 + $0xa8] sm:$0xff]
        %v596 = vld [vmem:[%s483 + $0xb0] sm:$0xff]
        %v597 = vld [vmem:[%s483 + $0xb8] sm:$0xff]
        %v598 = vld [vmem:[%s483 + $0xc0] sm:$0xff]
        %v599 = vld [vmem:[%s483 + $0xc8] sm:$0xff]
        %v600 = vld [vmem:[%s483 + $0xd0] sm:$0xff]
        %v601 = vld [vmem:[%s483 + $0xd8] sm:$0xff]
        %v602 = vld [vmem:[%s483 + $0xe0] sm:$0xff]
        %v603 = vld [vmem:[%s483 + $0xe8] sm:$0xff]
        %v604 = vld [vmem:[%s483 + $0xf0] sm:$0xff]
        %v605 = vld [vmem:[%s483 + $0xf8] sm:$0xff]
        %v606 = vld [vmem:[%s483 + $0x100] sm:$0xff]
        %v607 = vld [vmem:[%s483 + $0x108] sm:$0xff]
        %v608 = vld [vmem:[%s483 + $0x110] sm:$0xff]
        %v609 = vld [vmem:[%s483 + $0x118] sm:$0xff]
        %v610 = vld [vmem:[%s483 + $0x120] sm:$0xff]
        %v611 = vld [vmem:[%s483 + $0x128] sm:$0xff]
        %v612 = vld [vmem:[%s483 + $0x130] sm:$0xff]
        %v613 = vld [vmem:[%s483 + $0x138] sm:$0xff]
        %v614 = vld [vmem:[%s483 + $0x140] sm:$0xff]
        %v615 = vld [vmem:[%s483 + $0x148] sm:$0xff]
        %v616 = vld [vmem:[%s483 + $0x150] sm:$0xff]
        %v617 = vld [vmem:[%s483 + $0x158] sm:$0xff]
        %v618 = vld [vmem:[%s483 + $0x160] sm:$0xff]
        %v619 = vld [vmem:[%s483 + $0x168] sm:$0xff]
        %v620 = vld [vmem:[%s483 + $0x170] sm:$0xff]
        %v621 = vld [vmem:[%s483 + $0x178] sm:$0xff]
        %v622 = vld [vmem:[%s483 + $0x180] sm:$0xff]
        %v623 = vld [vmem:[%s483 + $0x188] sm:$0xff]
        %v624 = vld [vmem:[%s483 + $0x190] sm:$0xff]
        %v625 = vld [vmem:[%s483 + $0x198] sm:$0xff]
        %v626 = vld [vmem:[%s483 + $0x1a0] sm:$0xff]
        %v627 = vld [vmem:[%s483 + $0x1a8] sm:$0xff]
        %v628 = vld [vmem:[%s483 + $0x1b0] sm:$0xff]
        %v629 = vld [vmem:[%s483 + $0x1b8] sm:$0xff]
        %v630 = vld [vmem:[%s483 + $0x1c0] sm:$0xff]
        %v631 = vld [vmem:[%s483 + $0x1c8] sm:$0xff]
        %v632 = vld [vmem:[%s483 + $0x1d0] sm:$0xff]
        %v633 = vld [vmem:[%s483 + $0x1d8] sm:$0xff]
        %v634 = vld [vmem:[%s483 + $0x1e0] sm:$0xff]
        %v635 = vld [vmem:[%s483 + $0x1e8] sm:$0xff]
        %v636 = vld [vmem:[%s483 + $0x1f0] sm:$0xff]
        %v637 = vld [vmem:[%s483 + $0x1f8] sm:$0xff]
        %v638 = vld [vmem:[%s490] sm:$0xff]
        %v639 = vld [vmem:[%s490 + $0x8] sm:$0xff]
        %v640 = vld [vmem:[%s490 + $0x10] sm:$0xff]
        %v641 = vld [vmem:[%s490 + $0x18] sm:$0xff]
        %v642 = vld [vmem:[%s490 + $0x20] sm:$0xff]
        %v643 = vld [vmem:[%s490 + $0x28] sm:$0xff]
        %v644 = vld [vmem:[%s490 + $0x30] sm:$0xff]
        %v645 = vld [vmem:[%s490 + $0x38] sm:$0xff]
        %v646 = vld [vmem:[%s490 + $0x40] sm:$0xff]
        %v647 = vld [vmem:[%s490 + $0x48] sm:$0xff]
        %v648 = vld [vmem:[%s490 + $0x50] sm:$0xff]
        %v649 = vld [vmem:[%s490 + $0x58] sm:$0xff]
        %v650 = vld [vmem:[%s490 + $0x60] sm:$0xff]
        %v651 = vld [vmem:[%s490 + $0x68] sm:$0xff]
        %v652 = vld [vmem:[%s490 + $0x70] sm:$0xff]
        %v653 = vld [vmem:[%s490 + $0x78] sm:$0xff]
        %v654 = vld [vmem:[%s490 + $0x80] sm:$0xff]
        %v655 = vld [vmem:[%s490 + $0x88] sm:$0xff]
        %v656 = vld [vmem:[%s490 + $0x90] sm:$0xff]
        %v657 = vld [vmem:[%s490 + $0x98] sm:$0xff]
        %v658 = vld [vmem:[%s490 + $0xa0] sm:$0xff]
        %v659 = vld [vmem:[%s490 + $0xa8] sm:$0xff]
        %v660 = vld [vmem:[%s490 + $0xb0] sm:$0xff]
        %v661 = vld [vmem:[%s490 + $0xb8] sm:$0xff]
        %v662 = vld [vmem:[%s490 + $0xc0] sm:$0xff]
        %v663 = vld [vmem:[%s490 + $0xc8] sm:$0xff]
        %v664 = vld [vmem:[%s490 + $0xd0] sm:$0xff]
        %v665 = vld [vmem:[%s490 + $0xd8] sm:$0xff]
        %v666 = vld [vmem:[%s490 + $0xe0] sm:$0xff]
        %v667 = vld [vmem:[%s490 + $0xe8] sm:$0xff]
        %v668 = vld [vmem:[%s490 + $0xf0] sm:$0xff]
        %v669 = vld [vmem:[%s490 + $0xf8] sm:$0xff]
        %v670 = vld [vmem:[%s490 + $0x100] sm:$0xff]
        %v671 = vld [vmem:[%s490 + $0x108] sm:$0xff]
        %v672 = vld [vmem:[%s490 + $0x110] sm:$0xff]
        %v673 = vld [vmem:[%s490 + $0x118] sm:$0xff]
        %v674 = vld [vmem:[%s490 + $0x120] sm:$0xff]
        %v675 = vld [vmem:[%s490 + $0x128] sm:$0xff]
        %v676 = vld [vmem:[%s490 + $0x130] sm:$0xff]
        %v677 = vld [vmem:[%s490 + $0x138] sm:$0xff]
        %v678 = vld [vmem:[%s490 + $0x140] sm:$0xff]
        %v679 = vld [vmem:[%s490 + $0x148] sm:$0xff]
        %v680 = vld [vmem:[%s490 + $0x150] sm:$0xff]
        %v681 = vld [vmem:[%s490 + $0x158] sm:$0xff]
        %v682 = vld [vmem:[%s490 + $0x160] sm:$0xff]
        %v683 = vld [vmem:[%s490 + $0x168] sm:$0xff]
        %v684 = vld [vmem:[%s490 + $0x170] sm:$0xff]
        %v685 = vld [vmem:[%s490 + $0x178] sm:$0xff]
        %v686 = vld [vmem:[%s490 + $0x180] sm:$0xff]
        %v687 = vld [vmem:[%s490 + $0x188] sm:$0xff]
        %v688 = vld [vmem:[%s490 + $0x190] sm:$0xff]
        %v689 = vld [vmem:[%s490 + $0x198] sm:$0xff]
        %v690 = vld [vmem:[%s490 + $0x1a0] sm:$0xff]
        %v691 = vld [vmem:[%s490 + $0x1a8] sm:$0xff]
        %v692 = vld [vmem:[%s490 + $0x1b0] sm:$0xff]
        %v693 = vld [vmem:[%s490 + $0x1b8] sm:$0xff]
        %v694 = vld [vmem:[%s490 + $0x1c0] sm:$0xff]
        %v695 = vld [vmem:[%s490 + $0x1c8] sm:$0xff]
        %v696 = vld [vmem:[%s490 + $0x1d0] sm:$0xff]
        %v697 = vld [vmem:[%s490 + $0x1d8] sm:$0xff]
        %v698 = vld [vmem:[%s490 + $0x1e0] sm:$0xff]
        %v699 = vld [vmem:[%s490 + $0x1e8] sm:$0xff]
        %v700 = vld [vmem:[%s490 + $0x1f0] sm:$0xff]
        %v701 = vld [vmem:[%s490 + $0x1f8] sm:$0xff]
        %vm702 = vcmask 556032
        %v703 = vsel %vm702, %v575, 0.0
        %v704 = vadd.f32 %v574, %v703
        %705 = vadd.xlane.f32.xlu0 %v704
        %v706 = vpop.xlane.xlu0 %705
        %v707 = vsel %vm702, %v577, 0.0
        %v708 = vadd.f32 %v576, %v707
        %709 = vadd.xlane.f32.xlu0 %v708
        %v710 = vpop.xlane.xlu0 %709
        %v711 = vsel %vm702, %v579, 0.0
        %v712 = vadd.f32 %v578, %v711
        %713 = vadd.xlane.f32.xlu0 %v712
        %v714 = vpop.xlane.xlu0 %713
        %v715 = vsel %vm702, %v581, 0.0
        %v716 = vadd.f32 %v580, %v715
        %717 = vadd.xlane.f32.xlu0 %v716
        %v718 = vpop.xlane.xlu0 %717
        %v719 = vsel %vm702, %v583, 0.0
        %v720 = vadd.f32 %v582, %v719
        %721 = vadd.xlane.f32.xlu0 %v720
        %v722 = vpop.xlane.xlu0 %721
        %v723 = vsel %vm702, %v585, 0.0
        %v724 = vadd.f32 %v584, %v723
        %725 = vadd.xlane.f32.xlu0 %v724
        %v726 = vpop.xlane.xlu0 %725
        %v727 = vsel %vm702, %v587, 0.0
        %v728 = vadd.f32 %v586, %v727
        %729 = vadd.xlane.f32.xlu0 %v728
        %v730 = vpop.xlane.xlu0 %729
        %v731 = vsel %vm702, %v589, 0.0
        %v732 = vadd.f32 %v588, %v731
        %733 = vadd.xlane.f32.xlu0 %v732
        %v734 = vpop.xlane.xlu0 %733
        %v735 = vsel %vm702, %v591, 0.0
        %v736 = vadd.f32 %v590, %v735
        %737 = vadd.xlane.f32.xlu0 %v736
        %v738 = vpop.xlane.xlu0 %737
        %v739 = vsel %vm702, %v593, 0.0
        %v740 = vadd.f32 %v592, %v739
        %741 = vadd.xlane.f32.xlu0 %v740
        %v742 = vpop.xlane.xlu0 %741
        %v743 = vsel %vm702, %v595, 0.0
        %v744 = vadd.f32 %v594, %v743
        %745 = vadd.xlane.f32.xlu0 %v744
        %v746 = vpop.xlane.xlu0 %745
        %v747 = vsel %vm702, %v597, 0.0
        %v748 = vadd.f32 %v596, %v747
        %749 = vadd.xlane.f32.xlu0 %v748
        %v750 = vpop.xlane.xlu0 %749
        %v751 = vsel %vm702, %v599, 0.0
        %v752 = vadd.f32 %v598, %v751
        %753 = vadd.xlane.f32.xlu0 %v752
        %v754 = vpop.xlane.xlu0 %753
        %v755 = vsel %vm702, %v601, 0.0
        %v756 = vadd.f32 %v600, %v755
        %757 = vadd.xlane.f32.xlu0 %v756
        %v758 = vpop.xlane.xlu0 %757
        %v759 = vsel %vm702, %v603, 0.0
        %v760 = vadd.f32 %v602, %v759
        %761 = vadd.xlane.f32.xlu0 %v760
        %v762 = vpop.xlane.xlu0 %761
        %v763 = vsel %vm702, %v605, 0.0
        %v764 = vadd.f32 %v604, %v763
        %765 = vadd.xlane.f32.xlu0 %v764
        %v766 = vpop.xlane.xlu0 %765
        %v767 = vsel %vm702, %v607, 0.0
        %v768 = vadd.f32 %v606, %v767
        %769 = vadd.xlane.f32.xlu0 %v768
        %v770 = vpop.xlane.xlu0 %769
        %v771 = vsel %vm702, %v609, 0.0
        %v772 = vadd.f32 %v608, %v771
        %773 = vadd.xlane.f32.xlu0 %v772
        %v774 = vpop.xlane.xlu0 %773
        %v775 = vsel %vm702, %v611, 0.0
        %v776 = vadd.f32 %v610, %v775
        %777 = vadd.xlane.f32.xlu0 %v776
        %v778 = vpop.xlane.xlu0 %777
        %v779 = vsel %vm702, %v613, 0.0
        %v780 = vadd.f32 %v612, %v779
        %781 = vadd.xlane.f32.xlu0 %v780
        %v782 = vpop.xlane.xlu0 %781
        %v783 = vsel %vm702, %v615, 0.0
        %v784 = vadd.f32 %v614, %v783
        %785 = vadd.xlane.f32.xlu0 %v784
        %v786 = vpop.xlane.xlu0 %785
        %v787 = vsel %vm702, %v617, 0.0
        %v788 = vadd.f32 %v616, %v787
        %789 = vadd.xlane.f32.xlu0 %v788
        %v790 = vpop.xlane.xlu0 %789
        %v791 = vsel %vm702, %v619, 0.0
        %v792 = vadd.f32 %v618, %v791
        %793 = vadd.xlane.f32.xlu0 %v792
        %v794 = vpop.xlane.xlu0 %793
        %v795 = vsel %vm702, %v621, 0.0
        %v796 = vadd.f32 %v620, %v795
        %797 = vadd.xlane.f32.xlu0 %v796
        %v798 = vpop.xlane.xlu0 %797
        %v799 = vsel %vm702, %v623, 0.0
        %v800 = vadd.f32 %v622, %v799
        %801 = vadd.xlane.f32.xlu0 %v800
        %v802 = vpop.xlane.xlu0 %801
        %v803 = vsel %vm702, %v625, 0.0
        %v804 = vadd.f32 %v624, %v803
        %805 = vadd.xlane.f32.xlu0 %v804
        %v806 = vpop.xlane.xlu0 %805
        %v807 = vsel %vm702, %v627, 0.0
        %v808 = vadd.f32 %v626, %v807
        %809 = vadd.xlane.f32.xlu0 %v808
        %v810 = vpop.xlane.xlu0 %809
        %v811 = vsel %vm702, %v629, 0.0
        %v812 = vadd.f32 %v628, %v811
        %813 = vadd.xlane.f32.xlu0 %v812
        %v814 = vpop.xlane.xlu0 %813
        %v815 = vsel %vm702, %v631, 0.0
        %v816 = vadd.f32 %v630, %v815
        %817 = vadd.xlane.f32.xlu0 %v816
        %v818 = vpop.xlane.xlu0 %817
        %v819 = vsel %vm702, %v633, 0.0
        %v820 = vadd.f32 %v632, %v819
        %821 = vadd.xlane.f32.xlu0 %v820
        %v822 = vpop.xlane.xlu0 %821
        %v823 = vsel %vm702, %v635, 0.0
        %v824 = vadd.f32 %v634, %v823
        %825 = vadd.xlane.f32.xlu0 %v824
        %v826 = vpop.xlane.xlu0 %825
        %v827 = vsel %vm702, %v637, 0.0
        %v828 = vadd.f32 %v636, %v827
        %829 = vadd.xlane.f32.xlu0 %v828
        %v830 = vpop.xlane.xlu0 %829
        %v831 = vrcp.pop 196.0
        %v832 = vmul.f32 %v706, %v831
        %v833 = vmul.f32 %v710, %v831
        %v834 = vmul.f32 %v714, %v831
        %v835 = vmul.f32 %v718, %v831
        %v836 = vmul.f32 %v722, %v831
        %v837 = vmul.f32 %v726, %v831
        %v838 = vmul.f32 %v730, %v831
        %v839 = vmul.f32 %v734, %v831
        %v840 = vmul.f32 %v738, %v831
        %v841 = vmul.f32 %v742, %v831
        %v842 = vmul.f32 %v746, %v831
        %v843 = vmul.f32 %v750, %v831
        %v844 = vmul.f32 %v754, %v831
        %v845 = vmul.f32 %v758, %v831
        %v846 = vmul.f32 %v762, %v831
        %v847 = vmul.f32 %v766, %v831
        %v848 = vmul.f32 %v770, %v831
        %v849 = vmul.f32 %v774, %v831
        %v850 = vmul.f32 %v778, %v831
        %v851 = vmul.f32 %v782, %v831
        %v852 = vmul.f32 %v786, %v831
        %v853 = vmul.f32 %v790, %v831
        %v854 = vmul.f32 %v794, %v831
        %v855 = vmul.f32 %v798, %v831
        %v856 = vmul.f32 %v802, %v831
        %v857 = vmul.f32 %v806, %v831
        %v858 = vmul.f32 %v810, %v831
        %v859 = vmul.f32 %v814, %v831
        %v860 = vmul.f32 %v818, %v831
        %v861 = vmul.f32 %v822, %v831
        %v862 = vmul.f32 %v826, %v831
        %v863 = vmul.f32 %v830, %v831
        %v864 = vmul.f32 %v574, %v574
        %v865 = vmul.f32 %v575, %v575
        %v866 = vmul.f32 %v576, %v576
        %v867 = vmul.f32 %v577, %v577
        %v868 = vmul.f32 %v578, %v578
        %v869 = vmul.f32 %v579, %v579
        %v870 = vmul.f32 %v580, %v580
        %v871 = vmul.f32 %v581, %v581
        %v872 = vmul.f32 %v582, %v582
        %v873 = vmul.f32 %v583, %v583
        %v874 = vmul.f32 %v584, %v584
        %v875 = vmul.f32 %v585, %v585
        %v876 = vmul.f32 %v586, %v586
        %v877 = vmul.f32 %v587, %v587
        %v878 = vmul.f32 %v588, %v588
        %v879 = vmul.f32 %v589, %v589
        %v880 = vmul.f32 %v590, %v590
        %v881 = vmul.f32 %v591, %v591
        %v882 = vmul.f32 %v592, %v592
        %v883 = vmul.f32 %v593, %v593
        %v884 = vmul.f32 %v594, %v594
        %v885 = vmul.f32 %v595, %v595
        %v886 = vmul.f32 %v596, %v596
        %v887 = vmul.f32 %v597, %v597
        %v888 = vmul.f32 %v598, %v598
        %v889 = vmul.f32 %v599, %v599
        %v890 = vmul.f32 %v600, %v600
        %v891 = vmul.f32 %v601, %v601
        %v892 = vmul.f32 %v602, %v602
        %v893 = vmul.f32 %v603, %v603
        %v894 = vmul.f32 %v604, %v604
        %v895 = vmul.f32 %v605, %v605
        %v896 = vmul.f32 %v606, %v606
        %v897 = vmul.f32 %v607, %v607
        %v898 = vmul.f32 %v608, %v608
        %v899 = vmul.f32 %v609, %v609
        %v900 = vmul.f32 %v610, %v610
        %v901 = vmul.f32 %v611, %v611
        %v902 = vmul.f32 %v612, %v612
        %v903 = vmul.f32 %v613, %v613
        %v904 = vmul.f32 %v614, %v614
        %v905 = vmul.f32 %v615, %v615
        %v906 = vmul.f32 %v616, %v616
        %v907 = vmul.f32 %v617, %v617
        %v908 = vmul.f32 %v618, %v618
        %v909 = vmul.f32 %v619, %v619
        %v910 = vmul.f32 %v620, %v620
        %v911 = vmul.f32 %v621, %v621
        %v912 = vmul.f32 %v622, %v622
        %v913 = vmul.f32 %v623, %v623
        %v914 = vmul.f32 %v624, %v624
        %v915 = vmul.f32 %v625, %v625
        %v916 = vmul.f32 %v626, %v626
        %v917 = vmul.f32 %v627, %v627
        %v918 = vmul.f32 %v628, %v628
        %v919 = vmul.f32 %v629, %v629
        %v920 = vmul.f32 %v630, %v630
        %v921 = vmul.f32 %v631, %v631
        %v922 = vmul.f32 %v632, %v632
        %v923 = vmul.f32 %v633, %v633
        %v924 = vmul.f32 %v634, %v634
        %v925 = vmul.f32 %v635, %v635
        %v926 = vmul.f32 %v636, %v636
        %v927 = vmul.f32 %v637, %v637
        %v928 = vsel %vm702, %v865, 0.0
        %v929 = vadd.f32 %v864, %v928
        %930 = vadd.xlane.f32.xlu0 %v929
        %v931 = vpop.xlane.xlu0 %930
        %v932 = vsel %vm702, %v867, 0.0
        %v933 = vadd.f32 %v866, %v932
        %934 = vadd.xlane.f32.xlu0 %v933
        %v935 = vpop.xlane.xlu0 %934
        %v936 = vsel %vm702, %v869, 0.0
        %v937 = vadd.f32 %v868, %v936
        %938 = vadd.xlane.f32.xlu0 %v937
        %v939 = vpop.xlane.xlu0 %938
        %v940 = vsel %vm702, %v871, 0.0
        %v941 = vadd.f32 %v870, %v940
        %942 = vadd.xlane.f32.xlu0 %v941
        %v943 = vpop.xlane.xlu0 %942
        %v944 = vsel %vm702, %v873, 0.0
        %v945 = vadd.f32 %v872, %v944
        %946 = vadd.xlane.f32.xlu0 %v945
        %v947 = vpop.xlane.xlu0 %946
        %v948 = vsel %vm702, %v875, 0.0
        %v949 = vadd.f32 %v874, %v948
        %950 = vadd.xlane.f32.xlu0 %v949
        %v951 = vpop.xlane.xlu0 %950
        %v952 = vsel %vm702, %v877, 0.0
        %v953 = vadd.f32 %v876, %v952
        %954 = vadd.xlane.f32.xlu0 %v953
        %v955 = vpop.xlane.xlu0 %954
        %v956 = vsel %vm702, %v879, 0.0
        %v957 = vadd.f32 %v878, %v956
        %958 = vadd.xlane.f32.xlu0 %v957
        %v959 = vpop.xlane.xlu0 %958
        %v960 = vsel %vm702, %v881, 0.0
        %v961 = vadd.f32 %v880, %v960
        %962 = vadd.xlane.f32.xlu0 %v961
        %v963 = vpop.xlane.xlu0 %962
        %v964 = vsel %vm702, %v883, 0.0
        %v965 = vadd.f32 %v882, %v964
        %966 = vadd.xlane.f32.xlu0 %v965
        %v967 = vpop.xlane.xlu0 %966
        %v968 = vsel %vm702, %v885, 0.0
        %v969 = vadd.f32 %v884, %v968
        %970 = vadd.xlane.f32.xlu0 %v969
        %v971 = vpop.xlane.xlu0 %970
        %v972 = vsel %vm702, %v887, 0.0
        %v973 = vadd.f32 %v886, %v972
        %974 = vadd.xlane.f32.xlu0 %v973
        %v975 = vpop.xlane.xlu0 %974
        %v976 = vsel %vm702, %v889, 0.0
        %v977 = vadd.f32 %v888, %v976
        %978 = vadd.xlane.f32.xlu0 %v977
        %v979 = vpop.xlane.xlu0 %978
        %v980 = vsel %vm702, %v891, 0.0
        %v981 = vadd.f32 %v890, %v980
        %982 = vadd.xlane.f32.xlu0 %v981
        %v983 = vpop.xlane.xlu0 %982
        %v984 = vsel %vm702, %v893, 0.0
        %v985 = vadd.f32 %v892, %v984
        %986 = vadd.xlane.f32.xlu0 %v985
        %v987 = vpop.xlane.xlu0 %986
        %v988 = vsel %vm702, %v895, 0.0
        %v989 = vadd.f32 %v894, %v988
        %990 = vadd.xlane.f32.xlu0 %v989
        %v991 = vpop.xlane.xlu0 %990
        %v992 = vsel %vm702, %v897, 0.0
        %v993 = vadd.f32 %v896, %v992
        %994 = vadd.xlane.f32.xlu0 %v993
        %v995 = vpop.xlane.xlu0 %994
        %v996 = vsel %vm702, %v899, 0.0
        %v997 = vadd.f32 %v898, %v996
        %998 = vadd.xlane.f32.xlu0 %v997
        %v999 = vpop.xlane.xlu0 %998
        %v1000 = vsel %vm702, %v901, 0.0
        %v1001 = vadd.f32 %v900, %v1000
        %1002 = vadd.xlane.f32.xlu0 %v1001
        %v1003 = vpop.xlane.xlu0 %1002
        %v1004 = vsel %vm702, %v903, 0.0
        %v1005 = vadd.f32 %v902, %v1004
        %1006 = vadd.xlane.f32.xlu0 %v1005
        %v1007 = vpop.xlane.xlu0 %1006
        %v1008 = vsel %vm702, %v905, 0.0
        %v1009 = vadd.f32 %v904, %v1008
        %1010 = vadd.xlane.f32.xlu0 %v1009
        %v1011 = vpop.xlane.xlu0 %1010
        %v1012 = vsel %vm702, %v907, 0.0
        %v1013 = vadd.f32 %v906, %v1012
        %1014 = vadd.xlane.f32.xlu0 %v1013
        %v1015 = vpop.xlane.xlu0 %1014
        %v1016 = vsel %vm702, %v909, 0.0
        %v1017 = vadd.f32 %v908, %v1016
        %1018 = vadd.xlane.f32.xlu0 %v1017
        %v1019 = vpop.xlane.xlu0 %1018
        %v1020 = vsel %vm702, %v911, 0.0
        %v1021 = vadd.f32 %v910, %v1020
        %1022 = vadd.xlane.f32.xlu0 %v1021
        %v1023 = vpop.xlane.xlu0 %1022
        %v1024 = vsel %vm702, %v913, 0.0
        %v1025 = vadd.f32 %v912, %v1024
        %1026 = vadd.xlane.f32.xlu0 %v1025
        %v1027 = vpop.xlane.xlu0 %1026
        %v1028 = vsel %vm702, %v915, 0.0
        %v1029 = vadd.f32 %v914, %v1028
        %1030 = vadd.xlane.f32.xlu0 %v1029
        %v1031 = vpop.xlane.xlu0 %1030
        %v1032 = vsel %vm702, %v917, 0.0
        %v1033 = vadd.f32 %v916, %v1032
        %1034 = vadd.xlane.f32.xlu0 %v1033
        %v1035 = vpop.xlane.xlu0 %1034
        %v1036 = vsel %vm702, %v919, 0.0
        %v1037 = vadd.f32 %v918, %v1036
        %1038 = vadd.xlane.f32.xlu0 %v1037
        %v1039 = vpop.xlane.xlu0 %1038
        %v1040 = vsel %vm702, %v921, 0.0
        %v1041 = vadd.f32 %v920, %v1040
        %1042 = vadd.xlane.f32.xlu0 %v1041
        %v1043 = vpop.xlane.xlu0 %1042
        %v1044 = vsel %vm702, %v923, 0.0
        %v1045 = vadd.f32 %v922, %v1044
        %1046 = vadd.xlane.f32.xlu0 %v1045
        %v1047 = vpop.xlane.xlu0 %1046
        %v1048 = vsel %vm702, %v925, 0.0
        %v1049 = vadd.f32 %v924, %v1048
        %1050 = vadd.xlane.f32.xlu0 %v1049
        %v1051 = vpop.xlane.xlu0 %1050
        %v1052 = vsel %vm702, %v927, 0.0
        %v1053 = vadd.f32 %v926, %v1052
        %1054 = vadd.xlane.f32.xlu0 %v1053
        %v1055 = vpop.xlane.xlu0 %1054
        %v1056 = vmul.f32 %v931, %v831
        %v1057 = vmul.f32 %v935, %v831
        %v1058 = vmul.f32 %v939, %v831
        %v1059 = vmul.f32 %v943, %v831
        %v1060 = vmul.f32 %v947, %v831
        %v1061 = vmul.f32 %v951, %v831
        %v1062 = vmul.f32 %v955, %v831
        %v1063 = vmul.f32 %v959, %v831
        %v1064 = vmul.f32 %v963, %v831
        %v1065 = vmul.f32 %v967, %v831
        %v1066 = vmul.f32 %v971, %v831
        %v1067 = vmul.f32 %v975, %v831
        %v1068 = vmul.f32 %v979, %v831
        %v1069 = vmul.f32 %v983, %v831
        %v1070 = vmul.f32 %v987, %v831
        %v1071 = vmul.f32 %v991, %v831
        %v1072 = vmul.f32 %v995, %v831
        %v1073 = vmul.f32 %v999, %v831
        %v1074 = vmul.f32 %v1003, %v831
        %v1075 = vmul.f32 %v1007, %v831
        %v1076 = vmul.f32 %v1011, %v831
        %v1077 = vmul.f32 %v1015, %v831
        %v1078 = vmul.f32 %v1019, %v831
        %v1079 = vmul.f32 %v1023, %v831
        %v1080 = vmul.f32 %v1027, %v831
        %v1081 = vmul.f32 %v1031, %v831
        %v1082 = vmul.f32 %v1035, %v831
        %v1083 = vmul.f32 %v1039, %v831
        %v1084 = vmul.f32 %v1043, %v831
        %v1085 = vmul.f32 %v1047, %v831
        %v1086 = vmul.f32 %v1051, %v831
        %v1087 = vmul.f32 %v1055, %v831
        %v1088 = vmul.f32 %v832, %v832
        %v1089 = vmul.f32 %v833, %v833
        %v1090 = vmul.f32 %v834, %v834
        %v1091 = vmul.f32 %v835, %v835
        %v1092 = vmul.f32 %v836, %v836
        %v1093 = vmul.f32 %v837, %v837
        %v1094 = vmul.f32 %v838, %v838
        %v1095 = vmul.f32 %v839, %v839
        %v1096 = vmul.f32 %v840, %v840
        %v1097 = vmul.f32 %v841, %v841
        %v1098 = vmul.f32 %v842, %v842
        %v1099 = vmul.f32 %v843, %v843
        %v1100 = vmul.f32 %v844, %v844
        %v1101 = vmul.f32 %v845, %v845
        %v1102 = vmul.f32 %v846, %v846
        %v1103 = vmul.f32 %v847, %v847
        %v1104 = vmul.f32 %v848, %v848
        %v1105 = vmul.f32 %v849, %v849
        %v1106 = vmul.f32 %v850, %v850
        %v1107 = vmul.f32 %v851, %v851
        %v1108 = vmul.f32 %v852, %v852
        %v1109 = vmul.f32 %v853, %v853
        %v1110 = vmul.f32 %v854, %v854
        %v1111 = vmul.f32 %v855, %v855
        %v1112 = vmul.f32 %v856, %v856
        %v1113 = vmul.f32 %v857, %v857
        %v1114 = vmul.f32 %v858, %v858
        %v1115 = vmul.f32 %v859, %v859
        %v1116 = vmul.f32 %v860, %v860
        %v1117 = vmul.f32 %v861, %v861
        %v1118 = vmul.f32 %v862, %v862
        %v1119 = vmul.f32 %v863, %v863
        %v1120 = vsub.f32 %v1056, %v1088
        %v1121 = vsub.f32 %v1057, %v1089
        %v1122 = vsub.f32 %v1058, %v1090
        %v1123 = vsub.f32 %v1059, %v1091
        %v1124 = vsub.f32 %v1060, %v1092
        %v1125 = vsub.f32 %v1061, %v1093
        %v1126 = vsub.f32 %v1062, %v1094
        %v1127 = vsub.f32 %v1063, %v1095
        %v1128 = vsub.f32 %v1064, %v1096
        %v1129 = vsub.f32 %v1065, %v1097
        %v1130 = vsub.f32 %v1066, %v1098
        %v1131 = vsub.f32 %v1067, %v1099
        %v1132 = vsub.f32 %v1068, %v1100
        %v1133 = vsub.f32 %v1069, %v1101
        %v1134 = vsub.f32 %v1070, %v1102
        %v1135 = vsub.f32 %v1071, %v1103
        %v1136 = vsub.f32 %v1072, %v1104
        %v1137 = vsub.f32 %v1073, %v1105
        %v1138 = vsub.f32 %v1074, %v1106
        %v1139 = vsub.f32 %v1075, %v1107
        %v1140 = vsub.f32 %v1076, %v1108
        %v1141 = vsub.f32 %v1077, %v1109
        %v1142 = vsub.f32 %v1078, %v1110
        %v1143 = vsub.f32 %v1079, %v1111
        %v1144 = vsub.f32 %v1080, %v1112
        %v1145 = vsub.f32 %v1081, %v1113
        %v1146 = vsub.f32 %v1082, %v1114
        %v1147 = vsub.f32 %v1083, %v1115
        %v1148 = vsub.f32 %v1084, %v1116
        %v1149 = vsub.f32 %v1085, %v1117
        %v1150 = vsub.f32 %v1086, %v1118
        %v1151 = vsub.f32 %v1087, %v1119
        %v1152 = vld [vmem:[%s496] sm:$0xff]
        %v1153 = vld [vmem:[%s496 + $0x8] sm:$0xff]
        %v1154 = vld [vmem:[%s496 + $0x10] sm:$0xff]
        %v1155 = vld [vmem:[%s496 + $0x18] sm:$0xff]
        %v1156 = vld [vmem:[%s496 + $0x20] sm:$0xff]
        %v1157 = vld [vmem:[%s496 + $0x28] sm:$0xff]
        %v1158 = vld [vmem:[%s496 + $0x30] sm:$0xff]
        %v1159 = vld [vmem:[%s496 + $0x38] sm:$0xff]
        %v1160 = vld [vmem:[%s496 + $0x40] sm:$0xff]
        %v1161 = vld [vmem:[%s496 + $0x48] sm:$0xff]
        %v1162 = vld [vmem:[%s496 + $0x50] sm:$0xff]
        %v1163 = vld [vmem:[%s496 + $0x58] sm:$0xff]
        %v1164 = vld [vmem:[%s496 + $0x60] sm:$0xff]
        %v1165 = vld [vmem:[%s496 + $0x68] sm:$0xff]
        %v1166 = vld [vmem:[%s496 + $0x70] sm:$0xff]
        %v1167 = vld [vmem:[%s496 + $0x78] sm:$0xff]
        %v1168 = vld [vmem:[%s496 + $0x80] sm:$0xff]
        %v1169 = vld [vmem:[%s496 + $0x88] sm:$0xff]
        %v1170 = vld [vmem:[%s496 + $0x90] sm:$0xff]
        %v1171 = vld [vmem:[%s496 + $0x98] sm:$0xff]
        %v1172 = vld [vmem:[%s496 + $0xa0] sm:$0xff]
        %v1173 = vld [vmem:[%s496 + $0xa8] sm:$0xff]
        %v1174 = vld [vmem:[%s496 + $0xb0] sm:$0xff]
        %v1175 = vld [vmem:[%s496 + $0xb8] sm:$0xff]
        %v1176 = vld [vmem:[%s496 + $0xc0] sm:$0xff]
        %v1177 = vld [vmem:[%s496 + $0xc8] sm:$0xff]
        %v1178 = vld [vmem:[%s496 + $0xd0] sm:$0xff]
        %v1179 = vld [vmem:[%s496 + $0xd8] sm:$0xff]
        %v1180 = vld [vmem:[%s496 + $0xe0] sm:$0xff]
        %v1181 = vld [vmem:[%s496 + $0xe8] sm:$0xff]
        %v1182 = vld [vmem:[%s496 + $0xf0] sm:$0xff]
        %v1183 = vld [vmem:[%s496 + $0xf8] sm:$0xff]
        %v1184 = vadd.f32 %v1120, 1e-05
        %v1185 = vadd.f32 %v1121, 1e-05
        %v1186 = vadd.f32 %v1122, 1e-05
        %v1187 = vadd.f32 %v1123, 1e-05
        %v1188 = vadd.f32 %v1124, 1e-05
        %v1189 = vadd.f32 %v1125, 1e-05
        %v1190 = vadd.f32 %v1126, 1e-05
        %v1191 = vadd.f32 %v1127, 1e-05
        %v1192 = vadd.f32 %v1128, 1e-05
        %v1193 = vadd.f32 %v1129, 1e-05
        %v1194 = vadd.f32 %v1130, 1e-05
        %v1195 = vadd.f32 %v1131, 1e-05
        %v1196 = vadd.f32 %v1132, 1e-05
        %v1197 = vadd.f32 %v1133, 1e-05
        %v1198 = vadd.f32 %v1134, 1e-05
        %v1199 = vadd.f32 %v1135, 1e-05
        %v1200 = vadd.f32 %v1136, 1e-05
        %v1201 = vadd.f32 %v1137, 1e-05
        %v1202 = vadd.f32 %v1138, 1e-05
        %v1203 = vadd.f32 %v1139, 1e-05
        %v1204 = vadd.f32 %v1140, 1e-05
        %v1205 = vadd.f32 %v1141, 1e-05
        %v1206 = vadd.f32 %v1142, 1e-05
        %v1207 = vadd.f32 %v1143, 1e-05
        %v1208 = vadd.f32 %v1144, 1e-05
        %v1209 = vadd.f32 %v1145, 1e-05
        %v1210 = vadd.f32 %v1146, 1e-05
        %v1211 = vadd.f32 %v1147, 1e-05
        %v1212 = vadd.f32 %v1148, 1e-05
        %v1213 = vadd.f32 %v1149, 1e-05
        %v1214 = vadd.f32 %v1150, 1e-05
        %v1215 = vadd.f32 %v1151, 1e-05
        %v1216 = vrsqrt.pop %v1184
        %v1217 = vrsqrt.pop %v1185
        %v1218 = vrsqrt.pop %v1186
        %v1219 = vrsqrt.pop %v1187
        %v1220 = vrsqrt.pop %v1188
        %v1221 = vrsqrt.pop %v1189
        %v1222 = vrsqrt.pop %v1190
        %v1223 = vrsqrt.pop %v1191
        %v1224 = vrsqrt.pop %v1192
        %v1225 = vrsqrt.pop %v1193
        %v1226 = vrsqrt.pop %v1194
        %v1227 = vrsqrt.pop %v1195
        %v1228 = vrsqrt.pop %v1196
        %v1229 = vrsqrt.pop %v1197
        %v1230 = vrsqrt.pop %v1198
        %v1231 = vrsqrt.pop %v1199
        %v1232 = vrsqrt.pop %v1200
        %v1233 = vrsqrt.pop %v1201
        %v1234 = vrsqrt.pop %v1202
        %v1235 = vrsqrt.pop %v1203
        %v1236 = vrsqrt.pop %v1204
        %v1237 = vrsqrt.pop %v1205
        %v1238 = vrsqrt.pop %v1206
        %v1239 = vrsqrt.pop %v1207
        %v1240 = vrsqrt.pop %v1208
        %v1241 = vrsqrt.pop %v1209
        %v1242 = vrsqrt.pop %v1210
        %v1243 = vrsqrt.pop %v1211
        %v1244 = vrsqrt.pop %v1212
        %v1245 = vrsqrt.pop %v1213
        %v1246 = vrsqrt.pop %v1214
        %v1247 = vrsqrt.pop %v1215
        %v1248 = vmul.f32 %v1152, %v1216
        %v1249 = vmul.f32 %v1153, %v1217
        %v1250 = vmul.f32 %v1154, %v1218
        %v1251 = vmul.f32 %v1155, %v1219
        %v1252 = vmul.f32 %v1156, %v1220
        %v1253 = vmul.f32 %v1157, %v1221
        %v1254 = vmul.f32 %v1158, %v1222
        %v1255 = vmul.f32 %v1159, %v1223
        %v1256 = vmul.f32 %v1160, %v1224
        %v1257 = vmul.f32 %v1161, %v1225
        %v1258 = vmul.f32 %v1162, %v1226
        %v1259 = vmul.f32 %v1163, %v1227
        %v1260 = vmul.f32 %v1164, %v1228
        %v1261 = vmul.f32 %v1165, %v1229
        %v1262 = vmul.f32 %v1166, %v1230
        %v1263 = vmul.f32 %v1167, %v1231
        %v1264 = vmul.f32 %v1168, %v1232
        %v1265 = vmul.f32 %v1169, %v1233
        %v1266 = vmul.f32 %v1170, %v1234
        %v1267 = vmul.f32 %v1171, %v1235
        %v1268 = vmul.f32 %v1172, %v1236
        %v1269 = vmul.f32 %v1173, %v1237
        %v1270 = vmul.f32 %v1174, %v1238
        %v1271 = vmul.f32 %v1175, %v1239
        %v1272 = vmul.f32 %v1176, %v1240
        %v1273 = vmul.f32 %v1177, %v1241
        %v1274 = vmul.f32 %v1178, %v1242
        %v1275 = vmul.f32 %v1179, %v1243
        %v1276 = vmul.f32 %v1180, %v1244
        %v1277 = vmul.f32 %v1181, %v1245
        %v1278 = vmul.f32 %v1182, %v1246
        %v1279 = vmul.f32 %v1183, %v1247
        %v1280 = vld [vmem:[%s502] sm:$0xff]
        %v1281 = vld [vmem:[%s502 + $0x8] sm:$0xff]
        %v1282 = vld [vmem:[%s502 + $0x10] sm:$0xff]
        %v1283 = vld [vmem:[%s502 + $0x18] sm:$0xff]
        %v1284 = vld [vmem:[%s502 + $0x20] sm:$0xff]
        %v1285 = vld [vmem:[%s502 + $0x28] sm:$0xff]
        %v1286 = vld [vmem:[%s502 + $0x30] sm:$0xff]
        %v1287 = vld [vmem:[%s502 + $0x38] sm:$0xff]
        %v1288 = vld [vmem:[%s502 + $0x40] sm:$0xff]
        %v1289 = vld [vmem:[%s502 + $0x48] sm:$0xff]
        %v1290 = vld [vmem:[%s502 + $0x50] sm:$0xff]
        %v1291 = vld [vmem:[%s502 + $0x58] sm:$0xff]
        %v1292 = vld [vmem:[%s502 + $0x60] sm:$0xff]
        %v1293 = vld [vmem:[%s502 + $0x68] sm:$0xff]
        %v1294 = vld [vmem:[%s502 + $0x70] sm:$0xff]
        %v1295 = vld [vmem:[%s502 + $0x78] sm:$0xff]
        %v1296 = vld [vmem:[%s502 + $0x80] sm:$0xff]
        %v1297 = vld [vmem:[%s502 + $0x88] sm:$0xff]
        %v1298 = vld [vmem:[%s502 + $0x90] sm:$0xff]
        %v1299 = vld [vmem:[%s502 + $0x98] sm:$0xff]
        %v1300 = vld [vmem:[%s502 + $0xa0] sm:$0xff]
        %v1301 = vld [vmem:[%s502 + $0xa8] sm:$0xff]
        %v1302 = vld [vmem:[%s502 + $0xb0] sm:$0xff]
        %v1303 = vld [vmem:[%s502 + $0xb8] sm:$0xff]
        %v1304 = vld [vmem:[%s502 + $0xc0] sm:$0xff]
        %v1305 = vld [vmem:[%s502 + $0xc8] sm:$0xff]
        %v1306 = vld [vmem:[%s502 + $0xd0] sm:$0xff]
        %v1307 = vld [vmem:[%s502 + $0xd8] sm:$0xff]
        %v1308 = vld [vmem:[%s502 + $0xe0] sm:$0xff]
        %v1309 = vld [vmem:[%s502 + $0xe8] sm:$0xff]
        %v1310 = vld [vmem:[%s502 + $0xf0] sm:$0xff]
        %v1311 = vld [vmem:[%s502 + $0xf8] sm:$0xff]
        %v1312 = vmul.f32 %v832, %v1248
        %v1313 = vmul.f32 %v833, %v1249
        %v1314 = vmul.f32 %v834, %v1250
        %v1315 = vmul.f32 %v835, %v1251
        %v1316 = vmul.f32 %v836, %v1252
        %v1317 = vmul.f32 %v837, %v1253
        %v1318 = vmul.f32 %v838, %v1254
        %v1319 = vmul.f32 %v839, %v1255
        %v1320 = vmul.f32 %v840, %v1256
        %v1321 = vmul.f32 %v841, %v1257
        %v1322 = vmul.f32 %v842, %v1258
        %v1323 = vmul.f32 %v843, %v1259
        %v1324 = vmul.f32 %v844, %v1260
        %v1325 = vmul.f32 %v845, %v1261
        %v1326 = vmul.f32 %v846, %v1262
        %v1327 = vmul.f32 %v847, %v1263
        %v1328 = vmul.f32 %v848, %v1264
        %v1329 = vmul.f32 %v849, %v1265
        %v1330 = vmul.f32 %v850, %v1266
        %v1331 = vmul.f32 %v851, %v1267
        %v1332 = vmul.f32 %v852, %v1268
        %v1333 = vmul.f32 %v853, %v1269
        %v1334 = vmul.f32 %v854, %v1270
        %v1335 = vmul.f32 %v855, %v1271
        %v1336 = vmul.f32 %v856, %v1272
        %v1337 = vmul.f32 %v857, %v1273
        %v1338 = vmul.f32 %v858, %v1274
        %v1339 = vmul.f32 %v859, %v1275
        %v1340 = vmul.f32 %v860, %v1276
        %v1341 = vmul.f32 %v861, %v1277
        %v1342 = vmul.f32 %v862, %v1278
        %v1343 = vmul.f32 %v863, %v1279
        %v1344 = vsub.f32 %v1280, %v1312
        %v1345 = vsub.f32 %v1281, %v1313
        %v1346 = vsub.f32 %v1282, %v1314
        %v1347 = vsub.f32 %v1283, %v1315
        %v1348 = vsub.f32 %v1284, %v1316
        %v1349 = vsub.f32 %v1285, %v1317
        %v1350 = vsub.f32 %v1286, %v1318
        %v1351 = vsub.f32 %v1287, %v1319
        %v1352 = vsub.f32 %v1288, %v1320
        %v1353 = vsub.f32 %v1289, %v1321
        %v1354 = vsub.f32 %v1290, %v1322
        %v1355 = vsub.f32 %v1291, %v1323
        %v1356 = vsub.f32 %v1292, %v1324
        %v1357 = vsub.f32 %v1293, %v1325
        %v1358 = vsub.f32 %v1294, %v1326
        %v1359 = vsub.f32 %v1295, %v1327
        %v1360 = vsub.f32 %v1296, %v1328
        %v1361 = vsub.f32 %v1297, %v1329
        %v1362 = vsub.f32 %v1298, %v1330
        %v1363 = vsub.f32 %v1299, %v1331
        %v1364 = vsub.f32 %v1300, %v1332
        %v1365 = vsub.f32 %v1301, %v1333
        %v1366 = vsub.f32 %v1302, %v1334
        %v1367 = vsub.f32 %v1303, %v1335
        %v1368 = vsub.f32 %v1304, %v1336
        %v1369 = vsub.f32 %v1305, %v1337
        %v1370 = vsub.f32 %v1306, %v1338
        %v1371 = vsub.f32 %v1307, %v1339
        %v1372 = vsub.f32 %v1308, %v1340
        %v1373 = vsub.f32 %v1309, %v1341
        %v1374 = vsub.f32 %v1310, %v1342
        %v1375 = vsub.f32 %v1311, %v1343
        %1377 = vset.pattern.permute.xlu0 0
        %1378 = vperm.xlu0 %1377, %v1248
        %v1379 = vpop.permute.xlu0 %1378
        %1382 = vset.pattern.permute.xlu0 0
        %1383 = vperm.xlu0 %1382, %v1249
        %v1384 = vpop.permute.xlu0 %1383
        %1387 = vset.pattern.permute.xlu0 0
        %1388 = vperm.xlu0 %1387, %v1250
        %v1389 = vpop.permute.xlu0 %1388
        %1392 = vset.pattern.permute.xlu0 0
        %1393 = vperm.xlu0 %1392, %v1251
        %v1394 = vpop.permute.xlu0 %1393
        %1397 = vset.pattern.permute.xlu0 0
        %1398 = vperm.xlu0 %1397, %v1252
        %v1399 = vpop.permute.xlu0 %1398
        %1402 = vset.pattern.permute.xlu0 0
        %1403 = vperm.xlu0 %1402, %v1253
        %v1404 = vpop.permute.xlu0 %1403
        %1407 = vset.pattern.permute.xlu0 0
        %1408 = vperm.xlu0 %1407, %v1254
        %v1409 = vpop.permute.xlu0 %1408
        %1412 = vset.pattern.permute.xlu0 0
        %1413 = vperm.xlu0 %1412, %v1255
        %v1414 = vpop.permute.xlu0 %1413
        %1417 = vset.pattern.permute.xlu0 0
        %1418 = vperm.xlu0 %1417, %v1256
        %v1419 = vpop.permute.xlu0 %1418
        %1422 = vset.pattern.permute.xlu0 0
        %1423 = vperm.xlu0 %1422, %v1257
        %v1424 = vpop.permute.xlu0 %1423
        %1427 = vset.pattern.permute.xlu0 0
        %1428 = vperm.xlu0 %1427, %v1258
        %v1429 = vpop.permute.xlu0 %1428
        %1432 = vset.pattern.permute.xlu0 0
        %1433 = vperm.xlu0 %1432, %v1259
        %v1434 = vpop.permute.xlu0 %1433
        %1437 = vset.pattern.permute.xlu0 0
        %1438 = vperm.xlu0 %1437, %v1260
        %v1439 = vpop.permute.xlu0 %1438
        %1442 = vset.pattern.permute.xlu0 0
        %1443 = vperm.xlu0 %1442, %v1261
        %v1444 = vpop.permute.xlu0 %1443
        %1447 = vset.pattern.permute.xlu0 0
        %1448 = vperm.xlu0 %1447, %v1262
        %v1449 = vpop.permute.xlu0 %1448
        %1452 = vset.pattern.permute.xlu0 0
        %1453 = vperm.xlu0 %1452, %v1263
        %v1454 = vpop.permute.xlu0 %1453
        %1457 = vset.pattern.permute.xlu0 0
        %1458 = vperm.xlu0 %1457, %v1264
        %v1459 = vpop.permute.xlu0 %1458
        %1462 = vset.pattern.permute.xlu0 0
        %1463 = vperm.xlu0 %1462, %v1265
        %v1464 = vpop.permute.xlu0 %1463
        %1467 = vset.pattern.permute.xlu0 0
        %1468 = vperm.xlu0 %1467, %v1266
        %v1469 = vpop.permute.xlu0 %1468
        %1472 = vset.pattern.permute.xlu0 0
        %1473 = vperm.xlu0 %1472, %v1267
        %v1474 = vpop.permute.xlu0 %1473
        %1477 = vset.pattern.permute.xlu0 0
        %1478 = vperm.xlu0 %1477, %v1268
        %v1479 = vpop.permute.xlu0 %1478
        %1482 = vset.pattern.permute.xlu0 0
        %1483 = vperm.xlu0 %1482, %v1269
        %v1484 = vpop.permute.xlu0 %1483
        %1487 = vset.pattern.permute.xlu0 0
        %1488 = vperm.xlu0 %1487, %v1270
        %v1489 = vpop.permute.xlu0 %1488
        %1492 = vset.pattern.permute.xlu0 0
        %1493 = vperm.xlu0 %1492, %v1271
        %v1494 = vpop.permute.xlu0 %1493
        %1497 = vset.pattern.permute.xlu0 0
        %1498 = vperm.xlu0 %1497, %v1272
        %v1499 = vpop.permute.xlu0 %1498
        %1502 = vset.pattern.permute.xlu0 0
        %1503 = vperm.xlu0 %1502, %v1273
        %v1504 = vpop.permute.xlu0 %1503
        %1507 = vset.pattern.permute.xlu0 0
        %1508 = vperm.xlu0 %1507, %v1274
        %v1509 = vpop.permute.xlu0 %1508
        %1512 = vset.pattern.permute.xlu0 0
        %1513 = vperm.xlu0 %1512, %v1275
        %v1514 = vpop.permute.xlu0 %1513
        %1517 = vset.pattern.permute.xlu0 0
        %1518 = vperm.xlu0 %1517, %v1276
        %v1519 = vpop.permute.xlu0 %1518
        %1522 = vset.pattern.permute.xlu0 0
        %1523 = vperm.xlu0 %1522, %v1277
        %v1524 = vpop.permute.xlu0 %1523
        %1527 = vset.pattern.permute.xlu0 0
        %1528 = vperm.xlu0 %1527, %v1278
        %v1529 = vpop.permute.xlu0 %1528
        %1532 = vset.pattern.permute.xlu0 0
        %1533 = vperm.xlu0 %1532, %v1279
        %v1534 = vpop.permute.xlu0 %1533
        %v1536 = vmul.f32 %v574, %v1379
        %v1537 = vmul.f32 %v575, %v1379
        %v1538 = vmul.f32 %v576, %v1384
        %v1539 = vmul.f32 %v577, %v1384
        %v1540 = vmul.f32 %v578, %v1389
        %v1541 = vmul.f32 %v579, %v1389
        %v1542 = vmul.f32 %v580, %v1394
        %v1543 = vmul.f32 %v581, %v1394
        %v1544 = vmul.f32 %v582, %v1399
        %v1545 = vmul.f32 %v583, %v1399
        %v1546 = vmul.f32 %v584, %v1404
        %v1547 = vmul.f32 %v585, %v1404
        %v1548 = vmul.f32 %v586, %v1409
        %v1549 = vmul.f32 %v587, %v1409
        %v1550 = vmul.f32 %v588, %v1414
        %v1551 = vmul.f32 %v589, %v1414
        %v1552 = vmul.f32 %v590, %v1419
        %v1553 = vmul.f32 %v591, %v1419
        %v1554 = vmul.f32 %v592, %v1424
        %v1555 = vmul.f32 %v593, %v1424
        %v1556 = vmul.f32 %v594, %v1429
        %v1557 = vmul.f32 %v595, %v1429
        %v1558 = vmul.f32 %v596, %v1434
        %v1559 = vmul.f32 %v597, %v1434
        %v1560 = vmul.f32 %v598, %v1439
        %v1561 = vmul.f32 %v599, %v1439
        %v1562 = vmul.f32 %v600, %v1444
        %v1563 = vmul.f32 %v601, %v1444
        %v1564 = vmul.f32 %v602, %v1449
        %v1565 = vmul.f32 %v603, %v1449
        %v1566 = vmul.f32 %v604, %v1454
        %v1567 = vmul.f32 %v605, %v1454
        %v1568 = vmul.f32 %v606, %v1459
        %v1569 = vmul.f32 %v607, %v1459
        %v1570 = vmul.f32 %v608, %v1464
        %v1571 = vmul.f32 %v609, %v1464
        %v1572 = vmul.f32 %v610, %v1469
        %v1573 = vmul.f32 %v611, %v1469
        %v1574 = vmul.f32 %v612, %v1474
        %v1575 = vmul.f32 %v613, %v1474
        %v1576 = vmul.f32 %v614, %v1479
        %v1577 = vmul.f32 %v615, %v1479
        %v1578 = vmul.f32 %v616, %v1484
        %v1579 = vmul.f32 %v617, %v1484
        %v1580 = vmul.f32 %v618, %v1489
        %v1581 = vmul.f32 %v619, %v1489
        %v1582 = vmul.f32 %v620, %v1494
        %v1583 = vmul.f32 %v621, %v1494
        %v1584 = vmul.f32 %v622, %v1499
        %v1585 = vmul.f32 %v623, %v1499
        %v1586 = vmul.f32 %v624, %v1504
        %v1587 = vmul.f32 %v625, %v1504
        %v1588 = vmul.f32 %v626, %v1509
        %v1589 = vmul.f32 %v627, %v1509
        %v1590 = vmul.f32 %v628, %v1514
        %v1591 = vmul.f32 %v629, %v1514
        %v1592 = vmul.f32 %v630, %v1519
        %v1593 = vmul.f32 %v631, %v1519
        %v1594 = vmul.f32 %v632, %v1524
        %v1595 = vmul.f32 %v633, %v1524
        %v1596 = vmul.f32 %v634, %v1529
        %v1597 = vmul.f32 %v635, %v1529
        %v1598 = vmul.f32 %v636, %v1534
        %v1599 = vmul.f32 %v637, %v1534
        %1601 = vset.pattern.permute.xlu0 0
        %1602 = vperm.xlu0 %1601, %v1344
        %v1603 = vpop.permute.xlu0 %1602
        %1606 = vset.pattern.permute.xlu0 0
        %1607 = vperm.xlu0 %1606, %v1345
        %v1608 = vpop.permute.xlu0 %1607
        %1611 = vset.pattern.permute.xlu0 0
        %1612 = vperm.xlu0 %1611, %v1346
        %v1613 = vpop.permute.xlu0 %1612
        %1616 = vset.pattern.permute.xlu0 0
        %1617 = vperm.xlu0 %1616, %v1347
        %v1618 = vpop.permute.xlu0 %1617
        %1621 = vset.pattern.permute.xlu0 0
        %1622 = vperm.xlu0 %1621, %v1348
        %v1623 = vpop.permute.xlu0 %1622
        %1626 = vset.pattern.permute.xlu0 0
        %1627 = vperm.xlu0 %1626, %v1349
        %v1628 = vpop.permute.xlu0 %1627
        %1631 = vset.pattern.permute.xlu0 0
        %1632 = vperm.xlu0 %1631, %v1350
        %v1633 = vpop.permute.xlu0 %1632
        %1636 = vset.pattern.permute.xlu0 0
        %1637 = vperm.xlu0 %1636, %v1351
        %v1638 = vpop.permute.xlu0 %1637
        %1641 = vset.pattern.permute.xlu0 0
        %1642 = vperm.xlu0 %1641, %v1352
        %v1643 = vpop.permute.xlu0 %1642
        %1646 = vset.pattern.permute.xlu0 0
        %1647 = vperm.xlu0 %1646, %v1353
        %v1648 = vpop.permute.xlu0 %1647
        %1651 = vset.pattern.permute.xlu0 0
        %1652 = vperm.xlu0 %1651, %v1354
        %v1653 = vpop.permute.xlu0 %1652
        %1656 = vset.pattern.permute.xlu0 0
        %1657 = vperm.xlu0 %1656, %v1355
        %v1658 = vpop.permute.xlu0 %1657
        %1661 = vset.pattern.permute.xlu0 0
        %1662 = vperm.xlu0 %1661, %v1356
        %v1663 = vpop.permute.xlu0 %1662
        %1666 = vset.pattern.permute.xlu0 0
        %1667 = vperm.xlu0 %1666, %v1357
        %v1668 = vpop.permute.xlu0 %1667
        %1671 = vset.pattern.permute.xlu0 0
        %1672 = vperm.xlu0 %1671, %v1358
        %v1673 = vpop.permute.xlu0 %1672
        %1676 = vset.pattern.permute.xlu0 0
        %1677 = vperm.xlu0 %1676, %v1359
        %v1678 = vpop.permute.xlu0 %1677
        %1681 = vset.pattern.permute.xlu0 0
        %1682 = vperm.xlu0 %1681, %v1360
        %v1683 = vpop.permute.xlu0 %1682
        %1686 = vset.pattern.permute.xlu0 0
        %1687 = vperm.xlu0 %1686, %v1361
        %v1688 = vpop.permute.xlu0 %1687
        %1691 = vset.pattern.permute.xlu0 0
        %1692 = vperm.xlu0 %1691, %v1362
        %v1693 = vpop.permute.xlu0 %1692
        %1696 = vset.pattern.permute.xlu0 0
        %1697 = vperm.xlu0 %1696, %v1363
        %v1698 = vpop.permute.xlu0 %1697
        %1701 = vset.pattern.permute.xlu0 0
        %1702 = vperm.xlu0 %1701, %v1364
        %v1703 = vpop.permute.xlu0 %1702
        %1706 = vset.pattern.permute.xlu0 0
        %1707 = vperm.xlu0 %1706, %v1365
        %v1708 = vpop.permute.xlu0 %1707
        %1711 = vset.pattern.permute.xlu0 0
        %1712 = vperm.xlu0 %1711, %v1366
        %v1713 = vpop.permute.xlu0 %1712
        %1716 = vset.pattern.permute.xlu0 0
        %1717 = vperm.xlu0 %1716, %v1367
        %v1718 = vpop.permute.xlu0 %1717
        %1721 = vset.pattern.permute.xlu0 0
        %1722 = vperm.xlu0 %1721, %v1368
        %v1723 = vpop.permute.xlu0 %1722
        %1726 = vset.pattern.permute.xlu0 0
        %1727 = vperm.xlu0 %1726, %v1369
        %v1728 = vpop.permute.xlu0 %1727
        %1731 = vset.pattern.permute.xlu0 0
        %1732 = vperm.xlu0 %1731, %v1370
        %v1733 = vpop.permute.xlu0 %1732
        %1736 = vset.pattern.permute.xlu0 0
        %1737 = vperm.xlu0 %1736, %v1371
        %v1738 = vpop.permute.xlu0 %1737
        %1741 = vset.pattern.permute.xlu0 0
        %1742 = vperm.xlu0 %1741, %v1372
        %v1743 = vpop.permute.xlu0 %1742
        %1746 = vset.pattern.permute.xlu0 0
        %1747 = vperm.xlu0 %1746, %v1373
        %v1748 = vpop.permute.xlu0 %1747
        %1751 = vset.pattern.permute.xlu0 0
        %1752 = vperm.xlu0 %1751, %v1374
        %v1753 = vpop.permute.xlu0 %1752
        %1756 = vset.pattern.permute.xlu0 0
        %1757 = vperm.xlu0 %1756, %v1375
        %v1758 = vpop.permute.xlu0 %1757
        %v1760 = vadd.f32 %v1536, %v1603
        %v1761 = vadd.f32 %v1537, %v1603
        %v1762 = vadd.f32 %v1538, %v1608
        %v1763 = vadd.f32 %v1539, %v1608
        %v1764 = vadd.f32 %v1540, %v1613
        %v1765 = vadd.f32 %v1541, %v1613
        %v1766 = vadd.f32 %v1542, %v1618
        %v1767 = vadd.f32 %v1543, %v1618
        %v1768 = vadd.f32 %v1544, %v1623
        %v1769 = vadd.f32 %v1545, %v1623
        %v1770 = vadd.f32 %v1546, %v1628
        %v1771 = vadd.f32 %v1547, %v1628
        %v1772 = vadd.f32 %v1548, %v1633
        %v1773 = vadd.f32 %v1549, %v1633
        %v1774 = vadd.f32 %v1550, %v1638
        %v1775 = vadd.f32 %v1551, %v1638
        %v1776 = vadd.f32 %v1552, %v1643
        %v1777 = vadd.f32 %v1553, %v1643
        %v1778 = vadd.f32 %v1554, %v1648
        %v1779 = vadd.f32 %v1555, %v1648
        %v1780 = vadd.f32 %v1556, %v1653
        %v1781 = vadd.f32 %v1557, %v1653
        %v1782 = vadd.f32 %v1558, %v1658
        %v1783 = vadd.f32 %v1559, %v1658
        %v1784 = vadd.f32 %v1560, %v1663
        %v1785 = vadd.f32 %v1561, %v1663
        %v1786 = vadd.f32 %v1562, %v1668
        %v1787 = vadd.f32 %v1563, %v1668
        %v1788 = vadd.f32 %v1564, %v1673
        %v1789 = vadd.f32 %v1565, %v1673
        %v1790 = vadd.f32 %v1566, %v1678
        %v1791 = vadd.f32 %v1567, %v1678
        %v1792 = vadd.f32 %v1568, %v1683
        %v1793 = vadd.f32 %v1569, %v1683
        %v1794 = vadd.f32 %v1570, %v1688
        %v1795 = vadd.f32 %v1571, %v1688
        %v1796 = vadd.f32 %v1572, %v1693
        %v1797 = vadd.f32 %v1573, %v1693
        %v1798 = vadd.f32 %v1574, %v1698
        %v1799 = vadd.f32 %v1575, %v1698
        %v1800 = vadd.f32 %v1576, %v1703
        %v1801 = vadd.f32 %v1577, %v1703
        %v1802 = vadd.f32 %v1578, %v1708
        %v1803 = vadd.f32 %v1579, %v1708
        %v1804 = vadd.f32 %v1580, %v1713
        %v1805 = vadd.f32 %v1581, %v1713
        %v1806 = vadd.f32 %v1582, %v1718
        %v1807 = vadd.f32 %v1583, %v1718
        %v1808 = vadd.f32 %v1584, %v1723
        %v1809 = vadd.f32 %v1585, %v1723
        %v1810 = vadd.f32 %v1586, %v1728
        %v1811 = vadd.f32 %v1587, %v1728
        %v1812 = vadd.f32 %v1588, %v1733
        %v1813 = vadd.f32 %v1589, %v1733
        %v1814 = vadd.f32 %v1590, %v1738
        %v1815 = vadd.f32 %v1591, %v1738
        %v1816 = vadd.f32 %v1592, %v1743
        %v1817 = vadd.f32 %v1593, %v1743
        %v1818 = vadd.f32 %v1594, %v1748
        %v1819 = vadd.f32 %v1595, %v1748
        %v1820 = vadd.f32 %v1596, %v1753
        %v1821 = vadd.f32 %v1597, %v1753
        %v1822 = vadd.f32 %v1598, %v1758
        %v1823 = vadd.f32 %v1599, %v1758
        %v1824 = vadd.f32 %v1760, %v638
        %v1825 = vadd.f32 %v1761, %v639
        %v1826 = vadd.f32 %v1762, %v640
        %v1827 = vadd.f32 %v1763, %v641
        %v1828 = vadd.f32 %v1764, %v642
        %v1829 = vadd.f32 %v1765, %v643
        %v1830 = vadd.f32 %v1766, %v644
        %v1831 = vadd.f32 %v1767, %v645
        %v1832 = vadd.f32 %v1768, %v646
        %v1833 = vadd.f32 %v1769, %v647
        %v1834 = vadd.f32 %v1770, %v648
        %v1835 = vadd.f32 %v1771, %v649
        %v1836 = vadd.f32 %v1772, %v650
        %v1837 = vadd.f32 %v1773, %v651
        %v1838 = vadd.f32 %v1774, %v652
        %v1839 = vadd.f32 %v1775, %v653
        %v1840 = vadd.f32 %v1776, %v654
        %v1841 = vadd.f32 %v1777, %v655
        %v1842 = vadd.f32 %v1778, %v656
        %v1843 = vadd.f32 %v1779, %v657
        %v1844 = vadd.f32 %v1780, %v658
        %v1845 = vadd.f32 %v1781, %v659
        %v1846 = vadd.f32 %v1782, %v660
        %v1847 = vadd.f32 %v1783, %v661
        %v1848 = vadd.f32 %v1784, %v662
        %v1849 = vadd.f32 %v1785, %v663
        %v1850 = vadd.f32 %v1786, %v664
        %v1851 = vadd.f32 %v1787, %v665
        %v1852 = vadd.f32 %v1788, %v666
        %v1853 = vadd.f32 %v1789, %v667
        %v1854 = vadd.f32 %v1790, %v668
        %v1855 = vadd.f32 %v1791, %v669
        %v1856 = vadd.f32 %v1792, %v670
        %v1857 = vadd.f32 %v1793, %v671
        %v1858 = vadd.f32 %v1794, %v672
        %v1859 = vadd.f32 %v1795, %v673
        %v1860 = vadd.f32 %v1796, %v674
        %v1861 = vadd.f32 %v1797, %v675
        %v1862 = vadd.f32 %v1798, %v676
        %v1863 = vadd.f32 %v1799, %v677
        %v1864 = vadd.f32 %v1800, %v678
        %v1865 = vadd.f32 %v1801, %v679
        %v1866 = vadd.f32 %v1802, %v680
        %v1867 = vadd.f32 %v1803, %v681
        %v1868 = vadd.f32 %v1804, %v682
        %v1869 = vadd.f32 %v1805, %v683
        %v1870 = vadd.f32 %v1806, %v684
        %v1871 = vadd.f32 %v1807, %v685
        %v1872 = vadd.f32 %v1808, %v686
        %v1873 = vadd.f32 %v1809, %v687
        %v1874 = vadd.f32 %v1810, %v688
        %v1875 = vadd.f32 %v1811, %v689
        %v1876 = vadd.f32 %v1812, %v690
        %v1877 = vadd.f32 %v1813, %v691
        %v1878 = vadd.f32 %v1814, %v692
        %v1879 = vadd.f32 %v1815, %v693
        %v1880 = vadd.f32 %v1816, %v694
        %v1881 = vadd.f32 %v1817, %v695
        %v1882 = vadd.f32 %v1818, %v696
        %v1883 = vadd.f32 %v1819, %v697
        %v1884 = vadd.f32 %v1820, %v698
        %v1885 = vadd.f32 %v1821, %v699
        %v1886 = vadd.f32 %v1822, %v700
        %v1887 = vadd.f32 %v1823, %v701
        %v1888 = vmax.f32 %v1824, 0.0
        %v1889 = vmax.f32 %v1825, 0.0
        %v1890 = vmax.f32 %v1826, 0.0
        %v1891 = vmax.f32 %v1827, 0.0
        %v1892 = vmax.f32 %v1828, 0.0
        %v1893 = vmax.f32 %v1829, 0.0
        %v1894 = vmax.f32 %v1830, 0.0
        %v1895 = vmax.f32 %v1831, 0.0
        %v1896 = vmax.f32 %v1832, 0.0
        %v1897 = vmax.f32 %v1833, 0.0
        %v1898 = vmax.f32 %v1834, 0.0
        %v1899 = vmax.f32 %v1835, 0.0
        %v1900 = vmax.f32 %v1836, 0.0
        %v1901 = vmax.f32 %v1837, 0.0
        %v1902 = vmax.f32 %v1838, 0.0
        %v1903 = vmax.f32 %v1839, 0.0
        %v1904 = vmax.f32 %v1840, 0.0
        %v1905 = vmax.f32 %v1841, 0.0
        %v1906 = vmax.f32 %v1842, 0.0
        %v1907 = vmax.f32 %v1843, 0.0
        %v1908 = vmax.f32 %v1844, 0.0
        %v1909 = vmax.f32 %v1845, 0.0
        %v1910 = vmax.f32 %v1846, 0.0
        %v1911 = vmax.f32 %v1847, 0.0
        %v1912 = vmax.f32 %v1848, 0.0
        %v1913 = vmax.f32 %v1849, 0.0
        %v1914 = vmax.f32 %v1850, 0.0
        %v1915 = vmax.f32 %v1851, 0.0
        %v1916 = vmax.f32 %v1852, 0.0
        %v1917 = vmax.f32 %v1853, 0.0
        %v1918 = vmax.f32 %v1854, 0.0
        %v1919 = vmax.f32 %v1855, 0.0
        %v1920 = vmax.f32 %v1856, 0.0
        %v1921 = vmax.f32 %v1857, 0.0
        %v1922 = vmax.f32 %v1858, 0.0
        %v1923 = vmax.f32 %v1859, 0.0
        %v1924 = vmax.f32 %v1860, 0.0
        %v1925 = vmax.f32 %v1861, 0.0
        %v1926 = vmax.f32 %v1862, 0.0
        %v1927 = vmax.f32 %v1863, 0.0
        %v1928 = vmax.f32 %v1864, 0.0
        %v1929 = vmax.f32 %v1865, 0.0
        %v1930 = vmax.f32 %v1866, 0.0
        %v1931 = vmax.f32 %v1867, 0.0
        %v1932 = vmax.f32 %v1868, 0.0
        %v1933 = vmax.f32 %v1869, 0.0
        %v1934 = vmax.f32 %v1870, 0.0
        %v1935 = vmax.f32 %v1871, 0.0
        %v1936 = vmax.f32 %v1872, 0.0
        %v1937 = vmax.f32 %v1873, 0.0
        %v1938 = vmax.f32 %v1874, 0.0
        %v1939 = vmax.f32 %v1875, 0.0
        %v1940 = vmax.f32 %v1876, 0.0
        %v1941 = vmax.f32 %v1877, 0.0
        %v1942 = vmax.f32 %v1878, 0.0
        %v1943 = vmax.f32 %v1879, 0.0
        %v1944 = vmax.f32 %v1880, 0.0
        %v1945 = vmax.f32 %v1881, 0.0
        %v1946 = vmax.f32 %v1882, 0.0
        %v1947 = vmax.f32 %v1883, 0.0
        %v1948 = vmax.f32 %v1884, 0.0
        %v1949 = vmax.f32 %v1885, 0.0
        %v1950 = vmax.f32 %v1886, 0.0
        %v1951 = vmax.f32 %v1887, 0.0
        %v1952 = vld [vmem:[#allocation2] sm:$0xff]
        %v1953 = vld [vmem:[#allocation2 + $0x8] sm:$0xff]
        %v1954 = vld [vmem:[#allocation2 + $0x10] sm:$0xff]
        %v1955 = vld [vmem:[#allocation2 + $0x18] sm:$0xff]
        %v1956 = vld [vmem:[#allocation2 + $0x20] sm:$0xff]
        %v1957 = vld [vmem:[#allocation2 + $0x28] sm:$0xff]
        %v1958 = vld [vmem:[#allocation2 + $0x30] sm:$0xff]
        %v1959 = vld [vmem:[#allocation2 + $0x38] sm:$0xff]
        %v1960 = vld [vmem:[#allocation2 + $0x40] sm:$0xff]
        %v1961 = vld [vmem:[#allocation2 + $0x48] sm:$0xff]
        %v1962 = vld [vmem:[#allocation2 + $0x50] sm:$0xff]
        %v1963 = vld [vmem:[#allocation2 + $0x58] sm:$0xff]
        %v1964 = vld [vmem:[#allocation2 + $0x60] sm:$0xff]
        %v1965 = vld [vmem:[#allocation2 + $0x68] sm:$0xff]
        %v1966 = vld [vmem:[#allocation2 + $0x70] sm:$0xff]
        %v1967 = vld [vmem:[#allocation2 + $0x78] sm:$0xff]
        %v1968 = vld [vmem:[#allocation2 + $0x80] sm:$0xff]
        %v1969 = vld [vmem:[#allocation2 + $0x88] sm:$0xff]
        %v1970 = vld [vmem:[#allocation2 + $0x90] sm:$0xff]
        %v1971 = vld [vmem:[#allocation2 + $0x98] sm:$0xff]
        %v1972 = vld [vmem:[#allocation2 + $0xa0] sm:$0xff]
        %v1973 = vld [vmem:[#allocation2 + $0xa8] sm:$0xff]
        %v1974 = vld [vmem:[#allocation2 + $0xb0] sm:$0xff]
        %v1975 = vld [vmem:[#allocation2 + $0xb8] sm:$0xff]
        %v1976 = vld [vmem:[#allocation2 + $0xc0] sm:$0xff]
        %v1977 = vld [vmem:[#allocation2 + $0xc8] sm:$0xff]
        %v1978 = vld [vmem:[#allocation2 + $0xd0] sm:$0xff]
        %v1979 = vld [vmem:[#allocation2 + $0xd8] sm:$0xff]
        %v1980 = vld [vmem:[#allocation2 + $0xe0] sm:$0xff]
        %v1981 = vld [vmem:[#allocation2 + $0xe8] sm:$0xff]
        %v1982 = vld [vmem:[#allocation2 + $0xf0] sm:$0xff]
        %v1983 = vld [vmem:[#allocation2 + $0xf8] sm:$0xff]
        %v1984 = vld [vmem:[#allocation2 + $0x100] sm:$0xff]
        %v1985 = vld [vmem:[#allocation2 + $0x108] sm:$0xff]
        %v1986 = vld [vmem:[#allocation2 + $0x110] sm:$0xff]
        %v1987 = vld [vmem:[#allocation2 + $0x118] sm:$0xff]
        %v1988 = vld [vmem:[#allocation2 + $0x120] sm:$0xff]
        %v1989 = vld [vmem:[#allocation2 + $0x128] sm:$0xff]
        %v1990 = vld [vmem:[#allocation2 + $0x130] sm:$0xff]
        %v1991 = vld [vmem:[#allocation2 + $0x138] sm:$0xff]
        %v1992 = vld [vmem:[#allocation2 + $0x140] sm:$0xff]
        %v1993 = vld [vmem:[#allocation2 + $0x148] sm:$0xff]
        %v1994 = vld [vmem:[#allocation2 + $0x150] sm:$0xff]
        %v1995 = vld [vmem:[#allocation2 + $0x158] sm:$0xff]
        %v1996 = vld [vmem:[#allocation2 + $0x160] sm:$0xff]
        %v1997 = vld [vmem:[#allocation2 + $0x168] sm:$0xff]
        %v1998 = vld [vmem:[#allocation2 + $0x170] sm:$0xff]
        %v1999 = vld [vmem:[#allocation2 + $0x178] sm:$0xff]
        %v2000 = vld [vmem:[#allocation2 + $0x180] sm:$0xff]
        %v2001 = vld [vmem:[#allocation2 + $0x188] sm:$0xff]
        %v2002 = vld [vmem:[#allocation2 + $0x190] sm:$0xff]
        %v2003 = vld [vmem:[#allocation2 + $0x198] sm:$0xff]
        %v2004 = vld [vmem:[#allocation2 + $0x1a0] sm:$0xff]
        %v2005 = vld [vmem:[#allocation2 + $0x1a8] sm:$0xff]
        %v2006 = vld [vmem:[#allocation2 + $0x1b0] sm:$0xff]
        %v2007 = vld [vmem:[#allocation2 + $0x1b8] sm:$0xff]
        %v2008 = vld [vmem:[#allocation2 + $0x1c0] sm:$0xff]
        %v2009 = vld [vmem:[#allocation2 + $0x1c8] sm:$0xff]
        %v2010 = vld [vmem:[#allocation2 + $0x1d0] sm:$0xff]
        %v2011 = vld [vmem:[#allocation2 + $0x1d8] sm:$0xff]
        %v2012 = vld [vmem:[#allocation2 + $0x1e0] sm:$0xff]
        %v2013 = vld [vmem:[#allocation2 + $0x1e8] sm:$0xff]
        %v2014 = vld [vmem:[#allocation2 + $0x1f0] sm:$0xff]
        %v2015 = vld [vmem:[#allocation2 + $0x1f8] sm:$0xff]
        %v2016 = vld [vmem:[%s432] sm:$0xff]
        %v2017 = vld [vmem:[%s432 + $0x8] sm:$0xff]
        %v2018 = vld [vmem:[%s432 + $0x10] sm:$0xff]
        %v2019 = vld [vmem:[%s432 + $0x18] sm:$0xff]
        %v2020 = vld [vmem:[%s432 + $0x20] sm:$0xff]
        %v2021 = vld [vmem:[%s432 + $0x28] sm:$0xff]
        %v2022 = vld [vmem:[%s432 + $0x30] sm:$0xff]
        %v2023 = vld [vmem:[%s432 + $0x38] sm:$0xff]
        %v2024 = vld [vmem:[%s432 + $0x40] sm:$0xff]
        %v2025 = vld [vmem:[%s432 + $0x48] sm:$0xff]
        %v2026 = vld [vmem:[%s432 + $0x50] sm:$0xff]
        %v2027 = vld [vmem:[%s432 + $0x58] sm:$0xff]
        %v2028 = vld [vmem:[%s432 + $0x60] sm:$0xff]
        %v2029 = vld [vmem:[%s432 + $0x68] sm:$0xff]
        %v2030 = vld [vmem:[%s432 + $0x70] sm:$0xff]
        %v2031 = vld [vmem:[%s432 + $0x78] sm:$0xff]
        %v2032 = vld [vmem:[%s432 + $0x80] sm:$0xff]
        %v2033 = vld [vmem:[%s432 + $0x88] sm:$0xff]
        %v2034 = vld [vmem:[%s432 + $0x90] sm:$0xff]
        %v2035 = vld [vmem:[%s432 + $0x98] sm:$0xff]
        %v2036 = vld [vmem:[%s432 + $0xa0] sm:$0xff]
        %v2037 = vld [vmem:[%s432 + $0xa8] sm:$0xff]
        %v2038 = vld [vmem:[%s432 + $0xb0] sm:$0xff]
        %v2039 = vld [vmem:[%s432 + $0xb8] sm:$0xff]
        %v2040 = vld [vmem:[%s432 + $0xc0] sm:$0xff]
        %v2041 = vld [vmem:[%s432 + $0xc8] sm:$0xff]
        %v2042 = vld [vmem:[%s432 + $0xd0] sm:$0xff]
        %v2043 = vld [vmem:[%s432 + $0xd8] sm:$0xff]
        %v2044 = vld [vmem:[%s432 + $0xe0] sm:$0xff]
        %v2045 = vld [vmem:[%s432 + $0xe8] sm:$0xff]
        %v2046 = vld [vmem:[%s432 + $0xf0] sm:$0xff]
        %v2047 = vld [vmem:[%s432 + $0xf8] sm:$0xff]
        %v2048 = vld [vmem:[%s432 + $0x100] sm:$0xff]
        %v2049 = vld [vmem:[%s432 + $0x108] sm:$0xff]
        %v2050 = vld [vmem:[%s432 + $0x110] sm:$0xff]
        %v2051 = vld [vmem:[%s432 + $0x118] sm:$0xff]
        %v2052 = vld [vmem:[%s432 + $0x120] sm:$0xff]
        %v2053 = vld [vmem:[%s432 + $0x128] sm:$0xff]
        %v2054 = vld [vmem:[%s432 + $0x130] sm:$0xff]
        %v2055 = vld [vmem:[%s432 + $0x138] sm:$0xff]
        %v2056 = vld [vmem:[%s432 + $0x140] sm:$0xff]
        %v2057 = vld [vmem:[%s432 + $0x148] sm:$0xff]
        %v2058 = vld [vmem:[%s432 + $0x150] sm:$0xff]
        %v2059 = vld [vmem:[%s432 + $0x158] sm:$0xff]
        %v2060 = vld [vmem:[%s432 + $0x160] sm:$0xff]
        %v2061 = vld [vmem:[%s432 + $0x168] sm:$0xff]
        %v2062 = vld [vmem:[%s432 + $0x170] sm:$0xff]
        %v2063 = vld [vmem:[%s432 + $0x178] sm:$0xff]
        %v2064 = vld [vmem:[%s432 + $0x180] sm:$0xff]
        %v2065 = vld [vmem:[%s432 + $0x188] sm:$0xff]
        %v2066 = vld [vmem:[%s432 + $0x190] sm:$0xff]
        %v2067 = vld [vmem:[%s432 + $0x198] sm:$0xff]
        %v2068 = vld [vmem:[%s432 + $0x1a0] sm:$0xff]
        %v2069 = vld [vmem:[%s432 + $0x1a8] sm:$0xff]
        %v2070 = vld [vmem:[%s432 + $0x1b0] sm:$0xff]
        %v2071 = vld [vmem:[%s432 + $0x1b8] sm:$0xff]
        %v2072 = vld [vmem:[%s432 + $0x1c0] sm:$0xff]
        %v2073 = vld [vmem:[%s432 + $0x1c8] sm:$0xff]
        %v2074 = vld [vmem:[%s432 + $0x1d0] sm:$0xff]
        %v2075 = vld [vmem:[%s432 + $0x1d8] sm:$0xff]
        %v2076 = vld [vmem:[%s432 + $0x1e0] sm:$0xff]
        %v2077 = vld [vmem:[%s432 + $0x1e8] sm:$0xff]
        %v2078 = vld [vmem:[%s432 + $0x1f0] sm:$0xff]
        %v2079 = vld [vmem:[%s432 + $0x1f8] sm:$0xff]
        %2080 = vmatprep.subr.mxu0 %v1889
        %2081 = vmatpush1.msra.mxu0 %v1888
        %2082 = vmatprep.subr.mxu0 %v1891
        %2083 = vmatpush1.msra.mxu0 %v1890
        %2084 = vmatprep.subr.mxu0 %v1893
        %2085 = vmatpush1.msra.mxu0 %v1892
        %2086 = vmatprep.subr.mxu0 %v1895
        %2087 = vmatpush1.msra.mxu0 %v1894
        %2088 = vmatprep.subr.mxu0 %v1897
        %2089 = vmatpush1.msra.mxu0 %v1896
        %2090 = vmatprep.subr.mxu0 %v1899
        %2091 = vmatpush1.msra.mxu0 %v1898
        %2092 = vmatprep.subr.mxu0 %v1901
        %2093 = vmatpush1.msra.mxu0 %v1900
        %2094 = vmatprep.subr.mxu0 %v1903
        %2095 = vmatpush1.msra.mxu0 %v1902
        %2096 = vmatprep.subr.mxu0 %v1905
        %2097 = vmatpush1.msra.mxu0 %v1904
        %2098 = vmatprep.subr.mxu0 %v1907
        %2099 = vmatpush1.msra.mxu0 %v1906
        %2100 = vmatprep.subr.mxu0 %v1909
        %2101 = vmatpush1.msra.mxu0 %v1908
        %2102 = vmatprep.subr.mxu0 %v1911
        %2103 = vmatpush1.msra.mxu0 %v1910
        %2104 = vmatprep.subr.mxu0 %v1913
        %2105 = vmatpush1.msra.mxu0 %v1912
        %2106 = vmatprep.subr.mxu0 %v1915
        %2107 = vmatpush1.msra.mxu0 %v1914
        %2108 = vmatprep.subr.mxu0 %v1917
        %2109 = vmatpush1.msra.mxu0 %v1916
        %2110 = vmatprep.subr.mxu0 %v1919
        %2111 = vmatpush1.msra.mxu0 %v1918
        %2112 = vmatprep.subr.mxu0 %v1921
        %2113 = vmatpush1.msra.mxu0 %v1920
        %2114 = vmatprep.subr.mxu0 %v1923
        %2115 = vmatpush1.msra.mxu0 %v1922
        %2116 = vmatprep.subr.mxu0 %v1925
        %2117 = vmatpush1.msra.mxu0 %v1924
        %2118 = vmatprep.subr.mxu0 %v1927
        %2119 = vmatpush1.msra.mxu0 %v1926
        %2120 = vmatprep.subr.mxu0 %v1929
        %2121 = vmatpush1.msra.mxu0 %v1928
        %2122 = vmatprep.subr.mxu0 %v1931
        %2123 = vmatpush1.msra.mxu0 %v1930
        %2124 = vmatprep.subr.mxu0 %v1933
        %2125 = vmatpush1.msra.mxu0 %v1932
        %2126 = vmatprep.subr.mxu0 %v1935
        %2127 = vmatpush1.msra.mxu0 %v1934
        %2128 = vmatprep.subr.mxu0 %v1937
        %2129 = vmatpush1.msra.mxu0 %v1936
        %2130 = vmatprep.subr.mxu0 %v1939
        %2131 = vmatpush1.msra.mxu0 %v1938
        %2132 = vmatprep.subr.mxu0 %v1941
        %2133 = vmatpush1.msra.mxu0 %v1940
        %2134 = vmatprep.subr.mxu0 %v1943
        %2135 = vmatpush1.msra.mxu0 %v1942
        %2136 = vmatprep.subr.mxu0 %v1945
        %2137 = vmatpush1.msra.mxu0 %v1944
        %2138 = vmatprep.subr.mxu0 %v1947
        %2139 = vmatpush1.msra.mxu0 %v1946
        %2140 = vmatprep.subr.mxu0 %v1949
        %2141 = vmatpush1.msra.mxu0 %v1948
        %2142 = vmatprep.subr.mxu0 %v1951
        %2143 = vmatpush1.msra.mxu0 %v1950
        %2144 = vmatprep.mubr.f32.mxu0 %v2017
        %2145 = vmatmul.mubr.f32.gmra.mrb[0].mxu0 %v2016
        %v2146 = vpop.f32.mrb[0].mxu0
        %v2147 = vadd.f32 0.0, %v2146
        %v2148 = vpop.f32.mrb[0].mxu0
        %v2149 = vadd.f32 0.0, %v2148
        %2150 = vmatprep.mubr.f32.mxu0 %v2019
        %2151 = vmatmul.mubr.f32.gmra.mrb[0].mxu0 %v2018
        %v2152 = vpop.f32.mrb[0].mxu0
        %v2153 = vadd.f32 0.0, %v2152
        %v2154 = vpop.f32.mrb[0].mxu0
        %v2155 = vadd.f32 0.0, %v2154
        %2156 = vmatprep.mubr.f32.mxu0 %v2021
        %2157 = vmatmul.mubr.f32.gmra.mrb[0].mxu0 %v2020
        %v2158 = vpop.f32.mrb[0].mxu0
        %v2159 = vadd.f32 0.0, %v2158
        %v2160 = vpop.f32.mrb[0].mxu0
        %v2161 = vadd.f32 0.0, %v2160
        %2162 = vmatprep.mubr.f32.mxu0 %v2023
        %2163 = vmatmul.mubr.f32.gmra.mrb[0].mxu0 %v2022
        %v2164 = vpop.f32.mrb[0].mxu0
        %v2165 = vadd.f32 0.0, %v2164
        %v2166 = vpop.f32.mrb[0].mxu0
        %v2167 = vadd.f32 0.0, %v2166
        %2168 = vmatprep.mubr.f32.mxu0 %v2025
        %2169 = vmatmul.mubr.f32.gmra.mrb[0].mxu0 %v2024
        %v2170 = vpop.f32.mrb[0].mxu0
        %v2171 = vadd.f32 0.0, %v2170
        %v2172 = vpop.f32.mrb[0].mxu0
        %v2173 = vadd.f32 0.0, %v2172
        %2174 = vmatprep.mubr.f32.mxu0 %v2027
        %2175 = vmatmul.mubr.f32.gmra.mrb[0].mxu0 %v2026
        %v2176 = vpop.f32.mrb[0].mxu0
        %v2177 = vadd.f32 0.0, %v2176
        %v2178 = vpop.f32.mrb[0].mxu0
        %v2179 = vadd.f32 0.0, %v2178
        %2180 = vmatprep.mubr.f32.mxu0 %v2029
        %2181 = vmatmul.mubr.f32.gmra.mrb[0].mxu0 %v2028
        %v2182 = vpop.f32.mrb[0].mxu0
        %v2183 = vadd.f32 0.0, %v2182
        %v2184 = vpop.f32.mrb[0].mxu0
        %v2185 = vadd.f32 0.0, %v2184
        %2186 = vmatprep.mubr.f32.mxu0 %v2031
        %2187 = vmatmul.mubr.f32.gmra.mrb[0].mxu0 %v2030
        %v2188 = vpop.f32.mrb[0].mxu0
        %v2189 = vadd.f32 0.0, %v2188
        %v2190 = vpop.f32.mrb[0].mxu0
        %v2191 = vadd.f32 0.0, %v2190
        %2192 = vmatprep.mubr.f32.mxu0 %v2033
        %2193 = vmatmul.mubr.f32.gmra.mrb[0].mxu0 %v2032
        %v2194 = vpop.f32.mrb[0].mxu0
        %v2195 = vadd.f32 0.0, %v2194
        %v2196 = vpop.f32.mrb[0].mxu0
        %v2197 = vadd.f32 0.0, %v2196
        %2198 = vmatprep.mubr.f32.mxu0 %v2035
        %2199 = vmatmul.mubr.f32.gmra.mrb[0].mxu0 %v2034
        %v2200 = vpop.f32.mrb[0].mxu0
        %v2201 = vadd.f32 0.0, %v2200
        %v2202 = vpop.f32.mrb[0].mxu0
        %v2203 = vadd.f32 0.0, %v2202
        %2204 = vmatprep.mubr.f32.mxu0 %v2037
        %2205 = vmatmul.mubr.f32.gmra.mrb[0].mxu0 %v2036
        %v2206 = vpop.f32.mrb[0].mxu0
        %v2207 = vadd.f32 0.0, %v2206
        %v2208 = vpop.f32.mrb[0].mxu0
        %v2209 = vadd.f32 0.0, %v2208
        %2210 = vmatprep.mubr.f32.mxu0 %v2039
        %2211 = vmatmul.mubr.f32.gmra.mrb[0].mxu0 %v2038
        %v2212 = vpop.f32.mrb[0].mxu0
        %v2213 = vadd.f32 0.0, %v2212
        %v2214 = vpop.f32.mrb[0].mxu0
        %v2215 = vadd.f32 0.0, %v2214
        %2216 = vmatprep.mubr.f32.mxu0 %v2041
        %2217 = vmatmul.mubr.f32.gmra.mrb[0].mxu0 %v2040
        %v2218 = vpop.f32.mrb[0].mxu0
        %v2219 = vadd.f32 0.0, %v2218
        %v2220 = vpop.f32.mrb[0].mxu0
        %v2221 = vadd.f32 0.0, %v2220
        %2222 = vmatprep.mubr.f32.mxu0 %v2043
        %2223 = vmatmul.mubr.f32.gmra.mrb[0].mxu0 %v2042
        %v2224 = vpop.f32.mrb[0].mxu0
        %v2225 = vadd.f32 0.0, %v2224
        %v2226 = vpop.f32.mrb[0].mxu0
        %v2227 = vadd.f32 0.0, %v2226
        %2228 = vmatprep.mubr.f32.mxu0 %v2045
        %2229 = vmatmul.mubr.f32.gmra.mrb[0].mxu0 %v2044
        %v2230 = vpop.f32.mrb[0].mxu0
        %v2231 = vadd.f32 0.0, %v2230
        %v2232 = vpop.f32.mrb[0].mxu0
        %v2233 = vadd.f32 0.0, %v2232
        %2234 = vmatprep.mubr.f32.mxu0 %v2047
        %2235 = vmatmul.mubr.f32.gmra.mrb[0].mxu0 %v2046
        %v2236 = vpop.f32.mrb[0].mxu0
        %v2237 = vadd.f32 0.0, %v2236
        %v2238 = vpop.f32.mrb[0].mxu0
        %v2239 = vadd.f32 0.0, %v2238
        %2240 = vmatprep.mubr.f32.mxu0 %v2049
        %2241 = vmatmul.mubr.f32.gmra.mrb[0].mxu0 %v2048
        %v2242 = vpop.f32.mrb[0].mxu0
        %v2243 = vadd.f32 0.0, %v2242
        %v2244 = vpop.f32.mrb[0].mxu0
        %v2245 = vadd.f32 0.0, %v2244
        %2246 = vmatprep.mubr.f32.mxu0 %v2051
        %2247 = vmatmul.mubr.f32.gmra.mrb[0].mxu0 %v2050
        %v2248 = vpop.f32.mrb[0].mxu0
        %v2249 = vadd.f32 0.0, %v2248
        %v2250 = vpop.f32.mrb[0].mxu0
        %v2251 = vadd.f32 0.0, %v2250
        %2252 = vmatprep.mubr.f32.mxu0 %v2053
        %2253 = vmatmul.mubr.f32.gmra.mrb[0].mxu0 %v2052
        %v2254 = vpop.f32.mrb[0].mxu0
        %v2255 = vadd.f32 0.0, %v2254
        %v2256 = vpop.f32.mrb[0].mxu0
        %v2257 = vadd.f32 0.0, %v2256
        %2258 = vmatprep.mubr.f32.mxu0 %v2055
        %2259 = vmatmul.mubr.f32.gmra.mrb[0].mxu0 %v2054
        %v2260 = vpop.f32.mrb[0].mxu0
        %v2261 = vadd.f32 0.0, %v2260
        %v2262 = vpop.f32.mrb[0].mxu0
        %v2263 = vadd.f32 0.0, %v2262
        %2264 = vmatprep.mubr.f32.mxu0 %v2057
        %2265 = vmatmul.mubr.f32.gmra.mrb[0].mxu0 %v2056
        %v2266 = vpop.f32.mrb[0].mxu0
        %v2267 = vadd.f32 0.0, %v2266
        %v2268 = vpop.f32.mrb[0].mxu0
        %v2269 = vadd.f32 0.0, %v2268
        %2270 = vmatprep.mubr.f32.mxu0 %v2059
        %2271 = vmatmul.mubr.f32.gmra.mrb[0].mxu0 %v2058
        %v2272 = vpop.f32.mrb[0].mxu0
        %v2273 = vadd.f32 0.0, %v2272
        %v2274 = vpop.f32.mrb[0].mxu0
        %v2275 = vadd.f32 0.0, %v2274
        %2276 = vmatprep.mubr.f32.mxu0 %v2061
        %2277 = vmatmul.mubr.f32.gmra.mrb[0].mxu0 %v2060
        %v2278 = vpop.f32.mrb[0].mxu0
        %v2279 = vadd.f32 0.0, %v2278
        %v2280 = vpop.f32.mrb[0].mxu0
        %v2281 = vadd.f32 0.0, %v2280
        %2282 = vmatprep.mubr.f32.mxu0 %v2063
        %2283 = vmatmul.mubr.f32.gmra.mrb[0].mxu0 %v2062
        %v2284 = vpop.f32.mrb[0].mxu0
        %v2285 = vadd.f32 0.0, %v2284
        %v2286 = vpop.f32.mrb[0].mxu0
        %v2287 = vadd.f32 0.0, %v2286
        %2288 = vmatprep.mubr.f32.mxu0 %v2065
        %2289 = vmatmul.mubr.f32.gmra.mrb[0].mxu0 %v2064
        %v2290 = vpop.f32.mrb[0].mxu0
        %v2291 = vadd.f32 0.0, %v2290
        %v2292 = vpop.f32.mrb[0].mxu0
        %v2293 = vadd.f32 0.0, %v2292
        %2294 = vmatprep.mubr.f32.mxu0 %v2067
        %2295 = vmatmul.mubr.f32.gmra.mrb[0].mxu0 %v2066
        %v2296 = vpop.f32.mrb[0].mxu0
        %v2297 = vadd.f32 0.0, %v2296
        %v2298 = vpop.f32.mrb[0].mxu0
        %v2299 = vadd.f32 0.0, %v2298
        %2300 = vmatprep.mubr.f32.mxu0 %v2069
        %2301 = vmatmul.mubr.f32.gmra.mrb[0].mxu0 %v2068
        %v2302 = vpop.f32.mrb[0].mxu0
        %v2303 = vadd.f32 0.0, %v2302
        %v2304 = vpop.f32.mrb[0].mxu0
        %v2305 = vadd.f32 0.0, %v2304
        %2306 = vmatprep.mubr.f32.mxu0 %v2071
        %2307 = vmatmul.mubr.f32.gmra.mrb[0].mxu0 %v2070
        %v2308 = vpop.f32.mrb[0].mxu0
        %v2309 = vadd.f32 0.0, %v2308
        %v2310 = vpop.f32.mrb[0].mxu0
        %v2311 = vadd.f32 0.0, %v2310
        %2312 = vmatprep.mubr.f32.mxu0 %v2073
        %2313 = vmatmul.mubr.f32.gmra.mrb[0].mxu0 %v2072
        %v2314 = vpop.f32.mrb[0].mxu0
        %v2315 = vadd.f32 0.0, %v2314
        %v2316 = vpop.f32.mrb[0].mxu0
        %v2317 = vadd.f32 0.0, %v2316
        %2318 = vmatprep.mubr.f32.mxu0 %v2075
        %2319 = vmatmul.mubr.f32.gmra.mrb[0].mxu0 %v2074
        %v2320 = vpop.f32.mrb[0].mxu0
        %v2321 = vadd.f32 0.0, %v2320
        %v2322 = vpop.f32.mrb[0].mxu0
        %v2323 = vadd.f32 0.0, %v2322
        %2324 = vmatprep.mubr.f32.mxu0 %v2077
        %2325 = vmatmul.mubr.f32.gmra.mrb[0].mxu0 %v2076
        %v2326 = vpop.f32.mrb[0].mxu0
        %v2327 = vadd.f32 0.0, %v2326
        %v2328 = vpop.f32.mrb[0].mxu0
        %v2329 = vadd.f32 0.0, %v2328
        %2330 = vmatprep.mubr.f32.mxu0 %v2079
        %2331 = vmatmul.mubr.f32.gmra.mrb[0].mxu0 %v2078
        %v2332 = vpop.f32.mrb[0].mxu0
        %v2333 = vadd.f32 0.0, %v2332
        %v2334 = vpop.f32.mrb[0].mxu0
        %v2335 = vadd.f32 0.0, %v2334
        %2336 = vdwg.mxu0
        %v2337 = vadd.f32 %v1952, %v2147
        %v2338 = vadd.f32 %v1953, %v2149
        %v2339 = vadd.f32 %v1954, %v2153
        %v2340 = vadd.f32 %v1955, %v2155
        %v2341 = vadd.f32 %v1956, %v2159
        %v2342 = vadd.f32 %v1957, %v2161
        %v2343 = vadd.f32 %v1958, %v2165
        %v2344 = vadd.f32 %v1959, %v2167
        %v2345 = vadd.f32 %v1960, %v2171
        %v2346 = vadd.f32 %v1961, %v2173
        %v2347 = vadd.f32 %v1962, %v2177
        %v2348 = vadd.f32 %v1963, %v2179
        %v2349 = vadd.f32 %v1964, %v2183
        %v2350 = vadd.f32 %v1965, %v2185
        %v2351 = vadd.f32 %v1966, %v2189
        %v2352 = vadd.f32 %v1967, %v2191
        %v2353 = vadd.f32 %v1968, %v2195
        %v2354 = vadd.f32 %v1969, %v2197
        %v2355 = vadd.f32 %v1970, %v2201
        %v2356 = vadd.f32 %v1971, %v2203
        %v2357 = vadd.f32 %v1972, %v2207
        %v2358 = vadd.f32 %v1973, %v2209
        %v2359 = vadd.f32 %v1974, %v2213
        %v2360 = vadd.f32 %v1975, %v2215
        %v2361 = vadd.f32 %v1976, %v2219
        %v2362 = vadd.f32 %v1977, %v2221
        %v2363 = vadd.f32 %v1978, %v2225
        %v2364 = vadd.f32 %v1979, %v2227
        %v2365 = vadd.f32 %v1980, %v2231
        %v2366 = vadd.f32 %v1981, %v2233
        %v2367 = vadd.f32 %v1982, %v2237
        %v2368 = vadd.f32 %v1983, %v2239
        %v2369 = vadd.f32 %v1984, %v2243
        %v2370 = vadd.f32 %v1985, %v2245
        %v2371 = vadd.f32 %v1986, %v2249
        %v2372 = vadd.f32 %v1987, %v2251
        %v2373 = vadd.f32 %v1988, %v2255
        %v2374 = vadd.f32 %v1989, %v2257
        %v2375 = vadd.f32 %v1990, %v2261
        %v2376 = vadd.f32 %v1991, %v2263
        %v2377 = vadd.f32 %v1992, %v2267
        %v2378 = vadd.f32 %v1993, %v2269
        %v2379 = vadd.f32 %v1994, %v2273
        %v2380 = vadd.f32 %v1995, %v2275
        %v2381 = vadd.f32 %v1996, %v2279
        %v2382 = vadd.f32 %v1997, %v2281
        %v2383 = vadd.f32 %v1998, %v2285
        %v2384 = vadd.f32 %v1999, %v2287
        %v2385 = vadd.f32 %v2000, %v2291
        %v2386 = vadd.f32 %v2001, %v2293
        %v2387 = vadd.f32 %v2002, %v2297
        %v2388 = vadd.f32 %v2003, %v2299
        %v2389 = vadd.f32 %v2004, %v2303
        %v2390 = vadd.f32 %v2005, %v2305
        %v2391 = vadd.f32 %v2006, %v2309
        %v2392 = vadd.f32 %v2007, %v2311
        %v2393 = vadd.f32 %v2008, %v2315
        %v2394 = vadd.f32 %v2009, %v2317
        %v2395 = vadd.f32 %v2010, %v2321
        %v2396 = vadd.f32 %v2011, %v2323
        %v2397 = vadd.f32 %v2012, %v2327
        %v2398 = vadd.f32 %v2013, %v2329
        %v2399 = vadd.f32 %v2014, %v2333
        %v2400 = vadd.f32 %v2015, %v2335
        %2401 = vst [vmem:[#allocation2] sm:$0xff] %v2337
        %2402 = vst.msk [vmem:[#allocation2 + $0x8] sm:$0xff] %vm702, %v2338
        %2403 = vst [vmem:[#allocation2 + $0x10] sm:$0xff] %v2339
        %2404 = vst.msk [vmem:[#allocation2 + $0x18] sm:$0xff] %vm702, %v2340
        %2405 = vst [vmem:[#allocation2 + $0x20] sm:$0xff] %v2341
        %2406 = vst.msk [vmem:[#allocation2 + $0x28] sm:$0xff] %vm702, %v2342
        %2407 = vst [vmem:[#allocation2 + $0x30] sm:$0xff] %v2343
        %2408 = vst.msk [vmem:[#allocation2 + $0x38] sm:$0xff] %vm702, %v2344
        %2409 = vst [vmem:[#allocation2 + $0x40] sm:$0xff] %v2345
        %2410 = vst.msk [vmem:[#allocation2 + $0x48] sm:$0xff] %vm702, %v2346
        %2411 = vst [vmem:[#allocation2 + $0x50] sm:$0xff] %v2347
        %2412 = vst.msk [vmem:[#allocation2 + $0x58] sm:$0xff] %vm702, %v2348
        %2413 = vst [vmem:[#allocation2 + $0x60] sm:$0xff] %v2349
        %2414 = vst.msk [vmem:[#allocation2 + $0x68] sm:$0xff] %vm702, %v2350
        %2415 = vst [vmem:[#allocation2 + $0x70] sm:$0xff] %v2351
        %2416 = vst.msk [vmem:[#allocation2 + $0x78] sm:$0xff] %vm702, %v2352
        %2417 = vst [vmem:[#allocation2 + $0x80] sm:$0xff] %v2353
        %2418 = vst.msk [vmem:[#allocation2 + $0x88] sm:$0xff] %vm702, %v2354
        %2419 = vst [vmem:[#allocation2 + $0x90] sm:$0xff] %v2355
        %2420 = vst.msk [vmem:[#allocation2 + $0x98] sm:$0xff] %vm702, %v2356
        %2421 = vst [vmem:[#allocation2 + $0xa0] sm:$0xff] %v2357
        %2422 = vst.msk [vmem:[#allocation2 + $0xa8] sm:$0xff] %vm702, %v2358
        %2423 = vst [vmem:[#allocation2 + $0xb0] sm:$0xff] %v2359
        %2424 = vst.msk [vmem:[#allocation2 + $0xb8] sm:$0xff] %vm702, %v2360
        %2425 = vst [vmem:[#allocation2 + $0xc0] sm:$0xff] %v2361
        %2426 = vst.msk [vmem:[#allocation2 + $0xc8] sm:$0xff] %vm702, %v2362
        %2427 = vst [vmem:[#allocation2 + $0xd0] sm:$0xff] %v2363
        %2428 = vst.msk [vmem:[#allocation2 + $0xd8] sm:$0xff] %vm702, %v2364
        %2429 = vst [vmem:[#allocation2 + $0xe0] sm:$0xff] %v2365
        %2430 = vst.msk [vmem:[#allocation2 + $0xe8] sm:$0xff] %vm702, %v2366
        %2431 = vst [vmem:[#allocation2 + $0xf0] sm:$0xff] %v2367
        %2432 = vst.msk [vmem:[#allocation2 + $0xf8] sm:$0xff] %vm702, %v2368
        %2433 = vst [vmem:[#allocation2 + $0x100] sm:$0xff] %v2369
        %2434 = vst.msk [vmem:[#allocation2 + $0x108] sm:$0xff] %vm702, %v2370
        %2435 = vst [vmem:[#allocation2 + $0x110] sm:$0xff] %v2371
        %2436 = vst.msk [vmem:[#allocation2 + $0x118] sm:$0xff] %vm702, %v2372
        %2437 = vst [vmem:[#allocation2 + $0x120] sm:$0xff] %v2373
        %2438 = vst.msk [vmem:[#allocation2 + $0x128] sm:$0xff] %vm702, %v2374
        %2439 = vst [vmem:[#allocation2 + $0x130] sm:$0xff] %v2375
        %2440 = vst.msk [vmem:[#allocation2 + $0x138] sm:$0xff] %vm702, %v2376
        %2441 = vst [vmem:[#allocation2 + $0x140] sm:$0xff] %v2377
        %2442 = vst.msk [vmem:[#allocation2 + $0x148] sm:$0xff] %vm702, %v2378
        %2443 = vst [vmem:[#allocation2 + $0x150] sm:$0xff] %v2379
        %2444 = vst.msk [vmem:[#allocation2 + $0x158] sm:$0xff] %vm702, %v2380
        %2445 = vst [vmem:[#allocation2 + $0x160] sm:$0xff] %v2381
        %2446 = vst.msk [vmem:[#allocation2 + $0x168] sm:$0xff] %vm702, %v2382
        %2447 = vst [vmem:[#allocation2 + $0x170] sm:$0xff] %v2383
        %2448 = vst.msk [vmem:[#allocation2 + $0x178] sm:$0xff] %vm702, %v2384
        %2449 = vst [vmem:[#allocation2 + $0x180] sm:$0xff] %v2385
        %2450 = vst.msk [vmem:[#allocation2 + $0x188] sm:$0xff] %vm702, %v2386
        %2451 = vst [vmem:[#allocation2 + $0x190] sm:$0xff] %v2387
        %2452 = vst.msk [vmem:[#allocation2 + $0x198] sm:$0xff] %vm702, %v2388
        %2453 = vst [vmem:[#allocation2 + $0x1a0] sm:$0xff] %v2389
        %2454 = vst.msk [vmem:[#allocation2 + $0x1a8] sm:$0xff] %vm702, %v2390
        %2455 = vst [vmem:[#allocation2 + $0x1b0] sm:$0xff] %v2391
        %2456 = vst.msk [vmem:[#allocation2 + $0x1b8] sm:$0xff] %vm702, %v2392
        %2457 = vst [vmem:[#allocation2 + $0x1c0] sm:$0xff] %v2393
        %2458 = vst.msk [vmem:[#allocation2 + $0x1c8] sm:$0xff] %vm702, %v2394
        %2459 = vst [vmem:[#allocation2 + $0x1d0] sm:$0xff] %v2395
        %2460 = vst.msk [vmem:[#allocation2 + $0x1d8] sm:$0xff] %vm702, %v2396
        %2461 = vst [vmem:[#allocation2 + $0x1e0] sm:$0xff] %v2397
        %2462 = vst.msk [vmem:[#allocation2 + $0x1e8] sm:$0xff] %vm702, %v2398
        %2463 = vst [vmem:[#allocation2 + $0x1f0] sm:$0xff] %v2399
        %2464 = vst.msk [vmem:[#allocation2 + $0x1f8] sm:$0xff] %vm702, %v2400
        %p2465 = scmp.eq.s32.totalorder %s18, 3
        // Predicated region
        $region76: #{tpu_custom_call.1} parent=66 // pred_check
          %p2466 = pneg %p2465
        $region77: #{tpu_custom_call.1} parent=66 // pred_check_branch
          %2468 = sbr.rel (%p2466) target = $region79
        $region78: #{tpu_custom_call.1} parent=66 // pred_region
          %v2469 = vld [vmem:[#allocation2] sm:$0xff]
          %v2470 = vld [vmem:[#allocation2 + $0x8] sm:$0xff]
          %v2471 = vld [vmem:[#allocation2 + $0x10] sm:$0xff]
          %v2472 = vld [vmem:[#allocation2 + $0x18] sm:$0xff]
          %v2473 = vld [vmem:[#allocation2 + $0x20] sm:$0xff]
          %v2474 = vld [vmem:[#allocation2 + $0x28] sm:$0xff]
          %v2475 = vld [vmem:[#allocation2 + $0x30] sm:$0xff]
          %v2476 = vld [vmem:[#allocation2 + $0x38] sm:$0xff]
          %v2477 = vld [vmem:[#allocation2 + $0x40] sm:$0xff]
          %v2478 = vld [vmem:[#allocation2 + $0x48] sm:$0xff]
          %v2479 = vld [vmem:[#allocation2 + $0x50] sm:$0xff]
          %v2480 = vld [vmem:[#allocation2 + $0x58] sm:$0xff]
          %v2481 = vld [vmem:[#allocation2 + $0x60] sm:$0xff]
          %v2482 = vld [vmem:[#allocation2 + $0x68] sm:$0xff]
          %v2483 = vld [vmem:[#allocation2 + $0x70] sm:$0xff]
          %v2484 = vld [vmem:[#allocation2 + $0x78] sm:$0xff]
          %v2485 = vld [vmem:[#allocation2 + $0x80] sm:$0xff]
          %v2486 = vld [vmem:[#allocation2 + $0x88] sm:$0xff]
          %v2487 = vld [vmem:[#allocation2 + $0x90] sm:$0xff]
          %v2488 = vld [vmem:[#allocation2 + $0x98] sm:$0xff]
          %v2489 = vld [vmem:[#allocation2 + $0xa0] sm:$0xff]
          %v2490 = vld [vmem:[#allocation2 + $0xa8] sm:$0xff]
          %v2491 = vld [vmem:[#allocation2 + $0xb0] sm:$0xff]
          %v2492 = vld [vmem:[#allocation2 + $0xb8] sm:$0xff]
          %v2493 = vld [vmem:[#allocation2 + $0xc0] sm:$0xff]
          %v2494 = vld [vmem:[#allocation2 + $0xc8] sm:$0xff]
          %v2495 = vld [vmem:[#allocation2 + $0xd0] sm:$0xff]
          %v2496 = vld [vmem:[#allocation2 + $0xd8] sm:$0xff]
          %v2497 = vld [vmem:[#allocation2 + $0xe0] sm:$0xff]
          %v2498 = vld [vmem:[#allocation2 + $0xe8] sm:$0xff]
          %v2499 = vld [vmem:[#allocation2 + $0xf0] sm:$0xff]
          %v2500 = vld [vmem:[#allocation2 + $0xf8] sm:$0xff]
          %v2501 = vld [vmem:[#allocation2 + $0x100] sm:$0xff]
          %v2502 = vld [vmem:[#allocation2 + $0x108] sm:$0xff]
          %v2503 = vld [vmem:[#allocation2 + $0x110] sm:$0xff]
          %v2504 = vld [vmem:[#allocation2 + $0x118] sm:$0xff]
          %v2505 = vld [vmem:[#allocation2 + $0x120] sm:$0xff]
          %v2506 = vld [vmem:[#allocation2 + $0x128] sm:$0xff]
          %v2507 = vld [vmem:[#allocation2 + $0x130] sm:$0xff]
          %v2508 = vld [vmem:[#allocation2 + $0x138] sm:$0xff]
          %v2509 = vld [vmem:[#allocation2 + $0x140] sm:$0xff]
          %v2510 = vld [vmem:[#allocation2 + $0x148] sm:$0xff]
          %v2511 = vld [vmem:[#allocation2 + $0x150] sm:$0xff]
          %v2512 = vld [vmem:[#allocation2 + $0x158] sm:$0xff]
          %v2513 = vld [vmem:[#allocation2 + $0x160] sm:$0xff]
          %v2514 = vld [vmem:[#allocation2 + $0x168] sm:$0xff]
          %v2515 = vld [vmem:[#allocation2 + $0x170] sm:$0xff]
          %v2516 = vld [vmem:[#allocation2 + $0x178] sm:$0xff]
          %v2517 = vld [vmem:[#allocation2 + $0x180] sm:$0xff]
          %v2518 = vld [vmem:[#allocation2 + $0x188] sm:$0xff]
          %v2519 = vld [vmem:[#allocation2 + $0x190] sm:$0xff]
          %v2520 = vld [vmem:[#allocation2 + $0x198] sm:$0xff]
          %v2521 = vld [vmem:[#allocation2 + $0x1a0] sm:$0xff]
          %v2522 = vld [vmem:[#allocation2 + $0x1a8] sm:$0xff]
          %v2523 = vld [vmem:[#allocation2 + $0x1b0] sm:$0xff]
          %v2524 = vld [vmem:[#allocation2 + $0x1b8] sm:$0xff]
          %v2525 = vld [vmem:[#allocation2 + $0x1c0] sm:$0xff]
          %v2526 = vld [vmem:[#allocation2 + $0x1c8] sm:$0xff]
          %v2527 = vld [vmem:[#allocation2 + $0x1d0] sm:$0xff]
          %v2528 = vld [vmem:[#allocation2 + $0x1d8] sm:$0xff]
          %v2529 = vld [vmem:[#allocation2 + $0x1e0] sm:$0xff]
          %v2530 = vld [vmem:[#allocation2 + $0x1e8] sm:$0xff]
          %v2531 = vld [vmem:[#allocation2 + $0x1f0] sm:$0xff]
          %v2532 = vld [vmem:[#allocation2 + $0x1f8] sm:$0xff]
          %v2533 = vsel %vm702, %v2470, 0.0
          %v2534 = vadd.f32 %v2469, %v2533
          %2535 = vadd.xlane.f32.xlu0 %v2534
          %v2536 = vpop.xlane.xlu0 %2535
          %v2537 = vsel %vm702, %v2472, 0.0
          %v2538 = vadd.f32 %v2471, %v2537
          %2539 = vadd.xlane.f32.xlu0 %v2538
          %v2540 = vpop.xlane.xlu0 %2539
          %v2541 = vsel %vm702, %v2474, 0.0
          %v2542 = vadd.f32 %v2473, %v2541
          %2543 = vadd.xlane.f32.xlu0 %v2542
          %v2544 = vpop.xlane.xlu0 %2543
          %v2545 = vsel %vm702, %v2476, 0.0
          %v2546 = vadd.f32 %v2475, %v2545
          %2547 = vadd.xlane.f32.xlu0 %v2546
          %v2548 = vpop.xlane.xlu0 %2547
          %v2549 = vsel %vm702, %v2478, 0.0
          %v2550 = vadd.f32 %v2477, %v2549
          %2551 = vadd.xlane.f32.xlu0 %v2550
          %v2552 = vpop.xlane.xlu0 %2551
          %v2553 = vsel %vm702, %v2480, 0.0
          %v2554 = vadd.f32 %v2479, %v2553
          %2555 = vadd.xlane.f32.xlu0 %v2554
          %v2556 = vpop.xlane.xlu0 %2555
          %v2557 = vsel %vm702, %v2482, 0.0
          %v2558 = vadd.f32 %v2481, %v2557
          %2559 = vadd.xlane.f32.xlu0 %v2558
          %v2560 = vpop.xlane.xlu0 %2559
          %v2561 = vsel %vm702, %v2484, 0.0
          %v2562 = vadd.f32 %v2483, %v2561
          %2563 = vadd.xlane.f32.xlu0 %v2562
          %v2564 = vpop.xlane.xlu0 %2563
          %v2565 = vsel %vm702, %v2486, 0.0
          %v2566 = vadd.f32 %v2485, %v2565
          %2567 = vadd.xlane.f32.xlu0 %v2566
          %v2568 = vpop.xlane.xlu0 %2567
          %v2569 = vsel %vm702, %v2488, 0.0
          %v2570 = vadd.f32 %v2487, %v2569
          %2571 = vadd.xlane.f32.xlu0 %v2570
          %v2572 = vpop.xlane.xlu0 %2571
          %v2573 = vsel %vm702, %v2490, 0.0
          %v2574 = vadd.f32 %v2489, %v2573
          %2575 = vadd.xlane.f32.xlu0 %v2574
          %v2576 = vpop.xlane.xlu0 %2575
          %v2577 = vsel %vm702, %v2492, 0.0
          %v2578 = vadd.f32 %v2491, %v2577
          %2579 = vadd.xlane.f32.xlu0 %v2578
          %v2580 = vpop.xlane.xlu0 %2579
          %v2581 = vsel %vm702, %v2494, 0.0
          %v2582 = vadd.f32 %v2493, %v2581
          %2583 = vadd.xlane.f32.xlu0 %v2582
          %v2584 = vpop.xlane.xlu0 %2583
          %v2585 = vsel %vm702, %v2496, 0.0
          %v2586 = vadd.f32 %v2495, %v2585
          %2587 = vadd.xlane.f32.xlu0 %v2586
          %v2588 = vpop.xlane.xlu0 %2587
          %v2589 = vsel %vm702, %v2498, 0.0
          %v2590 = vadd.f32 %v2497, %v2589
          %2591 = vadd.xlane.f32.xlu0 %v2590
          %v2592 = vpop.xlane.xlu0 %2591
          %v2593 = vsel %vm702, %v2500, 0.0
          %v2594 = vadd.f32 %v2499, %v2593
          %2595 = vadd.xlane.f32.xlu0 %v2594
          %v2596 = vpop.xlane.xlu0 %2595
          %v2597 = vsel %vm702, %v2502, 0.0
          %v2598 = vadd.f32 %v2501, %v2597
          %2599 = vadd.xlane.f32.xlu0 %v2598
          %v2600 = vpop.xlane.xlu0 %2599
          %v2601 = vsel %vm702, %v2504, 0.0
          %v2602 = vadd.f32 %v2503, %v2601
          %2603 = vadd.xlane.f32.xlu0 %v2602
          %v2604 = vpop.xlane.xlu0 %2603
          %v2605 = vsel %vm702, %v2506, 0.0
          %v2606 = vadd.f32 %v2505, %v2605
          %2607 = vadd.xlane.f32.xlu0 %v2606
          %v2608 = vpop.xlane.xlu0 %2607
          %v2609 = vsel %vm702, %v2508, 0.0
          %v2610 = vadd.f32 %v2507, %v2609
          %2611 = vadd.xlane.f32.xlu0 %v2610
          %v2612 = vpop.xlane.xlu0 %2611
          %v2613 = vsel %vm702, %v2510, 0.0
          %v2614 = vadd.f32 %v2509, %v2613
          %2615 = vadd.xlane.f32.xlu0 %v2614
          %v2616 = vpop.xlane.xlu0 %2615
          %v2617 = vsel %vm702, %v2512, 0.0
          %v2618 = vadd.f32 %v2511, %v2617
          %2619 = vadd.xlane.f32.xlu0 %v2618
          %v2620 = vpop.xlane.xlu0 %2619
          %v2621 = vsel %vm702, %v2514, 0.0
          %v2622 = vadd.f32 %v2513, %v2621
          %2623 = vadd.xlane.f32.xlu0 %v2622
          %v2624 = vpop.xlane.xlu0 %2623
          %v2625 = vsel %vm702, %v2516, 0.0
          %v2626 = vadd.f32 %v2515, %v2625
          %2627 = vadd.xlane.f32.xlu0 %v2626
          %v2628 = vpop.xlane.xlu0 %2627
          %v2629 = vsel %vm702, %v2518, 0.0
          %v2630 = vadd.f32 %v2517, %v2629
          %2631 = vadd.xlane.f32.xlu0 %v2630
          %v2632 = vpop.xlane.xlu0 %2631
          %v2633 = vsel %vm702, %v2520, 0.0
          %v2634 = vadd.f32 %v2519, %v2633
          %2635 = vadd.xlane.f32.xlu0 %v2634
          %v2636 = vpop.xlane.xlu0 %2635
          %v2637 = vsel %vm702, %v2522, 0.0
          %v2638 = vadd.f32 %v2521, %v2637
          %2639 = vadd.xlane.f32.xlu0 %v2638
          %v2640 = vpop.xlane.xlu0 %2639
          %v2641 = vsel %vm702, %v2524, 0.0
          %v2642 = vadd.f32 %v2523, %v2641
          %2643 = vadd.xlane.f32.xlu0 %v2642
          %v2644 = vpop.xlane.xlu0 %2643
          %v2645 = vsel %vm702, %v2526, 0.0
          %v2646 = vadd.f32 %v2525, %v2645
          %2647 = vadd.xlane.f32.xlu0 %v2646
          %v2648 = vpop.xlane.xlu0 %2647
          %v2649 = vsel %vm702, %v2528, 0.0
          %v2650 = vadd.f32 %v2527, %v2649
          %2651 = vadd.xlane.f32.xlu0 %v2650
          %v2652 = vpop.xlane.xlu0 %2651
          %v2653 = vsel %vm702, %v2530, 0.0
          %v2654 = vadd.f32 %v2529, %v2653
          %2655 = vadd.xlane.f32.xlu0 %v2654
          %v2656 = vpop.xlane.xlu0 %2655
          %v2657 = vsel %vm702, %v2532, 0.0
          %v2658 = vadd.f32 %v2531, %v2657
          %2659 = vadd.xlane.f32.xlu0 %v2658
          %v2660 = vpop.xlane.xlu0 %2659
          %v2661 = vmul.f32 %v2536, %v831
          %v2662 = vmul.f32 %v2540, %v831
          %v2663 = vmul.f32 %v2544, %v831
          %v2664 = vmul.f32 %v2548, %v831
          %v2665 = vmul.f32 %v2552, %v831
          %v2666 = vmul.f32 %v2556, %v831
          %v2667 = vmul.f32 %v2560, %v831
          %v2668 = vmul.f32 %v2564, %v831
          %v2669 = vmul.f32 %v2568, %v831
          %v2670 = vmul.f32 %v2572, %v831
          %v2671 = vmul.f32 %v2576, %v831
          %v2672 = vmul.f32 %v2580, %v831
          %v2673 = vmul.f32 %v2584, %v831
          %v2674 = vmul.f32 %v2588, %v831
          %v2675 = vmul.f32 %v2592, %v831
          %v2676 = vmul.f32 %v2596, %v831
          %v2677 = vmul.f32 %v2600, %v831
          %v2678 = vmul.f32 %v2604, %v831
          %v2679 = vmul.f32 %v2608, %v831
          %v2680 = vmul.f32 %v2612, %v831
          %v2681 = vmul.f32 %v2616, %v831
          %v2682 = vmul.f32 %v2620, %v831
          %v2683 = vmul.f32 %v2624, %v831
          %v2684 = vmul.f32 %v2628, %v831
          %v2685 = vmul.f32 %v2632, %v831
          %v2686 = vmul.f32 %v2636, %v831
          %v2687 = vmul.f32 %v2640, %v831
          %v2688 = vmul.f32 %v2644, %v831
          %v2689 = vmul.f32 %v2648, %v831
          %v2690 = vmul.f32 %v2652, %v831
          %v2691 = vmul.f32 %v2656, %v831
          %v2692 = vmul.f32 %v2660, %v831
          %v2693 = vsub.f32 %v2469, %v2661
          %v2694 = vsub.f32 %v2470, %v2661
          %v2695 = vsub.f32 %v2471, %v2662
          %v2696 = vsub.f32 %v2472, %v2662
          %v2697 = vsub.f32 %v2473, %v2663
          %v2698 = vsub.f32 %v2474, %v2663
          %v2699 = vsub.f32 %v2475, %v2664
          %v2700 = vsub.f32 %v2476, %v2664
          %v2701 = vsub.f32 %v2477, %v2665
          %v2702 = vsub.f32 %v2478, %v2665
          %v2703 = vsub.f32 %v2479, %v2666
          %v2704 = vsub.f32 %v2480, %v2666
          %v2705 = vsub.f32 %v2481, %v2667
          %v2706 = vsub.f32 %v2482, %v2667
          %v2707 = vsub.f32 %v2483, %v2668
          %v2708 = vsub.f32 %v2484, %v2668
          %v2709 = vsub.f32 %v2485, %v2669
          %v2710 = vsub.f32 %v2486, %v2669
          %v2711 = vsub.f32 %v2487, %v2670
          %v2712 = vsub.f32 %v2488, %v2670
          %v2713 = vsub.f32 %v2489, %v2671
          %v2714 = vsub.f32 %v2490, %v2671
          %v2715 = vsub.f32 %v2491, %v2672
          %v2716 = vsub.f32 %v2492, %v2672
          %v2717 = vsub.f32 %v2493, %v2673
          %v2718 = vsub.f32 %v2494, %v2673
          %v2719 = vsub.f32 %v2495, %v2674
          %v2720 = vsub.f32 %v2496, %v2674
          %v2721 = vsub.f32 %v2497, %v2675
          %v2722 = vsub.f32 %v2498, %v2675
          %v2723 = vsub.f32 %v2499, %v2676
          %v2724 = vsub.f32 %v2500, %v2676
          %v2725 = vsub.f32 %v2501, %v2677
          %v2726 = vsub.f32 %v2502, %v2677
          %v2727 = vsub.f32 %v2503, %v2678
          %v2728 = vsub.f32 %v2504, %v2678
          %v2729 = vsub.f32 %v2505, %v2679
          %v2730 = vsub.f32 %v2506, %v2679
          %v2731 = vsub.f32 %v2507, %v2680
          %v2732 = vsub.f32 %v2508, %v2680
          %v2733 = vsub.f32 %v2509, %v2681
          %v2734 = vsub.f32 %v2510, %v2681
          %v2735 = vsub.f32 %v2511, %v2682
          %v2736 = vsub.f32 %v2512, %v2682
          %v2737 = vsub.f32 %v2513, %v2683
          %v2738 = vsub.f32 %v2514, %v2683
          %v2739 = vsub.f32 %v2515, %v2684
          %v2740 = vsub.f32 %v2516, %v2684
          %v2741 = vsub.f32 %v2517, %v2685
          %v2742 = vsub.f32 %v2518, %v2685
          %v2743 = vsub.f32 %v2519, %v2686
          %v2744 = vsub.f32 %v2520, %v2686
          %v2745 = vsub.f32 %v2521, %v2687
          %v2746 = vsub.f32 %v2522, %v2687
          %v2747 = vsub.f32 %v2523, %v2688
          %v2748 = vsub.f32 %v2524, %v2688
          %v2749 = vsub.f32 %v2525, %v2689
          %v2750 = vsub.f32 %v2526, %v2689
          %v2751 = vsub.f32 %v2527, %v2690
          %v2752 = vsub.f32 %v2528, %v2690
          %v2753 = vsub.f32 %v2529, %v2691
          %v2754 = vsub.f32 %v2530, %v2691
          %v2755 = vsub.f32 %v2531, %v2692
          %v2756 = vsub.f32 %v2532, %v2692
          %v2757 = vmul.f32 %v2693, %v2693
          %v2758 = vmul.f32 %v2694, %v2694
          %v2759 = vmul.f32 %v2695, %v2695
          %v2760 = vmul.f32 %v2696, %v2696
          %v2761 = vmul.f32 %v2697, %v2697
          %v2762 = vmul.f32 %v2698, %v2698
          %v2763 = vmul.f32 %v2699, %v2699
          %v2764 = vmul.f32 %v2700, %v2700
          %v2765 = vmul.f32 %v2701, %v2701
          %v2766 = vmul.f32 %v2702, %v2702
          %v2767 = vmul.f32 %v2703, %v2703
          %v2768 = vmul.f32 %v2704, %v2704
          %v2769 = vmul.f32 %v2705, %v2705
          %v2770 = vmul.f32 %v2706, %v2706
          %v2771 = vmul.f32 %v2707, %v2707
          %v2772 = vmul.f32 %v2708, %v2708
          %v2773 = vmul.f32 %v2709, %v2709
          %v2774 = vmul.f32 %v2710, %v2710
          %v2775 = vmul.f32 %v2711, %v2711
          %v2776 = vmul.f32 %v2712, %v2712
          %v2777 = vmul.f32 %v2713, %v2713
          %v2778 = vmul.f32 %v2714, %v2714
          %v2779 = vmul.f32 %v2715, %v2715
          %v2780 = vmul.f32 %v2716, %v2716
          %v2781 = vmul.f32 %v2717, %v2717
          %v2782 = vmul.f32 %v2718, %v2718
          %v2783 = vmul.f32 %v2719, %v2719
          %v2784 = vmul.f32 %v2720, %v2720
          %v2785 = vmul.f32 %v2721, %v2721
          %v2786 = vmul.f32 %v2722, %v2722
          %v2787 = vmul.f32 %v2723, %v2723
          %v2788 = vmul.f32 %v2724, %v2724
          %v2789 = vmul.f32 %v2725, %v2725
          %v2790 = vmul.f32 %v2726, %v2726
          %v2791 = vmul.f32 %v2727, %v2727
          %v2792 = vmul.f32 %v2728, %v2728
          %v2793 = vmul.f32 %v2729, %v2729
          %v2794 = vmul.f32 %v2730, %v2730
          %v2795 = vmul.f32 %v2731, %v2731
          %v2796 = vmul.f32 %v2732, %v2732
          %v2797 = vmul.f32 %v2733, %v2733
          %v2798 = vmul.f32 %v2734, %v2734
          %v2799 = vmul.f32 %v2735, %v2735
          %v2800 = vmul.f32 %v2736, %v2736
          %v2801 = vmul.f32 %v2737, %v2737
          %v2802 = vmul.f32 %v2738, %v2738
          %v2803 = vmul.f32 %v2739, %v2739
          %v2804 = vmul.f32 %v2740, %v2740
          %v2805 = vmul.f32 %v2741, %v2741
          %v2806 = vmul.f32 %v2742, %v2742
          %v2807 = vmul.f32 %v2743, %v2743
          %v2808 = vmul.f32 %v2744, %v2744
          %v2809 = vmul.f32 %v2745, %v2745
          %v2810 = vmul.f32 %v2746, %v2746
          %v2811 = vmul.f32 %v2747, %v2747
          %v2812 = vmul.f32 %v2748, %v2748
          %v2813 = vmul.f32 %v2749, %v2749
          %v2814 = vmul.f32 %v2750, %v2750
          %v2815 = vmul.f32 %v2751, %v2751
          %v2816 = vmul.f32 %v2752, %v2752
          %v2817 = vmul.f32 %v2753, %v2753
          %v2818 = vmul.f32 %v2754, %v2754
          %v2819 = vmul.f32 %v2755, %v2755
          %v2820 = vmul.f32 %v2756, %v2756
          %v2821 = vsel %vm702, %v2758, 0.0
          %v2822 = vadd.f32 %v2757, %v2821
          %2823 = vadd.xlane.f32.xlu0 %v2822
          %v2824 = vpop.xlane.xlu0 %2823
          %v2825 = vsel %vm702, %v2760, 0.0
          %v2826 = vadd.f32 %v2759, %v2825
          %2827 = vadd.xlane.f32.xlu0 %v2826
          %v2828 = vpop.xlane.xlu0 %2827
          %v2829 = vsel %vm702, %v2762, 0.0
          %v2830 = vadd.f32 %v2761, %v2829
          %2831 = vadd.xlane.f32.xlu0 %v2830
          %v2832 = vpop.xlane.xlu0 %2831
          %v2833 = vsel %vm702, %v2764, 0.0
          %v2834 = vadd.f32 %v2763, %v2833
          %2835 = vadd.xlane.f32.xlu0 %v2834
          %v2836 = vpop.xlane.xlu0 %2835
          %v2837 = vsel %vm702, %v2766, 0.0
          %v2838 = vadd.f32 %v2765, %v2837
          %2839 = vadd.xlane.f32.xlu0 %v2838
          %v2840 = vpop.xlane.xlu0 %2839
          %v2841 = vsel %vm702, %v2768, 0.0
          %v2842 = vadd.f32 %v2767, %v2841
          %2843 = vadd.xlane.f32.xlu0 %v2842
          %v2844 = vpop.xlane.xlu0 %2843
          %v2845 = vsel %vm702, %v2770, 0.0
          %v2846 = vadd.f32 %v2769, %v2845
          %2847 = vadd.xlane.f32.xlu0 %v2846
          %v2848 = vpop.xlane.xlu0 %2847
          %v2849 = vsel %vm702, %v2772, 0.0
          %v2850 = vadd.f32 %v2771, %v2849
          %2851 = vadd.xlane.f32.xlu0 %v2850
          %v2852 = vpop.xlane.xlu0 %2851
          %v2853 = vsel %vm702, %v2774, 0.0
          %v2854 = vadd.f32 %v2773, %v2853
          %2855 = vadd.xlane.f32.xlu0 %v2854
          %v2856 = vpop.xlane.xlu0 %2855
          %v2857 = vsel %vm702, %v2776, 0.0
          %v2858 = vadd.f32 %v2775, %v2857
          %2859 = vadd.xlane.f32.xlu0 %v2858
          %v2860 = vpop.xlane.xlu0 %2859
          %v2861 = vsel %vm702, %v2778, 0.0
          %v2862 = vadd.f32 %v2777, %v2861
          %2863 = vadd.xlane.f32.xlu0 %v2862
          %v2864 = vpop.xlane.xlu0 %2863
          %v2865 = vsel %vm702, %v2780, 0.0
          %v2866 = vadd.f32 %v2779, %v2865
          %2867 = vadd.xlane.f32.xlu0 %v2866
          %v2868 = vpop.xlane.xlu0 %2867
          %v2869 = vsel %vm702, %v2782, 0.0
          %v2870 = vadd.f32 %v2781, %v2869
          %2871 = vadd.xlane.f32.xlu0 %v2870
          %v2872 = vpop.xlane.xlu0 %2871
          %v2873 = vsel %vm702, %v2784, 0.0
          %v2874 = vadd.f32 %v2783, %v2873
          %2875 = vadd.xlane.f32.xlu0 %v2874
          %v2876 = vpop.xlane.xlu0 %2875
          %v2877 = vsel %vm702, %v2786, 0.0
          %v2878 = vadd.f32 %v2785, %v2877
          %2879 = vadd.xlane.f32.xlu0 %v2878
          %v2880 = vpop.xlane.xlu0 %2879
          %v2881 = vsel %vm702, %v2788, 0.0
          %v2882 = vadd.f32 %v2787, %v2881
          %2883 = vadd.xlane.f32.xlu0 %v2882
          %v2884 = vpop.xlane.xlu0 %2883
          %v2885 = vsel %vm702, %v2790, 0.0
          %v2886 = vadd.f32 %v2789, %v2885
          %2887 = vadd.xlane.f32.xlu0 %v2886
          %v2888 = vpop.xlane.xlu0 %2887
          %v2889 = vsel %vm702, %v2792, 0.0
          %v2890 = vadd.f32 %v2791, %v2889
          %2891 = vadd.xlane.f32.xlu0 %v2890
          %v2892 = vpop.xlane.xlu0 %2891
          %v2893 = vsel %vm702, %v2794, 0.0
          %v2894 = vadd.f32 %v2793, %v2893
          %2895 = vadd.xlane.f32.xlu0 %v2894
          %v2896 = vpop.xlane.xlu0 %2895
          %v2897 = vsel %vm702, %v2796, 0.0
          %v2898 = vadd.f32 %v2795, %v2897
          %2899 = vadd.xlane.f32.xlu0 %v2898
          %v2900 = vpop.xlane.xlu0 %2899
          %v2901 = vsel %vm702, %v2798, 0.0
          %v2902 = vadd.f32 %v2797, %v2901
          %2903 = vadd.xlane.f32.xlu0 %v2902
          %v2904 = vpop.xlane.xlu0 %2903
          %v2905 = vsel %vm702, %v2800, 0.0
          %v2906 = vadd.f32 %v2799, %v2905
          %2907 = vadd.xlane.f32.xlu0 %v2906
          %v2908 = vpop.xlane.xlu0 %2907
          %v2909 = vsel %vm702, %v2802, 0.0
          %v2910 = vadd.f32 %v2801, %v2909
          %2911 = vadd.xlane.f32.xlu0 %v2910
          %v2912 = vpop.xlane.xlu0 %2911
          %v2913 = vsel %vm702, %v2804, 0.0
          %v2914 = vadd.f32 %v2803, %v2913
          %2915 = vadd.xlane.f32.xlu0 %v2914
          %v2916 = vpop.xlane.xlu0 %2915
          %v2917 = vsel %vm702, %v2806, 0.0
          %v2918 = vadd.f32 %v2805, %v2917
          %2919 = vadd.xlane.f32.xlu0 %v2918
          %v2920 = vpop.xlane.xlu0 %2919
          %v2921 = vsel %vm702, %v2808, 0.0
          %v2922 = vadd.f32 %v2807, %v2921
          %2923 = vadd.xlane.f32.xlu0 %v2922
          %v2924 = vpop.xlane.xlu0 %2923
          %v2925 = vsel %vm702, %v2810, 0.0
          %v2926 = vadd.f32 %v2809, %v2925
          %2927 = vadd.xlane.f32.xlu0 %v2926
          %v2928 = vpop.xlane.xlu0 %2927
          %v2929 = vsel %vm702, %v2812, 0.0
          %v2930 = vadd.f32 %v2811, %v2929
          %2931 = vadd.xlane.f32.xlu0 %v2930
          %v2932 = vpop.xlane.xlu0 %2931
          %v2933 = vsel %vm702, %v2814, 0.0
          %v2934 = vadd.f32 %v2813, %v2933
          %2935 = vadd.xlane.f32.xlu0 %v2934
          %v2936 = vpop.xlane.xlu0 %2935
          %v2937 = vsel %vm702, %v2816, 0.0
          %v2938 = vadd.f32 %v2815, %v2937
          %2939 = vadd.xlane.f32.xlu0 %v2938
          %v2940 = vpop.xlane.xlu0 %2939
          %v2941 = vsel %vm702, %v2818, 0.0
          %v2942 = vadd.f32 %v2817, %v2941
          %2943 = vadd.xlane.f32.xlu0 %v2942
          %v2944 = vpop.xlane.xlu0 %2943
          %v2945 = vsel %vm702, %v2820, 0.0
          %v2946 = vadd.f32 %v2819, %v2945
          %2947 = vadd.xlane.f32.xlu0 %v2946
          %v2948 = vpop.xlane.xlu0 %2947
          %v2949 = vmul.f32 %v2824, %v831
          %v2950 = vmul.f32 %v2828, %v831
          %v2951 = vmul.f32 %v2832, %v831
          %v2952 = vmul.f32 %v2836, %v831
          %v2953 = vmul.f32 %v2840, %v831
          %v2954 = vmul.f32 %v2844, %v831
          %v2955 = vmul.f32 %v2848, %v831
          %v2956 = vmul.f32 %v2852, %v831
          %v2957 = vmul.f32 %v2856, %v831
          %v2958 = vmul.f32 %v2860, %v831
          %v2959 = vmul.f32 %v2864, %v831
          %v2960 = vmul.f32 %v2868, %v831
          %v2961 = vmul.f32 %v2872, %v831
          %v2962 = vmul.f32 %v2876, %v831
          %v2963 = vmul.f32 %v2880, %v831
          %v2964 = vmul.f32 %v2884, %v831
          %v2965 = vmul.f32 %v2888, %v831
          %v2966 = vmul.f32 %v2892, %v831
          %v2967 = vmul.f32 %v2896, %v831
          %v2968 = vmul.f32 %v2900, %v831
          %v2969 = vmul.f32 %v2904, %v831
          %v2970 = vmul.f32 %v2908, %v831
          %v2971 = vmul.f32 %v2912, %v831
          %v2972 = vmul.f32 %v2916, %v831
          %v2973 = vmul.f32 %v2920, %v831
          %v2974 = vmul.f32 %v2924, %v831
          %v2975 = vmul.f32 %v2928, %v831
          %v2976 = vmul.f32 %v2932, %v831
          %v2977 = vmul.f32 %v2936, %v831
          %v2978 = vmul.f32 %v2940, %v831
          %v2979 = vmul.f32 %v2944, %v831
          %v2980 = vmul.f32 %v2948, %v831
          %v2981 = vadd.f32 %v2949, 1e-05
          %v2982 = vadd.f32 %v2950, 1e-05
          %v2983 = vadd.f32 %v2951, 1e-05
          %v2984 = vadd.f32 %v2952, 1e-05
          %v2985 = vadd.f32 %v2953, 1e-05
          %v2986 = vadd.f32 %v2954, 1e-05
          %v2987 = vadd.f32 %v2955, 1e-05
          %v2988 = vadd.f32 %v2956, 1e-05
          %v2989 = vadd.f32 %v2957, 1e-05
          %v2990 = vadd.f32 %v2958, 1e-05
          %v2991 = vadd.f32 %v2959, 1e-05
          %v2992 = vadd.f32 %v2960, 1e-05
          %v2993 = vadd.f32 %v2961, 1e-05
          %v2994 = vadd.f32 %v2962, 1e-05
          %v2995 = vadd.f32 %v2963, 1e-05
          %v2996 = vadd.f32 %v2964, 1e-05
          %v2997 = vadd.f32 %v2965, 1e-05
          %v2998 = vadd.f32 %v2966, 1e-05
          %v2999 = vadd.f32 %v2967, 1e-05
          %v3000 = vadd.f32 %v2968, 1e-05
          %v3001 = vadd.f32 %v2969, 1e-05
          %v3002 = vadd.f32 %v2970, 1e-05
          %v3003 = vadd.f32 %v2971, 1e-05
          %v3004 = vadd.f32 %v2972, 1e-05
          %v3005 = vadd.f32 %v2973, 1e-05
          %v3006 = vadd.f32 %v2974, 1e-05
          %v3007 = vadd.f32 %v2975, 1e-05
          %v3008 = vadd.f32 %v2976, 1e-05
          %v3009 = vadd.f32 %v2977, 1e-05
          %v3010 = vadd.f32 %v2978, 1e-05
          %v3011 = vadd.f32 %v2979, 1e-05
          %v3012 = vadd.f32 %v2980, 1e-05
          %v3013 = vrsqrt.pop %v2981
          %v3014 = vrsqrt.pop %v2982
          %v3015 = vrsqrt.pop %v2983
          %v3016 = vrsqrt.pop %v2984
          %v3017 = vrsqrt.pop %v2985
          %v3018 = vrsqrt.pop %v2986
          %v3019 = vrsqrt.pop %v2987
          %v3020 = vrsqrt.pop %v2988
          %v3021 = vrsqrt.pop %v2989
          %v3022 = vrsqrt.pop %v2990
          %v3023 = vrsqrt.pop %v2991
          %v3024 = vrsqrt.pop %v2992
          %v3025 = vrsqrt.pop %v2993
          %v3026 = vrsqrt.pop %v2994
          %v3027 = vrsqrt.pop %v2995
          %v3028 = vrsqrt.pop %v2996
          %v3029 = vrsqrt.pop %v2997
          %v3030 = vrsqrt.pop %v2998
          %v3031 = vrsqrt.pop %v2999
          %v3032 = vrsqrt.pop %v3000
          %v3033 = vrsqrt.pop %v3001
          %v3034 = vrsqrt.pop %v3002
          %v3035 = vrsqrt.pop %v3003
          %v3036 = vrsqrt.pop %v3004
          %v3037 = vrsqrt.pop %v3005
          %v3038 = vrsqrt.pop %v3006
          %v3039 = vrsqrt.pop %v3007
          %v3040 = vrsqrt.pop %v3008
          %v3041 = vrsqrt.pop %v3009
          %v3042 = vrsqrt.pop %v3010
          %v3043 = vrsqrt.pop %v3011
          %v3044 = vrsqrt.pop %v3012
          %v3045 = vmul.f32 %v2693, %v3013
          %v3046 = vmul.f32 %v2694, %v3013
          %v3047 = vmul.f32 %v2695, %v3014
          %v3048 = vmul.f32 %v2696, %v3014
          %v3049 = vmul.f32 %v2697, %v3015
          %v3050 = vmul.f32 %v2698, %v3015
          %v3051 = vmul.f32 %v2699, %v3016
          %v3052 = vmul.f32 %v2700, %v3016
          %v3053 = vmul.f32 %v2701, %v3017
          %v3054 = vmul.f32 %v2702, %v3017
          %v3055 = vmul.f32 %v2703, %v3018
          %v3056 = vmul.f32 %v2704, %v3018
          %v3057 = vmul.f32 %v2705, %v3019
          %v3058 = vmul.f32 %v2706, %v3019
          %v3059 = vmul.f32 %v2707, %v3020
          %v3060 = vmul.f32 %v2708, %v3020
          %v3061 = vmul.f32 %v2709, %v3021
          %v3062 = vmul.f32 %v2710, %v3021
          %v3063 = vmul.f32 %v2711, %v3022
          %v3064 = vmul.f32 %v2712, %v3022
          %v3065 = vmul.f32 %v2713, %v3023
          %v3066 = vmul.f32 %v2714, %v3023
          %v3067 = vmul.f32 %v2715, %v3024
          %v3068 = vmul.f32 %v2716, %v3024
          %v3069 = vmul.f32 %v2717, %v3025
          %v3070 = vmul.f32 %v2718, %v3025
          %v3071 = vmul.f32 %v2719, %v3026
          %v3072 = vmul.f32 %v2720, %v3026
          %v3073 = vmul.f32 %v2721, %v3027
          %v3074 = vmul.f32 %v2722, %v3027
          %v3075 = vmul.f32 %v2723, %v3028
          %v3076 = vmul.f32 %v2724, %v3028
          %v3077 = vmul.f32 %v2725, %v3029
          %v3078 = vmul.f32 %v2726, %v3029
          %v3079 = vmul.f32 %v2727, %v3030
          %v3080 = vmul.f32 %v2728, %v3030
          %v3081 = vmul.f32 %v2729, %v3031
          %v3082 = vmul.f32 %v2730, %v3031
          %v3083 = vmul.f32 %v2731, %v3032
          %v3084 = vmul.f32 %v2732, %v3032
          %v3085 = vmul.f32 %v2733, %v3033
          %v3086 = vmul.f32 %v2734, %v3033
          %v3087 = vmul.f32 %v2735, %v3034
          %v3088 = vmul.f32 %v2736, %v3034
          %v3089 = vmul.f32 %v2737, %v3035
          %v3090 = vmul.f32 %v2738, %v3035
          %v3091 = vmul.f32 %v2739, %v3036
          %v3092 = vmul.f32 %v2740, %v3036
          %v3093 = vmul.f32 %v2741, %v3037
          %v3094 = vmul.f32 %v2742, %v3037
          %v3095 = vmul.f32 %v2743, %v3038
          %v3096 = vmul.f32 %v2744, %v3038
          %v3097 = vmul.f32 %v2745, %v3039
          %v3098 = vmul.f32 %v2746, %v3039
          %v3099 = vmul.f32 %v2747, %v3040
          %v3100 = vmul.f32 %v2748, %v3040
          %v3101 = vmul.f32 %v2749, %v3041
          %v3102 = vmul.f32 %v2750, %v3041
          %v3103 = vmul.f32 %v2751, %v3042
          %v3104 = vmul.f32 %v2752, %v3042
          %v3105 = vmul.f32 %v2753, %v3043
          %v3106 = vmul.f32 %v2754, %v3043
          %v3107 = vmul.f32 %v2755, %v3044
          %v3108 = vmul.f32 %v2756, %v3044
          %v3109 = vld [vmem:[%s5] sm:$0xff]
          %v3110 = vld [vmem:[%s5 + $0x8] sm:$0xff]
          %v3111 = vld [vmem:[%s5 + $0x10] sm:$0xff]
          %v3112 = vld [vmem:[%s5 + $0x18] sm:$0xff]
          %v3113 = vld [vmem:[%s5 + $0x20] sm:$0xff]
          %v3114 = vld [vmem:[%s5 + $0x28] sm:$0xff]
          %v3115 = vld [vmem:[%s5 + $0x30] sm:$0xff]
          %v3116 = vld [vmem:[%s5 + $0x38] sm:$0xff]
          %v3117 = vld [vmem:[%s5 + $0x40] sm:$0xff]
          %v3118 = vld [vmem:[%s5 + $0x48] sm:$0xff]
          %v3119 = vld [vmem:[%s5 + $0x50] sm:$0xff]
          %v3120 = vld [vmem:[%s5 + $0x58] sm:$0xff]
          %v3121 = vld [vmem:[%s5 + $0x60] sm:$0xff]
          %v3122 = vld [vmem:[%s5 + $0x68] sm:$0xff]
          %v3123 = vld [vmem:[%s5 + $0x70] sm:$0xff]
          %v3124 = vld [vmem:[%s5 + $0x78] sm:$0xff]
          %v3125 = vld [vmem:[%s5 + $0x80] sm:$0xff]
          %v3126 = vld [vmem:[%s5 + $0x88] sm:$0xff]
          %v3127 = vld [vmem:[%s5 + $0x90] sm:$0xff]
          %v3128 = vld [vmem:[%s5 + $0x98] sm:$0xff]
          %v3129 = vld [vmem:[%s5 + $0xa0] sm:$0xff]
          %v3130 = vld [vmem:[%s5 + $0xa8] sm:$0xff]
          %v3131 = vld [vmem:[%s5 + $0xb0] sm:$0xff]
          %v3132 = vld [vmem:[%s5 + $0xb8] sm:$0xff]
          %v3133 = vld [vmem:[%s5 + $0xc0] sm:$0xff]
          %v3134 = vld [vmem:[%s5 + $0xc8] sm:$0xff]
          %v3135 = vld [vmem:[%s5 + $0xd0] sm:$0xff]
          %v3136 = vld [vmem:[%s5 + $0xd8] sm:$0xff]
          %v3137 = vld [vmem:[%s5 + $0xe0] sm:$0xff]
          %v3138 = vld [vmem:[%s5 + $0xe8] sm:$0xff]
          %v3139 = vld [vmem:[%s5 + $0xf0] sm:$0xff]
          %v3140 = vld [vmem:[%s5 + $0xf8] sm:$0xff]
          %3142 = vset.pattern.permute.xlu0 0
          %3143 = vperm.xlu0 %3142, %v3109
          %v3144 = vpop.permute.xlu0 %3143
          %3147 = vset.pattern.permute.xlu0 0
          %3148 = vperm.xlu0 %3147, %v3110
          %v3149 = vpop.permute.xlu0 %3148
          %3152 = vset.pattern.permute.xlu0 0
          %3153 = vperm.xlu0 %3152, %v3111
          %v3154 = vpop.permute.xlu0 %3153
          %3157 = vset.pattern.permute.xlu0 0
          %3158 = vperm.xlu0 %3157, %v3112
          %v3159 = vpop.permute.xlu0 %3158
          %3162 = vset.pattern.permute.xlu0 0
          %3163 = vperm.xlu0 %3162, %v3113
          %v3164 = vpop.permute.xlu0 %3163
          %3167 = vset.pattern.permute.xlu0 0
          %3168 = vperm.xlu0 %3167, %v3114
          %v3169 = vpop.permute.xlu0 %3168
          %3172 = vset.pattern.permute.xlu0 0
          %3173 = vperm.xlu0 %3172, %v3115
          %v3174 = vpop.permute.xlu0 %3173
          %3177 = vset.pattern.permute.xlu0 0
          %3178 = vperm.xlu0 %3177, %v3116
          %v3179 = vpop.permute.xlu0 %3178
          %3182 = vset.pattern.permute.xlu0 0
          %3183 = vperm.xlu0 %3182, %v3117
          %v3184 = vpop.permute.xlu0 %3183
          %3187 = vset.pattern.permute.xlu0 0
          %3188 = vperm.xlu0 %3187, %v3118
          %v3189 = vpop.permute.xlu0 %3188
          %3192 = vset.pattern.permute.xlu0 0
          %3193 = vperm.xlu0 %3192, %v3119
          %v3194 = vpop.permute.xlu0 %3193
          %3197 = vset.pattern.permute.xlu0 0
          %3198 = vperm.xlu0 %3197, %v3120
          %v3199 = vpop.permute.xlu0 %3198
          %3202 = vset.pattern.permute.xlu0 0
          %3203 = vperm.xlu0 %3202, %v3121
          %v3204 = vpop.permute.xlu0 %3203
          %3207 = vset.pattern.permute.xlu0 0
          %3208 = vperm.xlu0 %3207, %v3122
          %v3209 = vpop.permute.xlu0 %3208
          %3212 = vset.pattern.permute.xlu0 0
          %3213 = vperm.xlu0 %3212, %v3123
          %v3214 = vpop.permute.xlu0 %3213
          %3217 = vset.pattern.permute.xlu0 0
          %3218 = vperm.xlu0 %3217, %v3124
          %v3219 = vpop.permute.xlu0 %3218
          %3222 = vset.pattern.permute.xlu0 0
          %3223 = vperm.xlu0 %3222, %v3125
          %v3224 = vpop.permute.xlu0 %3223
          %3227 = vset.pattern.permute.xlu0 0
          %3228 = vperm.xlu0 %3227, %v3126
          %v3229 = vpop.permute.xlu0 %3228
          %3232 = vset.pattern.permute.xlu0 0
          %3233 = vperm.xlu0 %3232, %v3127
          %v3234 = vpop.permute.xlu0 %3233
          %3237 = vset.pattern.permute.xlu0 0
          %3238 = vperm.xlu0 %3237, %v3128
          %v3239 = vpop.permute.xlu0 %3238
          %3242 = vset.pattern.permute.xlu0 0
          %3243 = vperm.xlu0 %3242, %v3129
          %v3244 = vpop.permute.xlu0 %3243
          %3247 = vset.pattern.permute.xlu0 0
          %3248 = vperm.xlu0 %3247, %v3130
          %v3249 = vpop.permute.xlu0 %3248
          %3252 = vset.pattern.permute.xlu0 0
          %3253 = vperm.xlu0 %3252, %v3131
          %v3254 = vpop.permute.xlu0 %3253
          %3257 = vset.pattern.permute.xlu0 0
          %3258 = vperm.xlu0 %3257, %v3132
          %v3259 = vpop.permute.xlu0 %3258
          %3262 = vset.pattern.permute.xlu0 0
          %3263 = vperm.xlu0 %3262, %v3133
          %v3264 = vpop.permute.xlu0 %3263
          %3267 = vset.pattern.permute.xlu0 0
          %3268 = vperm.xlu0 %3267, %v3134
          %v3269 = vpop.permute.xlu0 %3268
          %3272 = vset.pattern.permute.xlu0 0
          %3273 = vperm.xlu0 %3272, %v3135
          %v3274 = vpop.permute.xlu0 %3273
          %3277 = vset.pattern.permute.xlu0 0
          %3278 = vperm.xlu0 %3277, %v3136
          %v3279 = vpop.permute.xlu0 %3278
          %3282 = vset.pattern.permute.xlu0 0
          %3283 = vperm.xlu0 %3282, %v3137
          %v3284 = vpop.permute.xlu0 %3283
          %3287 = vset.pattern.permute.xlu0 0
          %3288 = vperm.xlu0 %3287, %v3138
          %v3289 = vpop.permute.xlu0 %3288
          %3292 = vset.pattern.permute.xlu0 0
          %3293 = vperm.xlu0 %3292, %v3139
          %v3294 = vpop.permute.xlu0 %3293
          %3297 = vset.pattern.permute.xlu0 0
          %3298 = vperm.xlu0 %3297, %v3140
          %v3299 = vpop.permute.xlu0 %3298
          %v3301 = vmul.f32 %v3045, %v3144
          %v3302 = vmul.f32 %v3046, %v3144
          %v3303 = vmul.f32 %v3047, %v3149
          %v3304 = vmul.f32 %v3048, %v3149
          %v3305 = vmul.f32 %v3049, %v3154
          %v3306 = vmul.f32 %v3050, %v3154
          %v3307 = vmul.f32 %v3051, %v3159
          %v3308 = vmul.f32 %v3052, %v3159
          %v3309 = vmul.f32 %v3053, %v3164
          %v3310 = vmul.f32 %v3054, %v3164
          %v3311 = vmul.f32 %v3055, %v3169
          %v3312 = vmul.f32 %v3056, %v3169
          %v3313 = vmul.f32 %v3057, %v3174
          %v3314 = vmul.f32 %v3058, %v3174
          %v3315 = vmul.f32 %v3059, %v3179
          %v3316 = vmul.f32 %v3060, %v3179
          %v3317 = vmul.f32 %v3061, %v3184
          %v3318 = vmul.f32 %v3062, %v3184
          %v3319 = vmul.f32 %v3063, %v3189
          %v3320 = vmul.f32 %v3064, %v3189
          %v3321 = vmul.f32 %v3065, %v3194
          %v3322 = vmul.f32 %v3066, %v3194
          %v3323 = vmul.f32 %v3067, %v3199
          %v3324 = vmul.f32 %v3068, %v3199
          %v3325 = vmul.f32 %v3069, %v3204
          %v3326 = vmul.f32 %v3070, %v3204
          %v3327 = vmul.f32 %v3071, %v3209
          %v3328 = vmul.f32 %v3072, %v3209
          %v3329 = vmul.f32 %v3073, %v3214
          %v3330 = vmul.f32 %v3074, %v3214
          %v3331 = vmul.f32 %v3075, %v3219
          %v3332 = vmul.f32 %v3076, %v3219
          %v3333 = vmul.f32 %v3077, %v3224
          %v3334 = vmul.f32 %v3078, %v3224
          %v3335 = vmul.f32 %v3079, %v3229
          %v3336 = vmul.f32 %v3080, %v3229
          %v3337 = vmul.f32 %v3081, %v3234
          %v3338 = vmul.f32 %v3082, %v3234
          %v3339 = vmul.f32 %v3083, %v3239
          %v3340 = vmul.f32 %v3084, %v3239
          %v3341 = vmul.f32 %v3085, %v3244
          %v3342 = vmul.f32 %v3086, %v3244
          %v3343 = vmul.f32 %v3087, %v3249
          %v3344 = vmul.f32 %v3088, %v3249
          %v3345 = vmul.f32 %v3089, %v3254
          %v3346 = vmul.f32 %v3090, %v3254
          %v3347 = vmul.f32 %v3091, %v3259
          %v3348 = vmul.f32 %v3092, %v3259
          %v3349 = vmul.f32 %v3093, %v3264
          %v3350 = vmul.f32 %v3094, %v3264
          %v3351 = vmul.f32 %v3095, %v3269
          %v3352 = vmul.f32 %v3096, %v3269
          %v3353 = vmul.f32 %v3097, %v3274
          %v3354 = vmul.f32 %v3098, %v3274
          %v3355 = vmul.f32 %v3099, %v3279
          %v3356 = vmul.f32 %v3100, %v3279
          %v3357 = vmul.f32 %v3101, %v3284
          %v3358 = vmul.f32 %v3102, %v3284
          %v3359 = vmul.f32 %v3103, %v3289
          %v3360 = vmul.f32 %v3104, %v3289
          %v3361 = vmul.f32 %v3105, %v3294
          %v3362 = vmul.f32 %v3106, %v3294
          %v3363 = vmul.f32 %v3107, %v3299
          %v3364 = vmul.f32 %v3108, %v3299
          %v3365 = vld [vmem:[%s6] sm:$0xff]
          %v3366 = vld [vmem:[%s6 + $0x8] sm:$0xff]
          %v3367 = vld [vmem:[%s6 + $0x10] sm:$0xff]
          %v3368 = vld [vmem:[%s6 + $0x18] sm:$0xff]
          %v3369 = vld [vmem:[%s6 + $0x20] sm:$0xff]
          %v3370 = vld [vmem:[%s6 + $0x28] sm:$0xff]
          %v3371 = vld [vmem:[%s6 + $0x30] sm:$0xff]
          %v3372 = vld [vmem:[%s6 + $0x38] sm:$0xff]
          %v3373 = vld [vmem:[%s6 + $0x40] sm:$0xff]
          %v3374 = vld [vmem:[%s6 + $0x48] sm:$0xff]
          %v3375 = vld [vmem:[%s6 + $0x50] sm:$0xff]
          %v3376 = vld [vmem:[%s6 + $0x58] sm:$0xff]
          %v3377 = vld [vmem:[%s6 + $0x60] sm:$0xff]
          %v3378 = vld [vmem:[%s6 + $0x68] sm:$0xff]
          %v3379 = vld [vmem:[%s6 + $0x70] sm:$0xff]
          %v3380 = vld [vmem:[%s6 + $0x78] sm:$0xff]
          %v3381 = vld [vmem:[%s6 + $0x80] sm:$0xff]
          %v3382 = vld [vmem:[%s6 + $0x88] sm:$0xff]
          %v3383 = vld [vmem:[%s6 + $0x90] sm:$0xff]
          %v3384 = vld [vmem:[%s6 + $0x98] sm:$0xff]
          %v3385 = vld [vmem:[%s6 + $0xa0] sm:$0xff]
          %v3386 = vld [vmem:[%s6 + $0xa8] sm:$0xff]
          %v3387 = vld [vmem:[%s6 + $0xb0] sm:$0xff]
          %v3388 = vld [vmem:[%s6 + $0xb8] sm:$0xff]
          %v3389 = vld [vmem:[%s6 + $0xc0] sm:$0xff]
          %v3390 = vld [vmem:[%s6 + $0xc8] sm:$0xff]
          %v3391 = vld [vmem:[%s6 + $0xd0] sm:$0xff]
          %v3392 = vld [vmem:[%s6 + $0xd8] sm:$0xff]
          %v3393 = vld [vmem:[%s6 + $0xe0] sm:$0xff]
          %v3394 = vld [vmem:[%s6 + $0xe8] sm:$0xff]
          %v3395 = vld [vmem:[%s6 + $0xf0] sm:$0xff]
          %v3396 = vld [vmem:[%s6 + $0xf8] sm:$0xff]
          %3398 = vset.pattern.permute.xlu0 0
          %3399 = vperm.xlu0 %3398, %v3365
          %v3400 = vpop.permute.xlu0 %3399
          %3403 = vset.pattern.permute.xlu0 0
          %3404 = vperm.xlu0 %3403, %v3366
          %v3405 = vpop.permute.xlu0 %3404
          %3408 = vset.pattern.permute.xlu0 0
          %3409 = vperm.xlu0 %3408, %v3367
          %v3410 = vpop.permute.xlu0 %3409
          %3413 = vset.pattern.permute.xlu0 0
          %3414 = vperm.xlu0 %3413, %v3368
          %v3415 = vpop.permute.xlu0 %3414
          %3418 = vset.pattern.permute.xlu0 0
          %3419 = vperm.xlu0 %3418, %v3369
          %v3420 = vpop.permute.xlu0 %3419
          %3423 = vset.pattern.permute.xlu0 0
          %3424 = vperm.xlu0 %3423, %v3370
          %v3425 = vpop.permute.xlu0 %3424
          %3428 = vset.pattern.permute.xlu0 0
          %3429 = vperm.xlu0 %3428, %v3371
          %v3430 = vpop.permute.xlu0 %3429
          %3433 = vset.pattern.permute.xlu0 0
          %3434 = vperm.xlu0 %3433, %v3372
          %v3435 = vpop.permute.xlu0 %3434
          %3438 = vset.pattern.permute.xlu0 0
          %3439 = vperm.xlu0 %3438, %v3373
          %v3440 = vpop.permute.xlu0 %3439
          %3443 = vset.pattern.permute.xlu0 0
          %3444 = vperm.xlu0 %3443, %v3374
          %v3445 = vpop.permute.xlu0 %3444
          %3448 = vset.pattern.permute.xlu0 0
          %3449 = vperm.xlu0 %3448, %v3375
          %v3450 = vpop.permute.xlu0 %3449
          %3453 = vset.pattern.permute.xlu0 0
          %3454 = vperm.xlu0 %3453, %v3376
          %v3455 = vpop.permute.xlu0 %3454
          %3458 = vset.pattern.permute.xlu0 0
          %3459 = vperm.xlu0 %3458, %v3377
          %v3460 = vpop.permute.xlu0 %3459
          %3463 = vset.pattern.permute.xlu0 0
          %3464 = vperm.xlu0 %3463, %v3378
          %v3465 = vpop.permute.xlu0 %3464
          %3468 = vset.pattern.permute.xlu0 0
          %3469 = vperm.xlu0 %3468, %v3379
          %v3470 = vpop.permute.xlu0 %3469
          %3473 = vset.pattern.permute.xlu0 0
          %3474 = vperm.xlu0 %3473, %v3380
          %v3475 = vpop.permute.xlu0 %3474
          %3478 = vset.pattern.permute.xlu0 0
          %3479 = vperm.xlu0 %3478, %v3381
          %v3480 = vpop.permute.xlu0 %3479
          %3483 = vset.pattern.permute.xlu0 0
          %3484 = vperm.xlu0 %3483, %v3382
          %v3485 = vpop.permute.xlu0 %3484
          %3488 = vset.pattern.permute.xlu0 0
          %3489 = vperm.xlu0 %3488, %v3383
          %v3490 = vpop.permute.xlu0 %3489
          %3493 = vset.pattern.permute.xlu0 0
          %3494 = vperm.xlu0 %3493, %v3384
          %v3495 = vpop.permute.xlu0 %3494
          %3498 = vset.pattern.permute.xlu0 0
          %3499 = vperm.xlu0 %3498, %v3385
          %v3500 = vpop.permute.xlu0 %3499
          %3503 = vset.pattern.permute.xlu0 0
          %3504 = vperm.xlu0 %3503, %v3386
          %v3505 = vpop.permute.xlu0 %3504
          %3508 = vset.pattern.permute.xlu0 0
          %3509 = vperm.xlu0 %3508, %v3387
          %v3510 = vpop.permute.xlu0 %3509
          %3513 = vset.pattern.permute.xlu0 0
          %3514 = vperm.xlu0 %3513, %v3388
          %v3515 = vpop.permute.xlu0 %3514
          %3518 = vset.pattern.permute.xlu0 0
          %3519 = vperm.xlu0 %3518, %v3389
          %v3520 = vpop.permute.xlu0 %3519
          %3523 = vset.pattern.permute.xlu0 0
          %3524 = vperm.xlu0 %3523, %v3390
          %v3525 = vpop.permute.xlu0 %3524
          %3528 = vset.pattern.permute.xlu0 0
          %3529 = vperm.xlu0 %3528, %v3391
          %v3530 = vpop.permute.xlu0 %3529
          %3533 = vset.pattern.permute.xlu0 0
          %3534 = vperm.xlu0 %3533, %v3392
          %v3535 = vpop.permute.xlu0 %3534
          %3538 = vset.pattern.permute.xlu0 0
          %3539 = vperm.xlu0 %3538, %v3393
          %v3540 = vpop.permute.xlu0 %3539
          %3543 = vset.pattern.permute.xlu0 0
          %3544 = vperm.xlu0 %3543, %v3394
          %v3545 = vpop.permute.xlu0 %3544
          %3548 = vset.pattern.permute.xlu0 0
          %3549 = vperm.xlu0 %3548, %v3395
          %v3550 = vpop.permute.xlu0 %3549
          %3553 = vset.pattern.permute.xlu0 0
          %3554 = vperm.xlu0 %3553, %v3396
          %v3555 = vpop.permute.xlu0 %3554
          %v3557 = vadd.f32 %v3301, %v3400
          %v3558 = vadd.f32 %v3302, %v3400
          %v3559 = vadd.f32 %v3303, %v3405
          %v3560 = vadd.f32 %v3304, %v3405
          %v3561 = vadd.f32 %v3305, %v3410
          %v3562 = vadd.f32 %v3306, %v3410
          %v3563 = vadd.f32 %v3307, %v3415
          %v3564 = vadd.f32 %v3308, %v3415
          %v3565 = vadd.f32 %v3309, %v3420
          %v3566 = vadd.f32 %v3310, %v3420
          %v3567 = vadd.f32 %v3311, %v3425
          %v3568 = vadd.f32 %v3312, %v3425
          %v3569 = vadd.f32 %v3313, %v3430
          %v3570 = vadd.f32 %v3314, %v3430
          %v3571 = vadd.f32 %v3315, %v3435
          %v3572 = vadd.f32 %v3316, %v3435
          %v3573 = vadd.f32 %v3317, %v3440
          %v3574 = vadd.f32 %v3318, %v3440
          %v3575 = vadd.f32 %v3319, %v3445
          %v3576 = vadd.f32 %v3320, %v3445
          %v3577 = vadd.f32 %v3321, %v3450
          %v3578 = vadd.f32 %v3322, %v3450
          %v3579 = vadd.f32 %v3323, %v3455
          %v3580 = vadd.f32 %v3324, %v3455
          %v3581 = vadd.f32 %v3325, %v3460
          %v3582 = vadd.f32 %v3326, %v3460
          %v3583 = vadd.f32 %v3327, %v3465
          %v3584 = vadd.f32 %v3328, %v3465
          %v3585 = vadd.f32 %v3329, %v3470
          %v3586 = vadd.f32 %v3330, %v3470
          %v3587 = vadd.f32 %v3331, %v3475
          %v3588 = vadd.f32 %v3332, %v3475
          %v3589 = vadd.f32 %v3333, %v3480
          %v3590 = vadd.f32 %v3334, %v3480
          %v3591 = vadd.f32 %v3335, %v3485
          %v3592 = vadd.f32 %v3336, %v3485
          %v3593 = vadd.f32 %v3337, %v3490
          %v3594 = vadd.f32 %v3338, %v3490
          %v3595 = vadd.f32 %v3339, %v3495
          %v3596 = vadd.f32 %v3340, %v3495
          %v3597 = vadd.f32 %v3341, %v3500
          %v3598 = vadd.f32 %v3342, %v3500
          %v3599 = vadd.f32 %v3343, %v3505
          %v3600 = vadd.f32 %v3344, %v3505
          %v3601 = vadd.f32 %v3345, %v3510
          %v3602 = vadd.f32 %v3346, %v3510
          %v3603 = vadd.f32 %v3347, %v3515
          %v3604 = vadd.f32 %v3348, %v3515
          %v3605 = vadd.f32 %v3349, %v3520
          %v3606 = vadd.f32 %v3350, %v3520
          %v3607 = vadd.f32 %v3351, %v3525
          %v3608 = vadd.f32 %v3352, %v3525
          %v3609 = vadd.f32 %v3353, %v3530
          %v3610 = vadd.f32 %v3354, %v3530
          %v3611 = vadd.f32 %v3355, %v3535
          %v3612 = vadd.f32 %v3356, %v3535
          %v3613 = vadd.f32 %v3357, %v3540
          %v3614 = vadd.f32 %v3358, %v3540
          %v3615 = vadd.f32 %v3359, %v3545
          %v3616 = vadd.f32 %v3360, %v3545
          %v3617 = vadd.f32 %v3361, %v3550
          %v3618 = vadd.f32 %v3362, %v3550
          %v3619 = vadd.f32 %v3363, %v3555
          %v3620 = vadd.f32 %v3364, %v3555
          %3621 = vst [vmem:[%s7] sm:$0xff] %v3557
          %3622 = vst.msk [vmem:[%s7 + $0x8] sm:$0xff] %vm702, %v3558
          %3623 = vst [vmem:[%s7 + $0x10] sm:$0xff] %v3559
          %3624 = vst.msk [vmem:[%s7 + $0x18] sm:$0xff] %vm702, %v3560
          %3625 = vst [vmem:[%s7 + $0x20] sm:$0xff] %v3561
          %3626 = vst.msk [vmem:[%s7 + $0x28] sm:$0xff] %vm702, %v3562
          %3627 = vst [vmem:[%s7 + $0x30] sm:$0xff] %v3563
          %3628 = vst.msk [vmem:[%s7 + $0x38] sm:$0xff] %vm702, %v3564
          %3629 = vst [vmem:[%s7 + $0x40] sm:$0xff] %v3565
          %3630 = vst.msk [vmem:[%s7 + $0x48] sm:$0xff] %vm702, %v3566
          %3631 = vst [vmem:[%s7 + $0x50] sm:$0xff] %v3567
          %3632 = vst.msk [vmem:[%s7 + $0x58] sm:$0xff] %vm702, %v3568
          %3633 = vst [vmem:[%s7 + $0x60] sm:$0xff] %v3569
          %3634 = vst.msk [vmem:[%s7 + $0x68] sm:$0xff] %vm702, %v3570
          %3635 = vst [vmem:[%s7 + $0x70] sm:$0xff] %v3571
          %3636 = vst.msk [vmem:[%s7 + $0x78] sm:$0xff] %vm702, %v3572
          %3637 = vst [vmem:[%s7 + $0x80] sm:$0xff] %v3573
          %3638 = vst.msk [vmem:[%s7 + $0x88] sm:$0xff] %vm702, %v3574
          %3639 = vst [vmem:[%s7 + $0x90] sm:$0xff] %v3575
          %3640 = vst.msk [vmem:[%s7 + $0x98] sm:$0xff] %vm702, %v3576
          %3641 = vst [vmem:[%s7 + $0xa0] sm:$0xff] %v3577
          %3642 = vst.msk [vmem:[%s7 + $0xa8] sm:$0xff] %vm702, %v3578
          %3643 = vst [vmem:[%s7 + $0xb0] sm:$0xff] %v3579
          %3644 = vst.msk [vmem:[%s7 + $0xb8] sm:$0xff] %vm702, %v3580
          %3645 = vst [vmem:[%s7 + $0xc0] sm:$0xff] %v3581
          %3646 = vst.msk [vmem:[%s7 + $0xc8] sm:$0xff] %vm702, %v3582
          %3647 = vst [vmem:[%s7 + $0xd0] sm:$0xff] %v3583
          %3648 = vst.msk [vmem:[%s7 + $0xd8] sm:$0xff] %vm702, %v3584
          %3649 = vst [vmem:[%s7 + $0xe0] sm:$0xff] %v3585
          %3650 = vst.msk [vmem:[%s7 + $0xe8] sm:$0xff] %vm702, %v3586
          %3651 = vst [vmem:[%s7 + $0xf0] sm:$0xff] %v3587
          %3652 = vst.msk [vmem:[%s7 + $0xf8] sm:$0xff] %vm702, %v3588
          %3653 = vst [vmem:[%s7 + $0x100] sm:$0xff] %v3589
          %3654 = vst.msk [vmem:[%s7 + $0x108] sm:$0xff] %vm702, %v3590
          %3655 = vst [vmem:[%s7 + $0x110] sm:$0xff] %v3591
          %3656 = vst.msk [vmem:[%s7 + $0x118] sm:$0xff] %vm702, %v3592
          %3657 = vst [vmem:[%s7 + $0x120] sm:$0xff] %v3593
          %3658 = vst.msk [vmem:[%s7 + $0x128] sm:$0xff] %vm702, %v3594
          %3659 = vst [vmem:[%s7 + $0x130] sm:$0xff] %v3595
          %3660 = vst.msk [vmem:[%s7 + $0x138] sm:$0xff] %vm702, %v3596
          %3661 = vst [vmem:[%s7 + $0x140] sm:$0xff] %v3597
          %3662 = vst.msk [vmem:[%s7 + $0x148] sm:$0xff] %vm702, %v3598
          %3663 = vst [vmem:[%s7 + $0x150] sm:$0xff] %v3599
          %3664 = vst.msk [vmem:[%s7 + $0x158] sm:$0xff] %vm702, %v3600
          %3665 = vst [vmem:[%s7 + $0x160] sm:$0xff] %v3601
          %3666 = vst.msk [vmem:[%s7 + $0x168] sm:$0xff] %vm702, %v3602
          %3667 = vst [vmem:[%s7 + $0x170] sm:$0xff] %v3603
          %3668 = vst.msk [vmem:[%s7 + $0x178] sm:$0xff] %vm702, %v3604
          %3669 = vst [vmem:[%s7 + $0x180] sm:$0xff] %v3605
          %3670 = vst.msk [vmem:[%s7 + $0x188] sm:$0xff] %vm702, %v3606
          %3671 = vst [vmem:[%s7 + $0x190] sm:$0xff] %v3607
          %3672 = vst.msk [vmem:[%s7 + $0x198] sm:$0xff] %vm702, %v3608
          %3673 = vst [vmem:[%s7 + $0x1a0] sm:$0xff] %v3609
          %3674 = vst.msk [vmem:[%s7 + $0x1a8] sm:$0xff] %vm702, %v3610
          %3675 = vst [vmem:[%s7 + $0x1b0] sm:$0xff] %v3611
          %3676 = vst.msk [vmem:[%s7 + $0x1b8] sm:$0xff] %vm702, %v3612
          %3677 = vst [vmem:[%s7 + $0x1c0] sm:$0xff] %v3613
          %3678 = vst.msk [vmem:[%s7 + $0x1c8] sm:$0xff] %vm702, %v3614
          %3679 = vst [vmem:[%s7 + $0x1d0] sm:$0xff] %v3615
          %3680 = vst.msk [vmem:[%s7 + $0x1d8] sm:$0xff] %vm702, %v3616
          %3681 = vst [vmem:[%s7 + $0x1e0] sm:$0xff] %v3617
          %3682 = vst.msk [vmem:[%s7 + $0x1e8] sm:$0xff] %vm702, %v3618
          %3683 = vst [vmem:[%s7 + $0x1f0] sm:$0xff] %v3619
          %3684 = vst.msk [vmem:[%s7 + $0x1f8] sm:$0xff] %vm702, %v3620
        $region79: #{tpu_custom_call.1} parent=66 // pred_fallthru
          _
        // Predicated region
        $region80: #{tpu_custom_call.1} parent=66 // pred_check
          %p3685 = pneg %p203
        $region81: #{tpu_custom_call.1} parent=66 // pred_check_branch
          %3687 = sbr.rel (%p3685) target = $region83
        $region82: #{tpu_custom_call.1} parent=66 // pred_region
          _
        $region83: #{tpu_custom_call.1} parent=66 // pred_fallthru
          _
        // Predicated region
        $region84: #{tpu_custom_call.1} parent=66 // pred_check
          %p3688 = pneg %p203
        $region85: #{tpu_custom_call.1} parent=66 // pred_check_branch
          %3690 = sbr.rel (%p3688) target = $region87
        $region86: #{tpu_custom_call.1} parent=66 // pred_region
          _
        $region87: #{tpu_custom_call.1} parent=66 // pred_fallthru
          _
      $region67: #{tpu_custom_call.1} parent=5 // pred_fallthru
        _
      %p3691 = scmp.le.s32.totalorder 2, %s13
      // Predicated region
      $region88: #{tpu_custom_call.1} parent=5 // pred_check
        %p3692 = pneg %p3691
      $region89: #{tpu_custom_call.1} parent=5 // pred_check_branch
        %3694 = sbr.rel (%p3692) target = $region91
      $region90: #{tpu_custom_call.1} parent=5 // pred_region
        %s3695 = ssub.s32 %s13, 2
      $region91: #{tpu_custom_call.1} parent=5 // pred_fallthru
        _
    $region6: #{tpu_custom_call.1} parent=1 // loop_footer
      %s17 = sadd.s32 1, %s13
    $region7: #{tpu_custom_call.1} parent=1 // loop_footer_branch
      %12 = sbr.rel target = $region3
    $region8: #{tpu_custom_call.1} parent=1 // loop_exit
      _

</llo_original>
